<compile_context>
chip_gen: v7x
topology: tpu7x:2x2x1
jax: 0.10.0
libtpu: 0.0.40
codegen_flags: <defaults>
</compile_context>

<pallas_src>
import functools

import jax
import jax.numpy as jnp
from jax.experimental import pallas as pl
from jax.experimental.pallas import tpu as pltpu

NUM_CLASSES = 1000


def _round_up(x, m):
    return ((x + m - 1) // m) * m


def vae_classifier_kernel(x_ref, w1_ref, b1_ref, w2_ref, b2_ref, w3_ref, b3_ref,
                          out_ref, acc_ref, *, inv_hw):
    """Grid = (batch_tiles, spatial_tiles); spatial axis is the reduction axis.

    x_ref:   (B_TILE, 64, HW_TILE)  f32 chunk of the flattened NCHW input
    acc_ref: (B_TILE, 64)           f32 VMEM scratch: running spatial sum
    out_ref: (B_TILE, NC_PAD)       f32, written only at the last spatial step
    """
    s = pl.program_id(1)

    @pl.when(s == 0)
    def _init():
        acc_ref[...] = jnp.zeros_like(acc_ref)

    # Partial spatial sum for this chunk (AdaptiveAvgPool2d(1) accumulation).
    acc_ref[...] += jnp.sum(x_ref[...], axis=-1)

    @pl.when(s == pl.num_programs(1) - 1)
    def _finalize():
        pooled = acc_ref[...] * inv_hw                       # (B_TILE, 64)

        # Linear(64,512) + ReLU   (Dropout = identity in eval mode)
        h1 = jnp.dot(pooled, w1_ref[...], preferred_element_type=jnp.float32)
        h1 = jnp.maximum(h1 + b1_ref[...], 0.0)

        # Linear(512,512) + ReLU  (Dropout = identity in eval mode)
        h2 = jnp.dot(h1, w2_ref[...], preferred_element_type=jnp.float32)
        h2 = jnp.maximum(h2 + b2_ref[...], 0.0)

        # Linear(512, num_classes)  (padded to NC_PAD lanes)
        out = jnp.dot(h2, w3_ref[...], preferred_element_type=jnp.float32)
        out_ref[...] = out + b3_ref[...]


def vae_classifier_forward(x_nchw, params, *, b_tile_max=128, hw_tile_max=256):
    """x_nchw: (B, 64, H, W) float32.  Returns (B, num_classes) float32."""
    B, C, H, W = x_nchw.shape
    assert C == 64, "classifier expects 64 input channels"
    HW = H * W

    w1, b1, w2, b2, w3, b3 = params
    num_classes = w3.shape[1]

    # --- pad num_classes to a multiple of 128 (lane-dense output stores) ---
    nc_pad = _round_up(num_classes, 128)
    if nc_pad != num_classes:
        w3 = jnp.pad(w3, ((0, 0), (0, nc_pad - num_classes)))
        b3 = jnp.pad(b3, ((0, 0), (0, nc_pad - num_classes)))

    # --- choose tiles (sized so 2x double-buffered x tile <= 16 MiB) ---
    b_tile = b_tile_max if B >= b_tile_max else max(8, _round_up(B, 8))
    hw_tile = min(hw_tile_max, _round_up(HW, 128))
    B_pad = _round_up(B, b_tile)
    HW_pad = _round_up(HW, hw_tile)

    # --- pad x with zeros (zeros do not affect the spatial sum; we divide by
    #     the TRUE H*W, and padded batch rows are sliced off) ---
    x_flat = x_nchw.reshape(B, C, HW)
    if (B_pad, HW_pad) != (B, HW):
        x_flat = jnp.pad(x_flat, ((0, B_pad - B), (0, 0), (0, HW_pad - HW)))

    grid = (B_pad // b_tile, HW_pad // hw_tile)

    kernel = functools.partial(vae_classifier_kernel, inv_hw=1.0 / float(HW))

    const_map = lambda b, s: (0, 0)
    grid_spec = pltpu.PrefetchScalarGridSpec(
        num_scalar_prefetch=0,
        grid=grid,
        in_specs=[
            pl.BlockSpec((b_tile, C, hw_tile), lambda b, s: (b, 0, s)),  # x
            pl.BlockSpec((64, 512), const_map),        # w1 (resident)
            pl.BlockSpec((1, 512), const_map),         # b1
            pl.BlockSpec((512, 512), const_map),       # w2
            pl.BlockSpec((1, 512), const_map),         # b2
            pl.BlockSpec((512, nc_pad), const_map),    # w3 (padded)
            pl.BlockSpec((1, nc_pad), const_map),      # b3 (padded)
        ],
        out_specs=pl.BlockSpec((b_tile, nc_pad), lambda b, s: (b, 0)),
        scratch_shapes=[pltpu.VMEM((b_tile, 64), jnp.float32)],
    )

    flops = 2 * B_pad * (64 * 512 + 512 * 512 + 512 * nc_pad)
    bytes_accessed = (
        B_pad * C * HW_pad * 4                                   # x read
        + (64 * 512 + 512 * 512 + 512 * nc_pad) * 4              # weights
        + (512 + 512 + nc_pad) * 4                               # biases
        + B_pad * nc_pad * 4                                     # output
    )

    out_padded = pl.pallas_call(
        kernel,
        out_shape=jax.ShapeDtypeStruct((B_pad, nc_pad), jnp.float32),
        grid_spec=grid_spec,
        compiler_params=pltpu.CompilerParams(
            dimension_semantics=("parallel", "arbitrary"),
            vmem_limit_bytes=32 * 1024 * 1024,
        ),
        cost_estimate=pl.CostEstimate(
            flops=flops, transcendentals=0, bytes_accessed=bytes_accessed),
    )(x_flat, w1, b1, w2, b2, w3, b3)

    return out_padded[:B, :num_classes]


def init_params(key, num_classes=NUM_CLASSES):
    """Parameter init matching the classifier's Linear shapes.

    Stored as (in_features, out_features) so the kernel computes x @ W + b
    (equivalent to PyTorch's x @ W.T + b with its (out,in) weights).
    Biases are stored as (1, out_features) for clean 2-D VMEM layout.
    """
    ks = jax.random.split(key, 6)

    def linear(kw, kb, fan_in, fan_out):
        bound = 1.0 / jnp.sqrt(jnp.float32(fan_in))
        w = jax.random.uniform(kw, (fan_in, fan_out), jnp.float32, -bound, bound)
        b = jax.random.uniform(kb, (1, fan_out), jnp.float32, -bound, bound)
        return w, b

    w1, b1 = linear(ks[0], ks[1], 64, 512)
    w2, b2 = linear(ks[2], ks[3], 512, 512)
    w3, b3 = linear(ks[4], ks[5], 512, num_classes)
    return (w1, b1, w2, b2, w3, b3)


def reference_forward(x_nchw, params):
    """Pure-JAX reference for a sanity check."""
    w1, b1, w2, b2, w3, b3 = params
    pooled = jnp.mean(x_nchw, axis=(2, 3))           # (B, 64)
    h1 = jnp.maximum(pooled @ w1 + b1, 0.0)
    h2 = jnp.maximum(h1 @ w2 + b2, 0.0)
    return h2 @ w3 + b3


if __name__ == "__main__":
    key = jax.random.PRNGKey(0)
    k_x, k_p = jax.random.split(key)

    # Small example consistent with the forward: batch=2, channels=64, 16x16
    B, C, H, W = 2, 64, 16, 16
    x = jax.random.normal(k_x, (B, C, H, W), dtype=jnp.float32)

    params = init_params(k_p, NUM_CLASSES)

    out = vae_classifier_forward(x, params)
    out = jax.block_until_ready(out)

    ref = reference_forward(x, params)
    assert out.shape == (B, NUM_CLASSES)
    assert jnp.allclose(out, ref, atol=1e-4, rtol=1e-4), "mismatch vs reference"

    print("KERNEL_OK")
</pallas_src>

<mosaic_0001>
module attributes {stable_mosaic.version = 11 : i64} {
  func.func @vae_classifier_kernel(%arg0: i32, %arg1: i32, %arg2: memref<8x64x256xf32, #tpu.memory_space<vmem>>, %arg3: memref<64x512xf32, #tpu.memory_space<vmem>>, %arg4: memref<1x512xf32, #tpu.memory_space<vmem>>, %arg5: memref<512x512xf32, #tpu.memory_space<vmem>>, %arg6: memref<1x512xf32, #tpu.memory_space<vmem>>, %arg7: memref<512x1024xf32, #tpu.memory_space<vmem>>, %arg8: memref<1x1024xf32, #tpu.memory_space<vmem>>, %arg9: memref<8x1024xf32, #tpu.memory_space<vmem>>, %arg10: memref<8x64xf32, #tpu.memory_space<vmem>>) attributes {dimension_semantics = [#tpu.dimension_semantics<parallel>, #tpu.dimension_semantics<arbitrary>], iteration_bounds = array<i64: 1, 1>, scalar_prefetch = 0 : i64, scratch_operands = 1 : i64, tpu.core_type = #tpu.core_type<tc>, window_params = [{transform_indices = @transform_0, window_bounds = array<i64: 8, 64, 256>}, {pipeline_mode = #tpu.pipeline_mode<synchronous>, transform_indices = @transform_1, window_bounds = array<i64: 64, 512>}, {pipeline_mode = #tpu.pipeline_mode<synchronous>, transform_indices = @transform_2, window_bounds = array<i64: 1, 512>}, {pipeline_mode = #tpu.pipeline_mode<synchronous>, transform_indices = @transform_3, window_bounds = array<i64: 512, 512>}, {pipeline_mode = #tpu.pipeline_mode<synchronous>, transform_indices = @transform_4, window_bounds = array<i64: 1, 512>}, {pipeline_mode = #tpu.pipeline_mode<synchronous>, transform_indices = @transform_5, window_bounds = array<i64: 512, 1024>}, {pipeline_mode = #tpu.pipeline_mode<synchronous>, transform_indices = @transform_6, window_bounds = array<i64: 1, 1024>}, {transform_indices = @transform_7, window_bounds = array<i64: 8, 1024>}]} {
    %c0_i32 = arith.constant 0 : i32
    %0 = arith.cmpi eq, %arg1, %c0_i32 : i32
    %1 = arith.extui %0 : i1 to i32
    %c0_i32_0 = arith.constant 0 : i32
    %2 = arith.cmpi ne, %1, %c0_i32_0 : i32
    scf.if %2 {
      %cst_9 = arith.constant 0.000000e+00 : f32
      %11 = vector.broadcast %cst_9 : f32 to vector<8x64xf32>
      %c0_10 = arith.constant 0 : index
      %c0_11 = arith.constant 0 : index
      %12 = vector.load %arg10[%c0_10, %c0_11] : memref<8x64xf32, #tpu.memory_space<vmem>>, vector<8x64xf32>
      tpu.vector_store %arg10[%c0_10, %c0_11], %11 {strides = array<i32>} : memref<8x64xf32, #tpu.memory_space<vmem>>, vector<8x64xf32>,
    } else {
    }
    %c0 = arith.constant 0 : index
    %c0_1 = arith.constant 0 : index
    %3 = vector.load %arg10[%c0, %c0_1] : memref<8x64xf32, #tpu.memory_space<vmem>>, vector<8x64xf32>
    %c0_2 = arith.constant 0 : index
    %c0_3 = arith.constant 0 : index
    %c0_4 = arith.constant 0 : index
    %4 = vector.load %arg2[%c0_2, %c0_3, %c0_4] : memref<8x64x256xf32, #tpu.memory_space<vmem>>, vector<8x64x256xf32>
    %cst = arith.constant dense<0.000000e+00> : vector<8x64xf32>
    %5 = vector.multi_reduction <add>, %4, %cst [2] : vector<8x64x256xf32> to vector<8x64xf32>
    %6 = arith.addf %3, %5 : vector<8x64xf32>
    %c0_5 = arith.constant 0 : index
    %c0_6 = arith.constant 0 : index
    %7 = vector.load %arg10[%c0_5, %c0_6] : memref<8x64xf32, #tpu.memory_space<vmem>>, vector<8x64xf32>
    tpu.vector_store %arg10[%c0_5, %c0_6], %6 {strides = array<i32>} : memref<8x64xf32, #tpu.memory_space<vmem>>, vector<8x64xf32>,
    %c0_i32_7 = arith.constant 0 : i32
    %8 = arith.cmpi eq, %arg1, %c0_i32_7 : i32
    %9 = arith.extui %8 : i1 to i32
    %c0_i32_8 = arith.constant 0 : i32
    %10 = arith.cmpi ne, %9, %c0_i32_8 : i32
    scf.if %10 {
      %c0_9 = arith.constant 0 : index
      %c0_10 = arith.constant 0 : index
      %11 = vector.load %arg10[%c0_9, %c0_10] : memref<8x64xf32, #tpu.memory_space<vmem>>, vector<8x64xf32>
      %cst_11 = arith.constant 3.906250e-03 : f32
      %12 = vector.broadcast %cst_11 : f32 to vector<8x64xf32>
      %13 = arith.mulf %11, %12 : vector<8x64xf32>
      %c0_12 = arith.constant 0 : index
      %c0_13 = arith.constant 0 : index
      %14 = vector.load %arg3[%c0_12, %c0_13] : memref<64x512xf32, #tpu.memory_space<vmem>>, vector<64x512xf32>
      %cst_14 = arith.constant dense<0.000000e+00> : vector<8x512xf32>
      %15 = tpu.matmul %13, %14, %cst_14 {dimension_numbers = #tpu.dot_dimension_numbers<[1], [0], [0], [1], [0, 0, 1, 1], [], []>} : vector<8x64xf32>, vector<64x512xf32>, vector<8x512xf32> -> vector<8x512xf32>
      %c0_15 = arith.constant 0 : index
      %c0_16 = arith.constant 0 : index
      %16 = vector.load %arg4[%c0_15, %c0_16] : memref<1x512xf32, #tpu.memory_space<vmem>>, vector<1x512xf32>
      %17 = vector.broadcast %16 : vector<1x512xf32> to vector<8x512xf32>
      %18 = arith.addf %15, %17 : vector<8x512xf32>
      %cst_17 = arith.constant 0.000000e+00 : f32
      %19 = vector.broadcast %cst_17 : f32 to vector<8x512xf32>
      %20 = arith.maximumf %18, %19 : vector<8x512xf32>
      %c0_18 = arith.constant 0 : index
      %c0_19 = arith.constant 0 : index
      %21 = vector.load %arg5[%c0_18, %c0_19] : memref<512x512xf32, #tpu.memory_space<vmem>>, vector<512x512xf32>
      %cst_20 = arith.constant dense<0.000000e+00> : vector<8x512xf32>
      %22 = tpu.matmul %20, %21, %cst_20 {dimension_numbers = #tpu.dot_dimension_numbers<[1], [0], [0], [1], [0, 0, 1, 1], [], []>} : vector<8x512xf32>, vector<512x512xf32>, vector<8x512xf32> -> vector<8x512xf32>
      %c0_21 = arith.constant 0 : index
      %c0_22 = arith.constant 0 : index
      %23 = vector.load %arg6[%c0_21, %c0_22] : memref<1x512xf32, #tpu.memory_space<vmem>>, vector<1x512xf32>
      %24 = vector.broadcast %23 : vector<1x512xf32> to vector<8x512xf32>
      %25 = arith.addf %22, %24 : vector<8x512xf32>
      %cst_23 = arith.constant 0.000000e+00 : f32
      %26 = vector.broadcast %cst_23 : f32 to vector<8x512xf32>
      %27 = arith.maximumf %25, %26 : vector<8x512xf32>
      %c0_24 = arith.constant 0 : index
      %c0_25 = arith.constant 0 : index
      %28 = vector.load %arg7[%c0_24, %c0_25] : memref<512x1024xf32, #tpu.memory_space<vmem>>, vector<512x1024xf32>
      %cst_26 = arith.constant dense<0.000000e+00> : vector<8x1024xf32>
      %29 = tpu.matmul %27, %28, %cst_26 {dimension_numbers = #tpu.dot_dimension_numbers<[1], [0], [0], [1], [0, 0, 1, 1], [], []>} : vector<8x512xf32>, vector<512x1024xf32>, vector<8x1024xf32> -> vector<8x1024xf32>
      %c0_27 = arith.constant 0 : index
      %c0_28 = arith.constant 0 : index
      %30 = vector.load %arg8[%c0_27, %c0_28] : memref<1x1024xf32, #tpu.memory_space<vmem>>, vector<1x1024xf32>
      %31 = vector.broadcast %30 : vector<1x1024xf32> to vector<8x1024xf32>
      %32 = arith.addf %29, %31 : vector<8x1024xf32>
      %c0_29 = arith.constant 0 : index
      %c0_30 = arith.constant 0 : index
      %33 = vector.load %arg9[%c0_29, %c0_30] : memref<8x1024xf32, #tpu.memory_space<vmem>>, vector<8x1024xf32>
      tpu.vector_store %arg9[%c0_29, %c0_30], %32 {strides = array<i32>} : memref<8x1024xf32, #tpu.memory_space<vmem>>, vector<8x1024xf32>,
    } else {
    }
    return
  }
  func.func @transform_0(%arg0: i32, %arg1: i32) -> (i32, i32, i32) {
    %c0_i32 = arith.constant 0 : i32
    %c0_i32_0 = arith.constant 0 : i32
    return %arg0, %c0_i32, %arg1 : i32, i32, i32
  }
  func.func @transform_1(%arg0: i32, %arg1: i32) -> (i32, i32) {
    %c0_i32 = arith.constant 0 : i32
    %c0_i32_0 = arith.constant 0 : i32
    %c0_i32_1 = arith.constant 0 : i32
    return %c0_i32, %c0_i32_0 : i32, i32
  }
  func.func @transform_2(%arg0: i32, %arg1: i32) -> (i32, i32) {
    %c0_i32 = arith.constant 0 : i32
    %c0_i32_0 = arith.constant 0 : i32
    %c0_i32_1 = arith.constant 0 : i32
    return %c0_i32, %c0_i32_0 : i32, i32
  }
  func.func @transform_3(%arg0: i32, %arg1: i32) -> (i32, i32) {
    %c0_i32 = arith.constant 0 : i32
    %c0_i32_0 = arith.constant 0 : i32
    %c0_i32_1 = arith.constant 0 : i32
    return %c0_i32, %c0_i32_0 : i32, i32
  }
  func.func @transform_4(%arg0: i32, %arg1: i32) -> (i32, i32) {
    %c0_i32 = arith.constant 0 : i32
    %c0_i32_0 = arith.constant 0 : i32
    %c0_i32_1 = arith.constant 0 : i32
    return %c0_i32, %c0_i32_0 : i32, i32
  }
  func.func @transform_5(%arg0: i32, %arg1: i32) -> (i32, i32) {
    %c0_i32 = arith.constant 0 : i32
    %c0_i32_0 = arith.constant 0 : i32
    %c0_i32_1 = arith.constant 0 : i32
    return %c0_i32, %c0_i32_0 : i32, i32
  }
  func.func @transform_6(%arg0: i32, %arg1: i32) -> (i32, i32) {
    %c0_i32 = arith.constant 0 : i32
    %c0_i32_0 = arith.constant 0 : i32
    %c0_i32_1 = arith.constant 0 : i32
    return %c0_i32, %c0_i32_0 : i32, i32
  }
  func.func @transform_7(%arg0: i32, %arg1: i32) -> (i32, i32) {
    %c0_i32 = arith.constant 0 : i32
    %c0_i32_0 = arith.constant 0 : i32
    return %arg0, %c0_i32 : i32, i32
  }
}

</mosaic_0001>

<llo_original>
// kernel: tpu_custom_call.1
$region0: #{tpu_custom_call.1}
  #allocation0 [shape = 'u32[]', space=smem, size = 0x4, offset = 0x4, fixed_abs, tag = 'smem constant byte address 0x4 - core index']
  #allocation1 [shape = 'u32[144,128]{1,0:T(1,128)}', space=vmem, size = 0x12000, scoped, tag = 'internal scratch']
  #allocation2 [shape = 'f32[8,64]{1,0:T(8,128)}', space=vmem, size = 0x1000, scoped, tag = 'scratch operand']
  %s0 = inlined_call_operand.hbm [shape: f32[8,64,256], index: 0, kind: input, shape index: {}]
  %s1 = inlined_call_operand.hbm [shape: f32[64,512], index: 1, kind: input, shape index: {}]
  %s2 = inlined_call_operand.hbm [shape: f32[1,512], index: 2, kind: input, shape index: {}]
  %s3 = inlined_call_operand.hbm [shape: f32[512,512], index: 3, kind: input, shape index: {}]
  %s4 = inlined_call_operand.hbm [shape: f32[1,512], index: 4, kind: input, shape index: {}]
  %s5 = inlined_call_operand.hbm [shape: f32[512,1024], index: 5, kind: input, shape index: {}]
  %s6 = inlined_call_operand.hbm [shape: f32[1,1024], index: 6, kind: input, shape index: {}]
  %s7 = inlined_call_operand.hbm [shape: f32[8,1024], index: 7, kind: output, shape index: {}]
  %s8 = sld [smem:[#allocation0]]
  $region74: #{tpu_custom_call.1} parent=0
    _
  %s10 = ssub.s32 1, %s8
  %s11 = scalar_select 0, %s10, %s8
  $region1: #{tpu_custom_call.1} parent=0
    #allocation3 [shape = 'u8[524288]{0}', space=vmem, size = 0x80000, scoped, tag = 'input window, operand 0, single buffered']
    #allocation4 [shape = 's32[1]{0}', space=sflag, size = 0x4, scoped, tag = 'scoped memory for tpu_custom_call.1']
    #allocation5 [shape = 's32[1]{0}', space=sflag, size = 0x4, scoped, tag = 'scoped memory for tpu_custom_call.1']
    #allocation6 [shape = 'u8[131072]{0}', space=vmem, size = 0x20000, scoped, tag = 'input window, operand 1, single buffered']
    #allocation7 [shape = 's32[1]{0}', space=sflag, size = 0x4, scoped, tag = 'scoped memory for tpu_custom_call.1']
    #allocation8 [shape = 'u8[2048]{0}', space=vmem, size = 0x800, scoped, tag = 'input window, operand 2, single buffered']
    #allocation9 [shape = 'u8[1048576]{0}', space=vmem, size = 0x100000, scoped, tag = 'input window, operand 3, single buffered']
    #allocation10 [shape = 's32[1]{0}', space=sflag, size = 0x4, scoped, tag = 'scoped memory for tpu_custom_call.1']
    #allocation11 [shape = 'u8[2048]{0}', space=vmem, size = 0x800, scoped, tag = 'input window, operand 4, single buffered']
    #allocation12 [shape = 'u8[2097152]{0}', space=vmem, size = 0x200000, scoped, tag = 'input window, operand 5, single buffered']
    #allocation13 [shape = 's32[1]{0}', space=sflag, size = 0x4, scoped, tag = 'scoped memory for tpu_custom_call.1']
    #allocation14 [shape = 'u8[4096]{0}', space=vmem, size = 0x1000, scoped, tag = 'input window, operand 6, single buffered']
    #allocation15 [shape = 'u8[32768]{0}', space=vmem, size = 0x8000, scoped, tag = 'output window, operand 0, single buffered']
    %12 = vsyncpa [#allocation4], 0
    %13 = vsyncpa [#allocation7], 0
    %14 = vsyncpa [#allocation10], 0
    %15 = vsyncpa [#allocation13], 0
    %16 = vsyncpa [#allocation5], 0
    // Predicated region
    $region2: #{tpu_custom_call.1} parent=1 // pred_check
      _
    $region3: #{tpu_custom_call.1} parent=1 // pred_check_branch
      %18 = sbr.rel (0) target = $region5
    $region4: #{tpu_custom_call.1} parent=1 // pred_region
      %s20 = ssub.s32 16384, 16384
      %21 = vsyncadd [#allocation4], %s20
      %s22 = sshll.u32 [#allocation3], 4
      %s23 = int_to_ptr.vmem [resolvable:$true] %s22
      %28 = dma.hbm_to_vmem [thread:$0]  %s0, 16384, %s23, [#allocation4], 256, 256, 16
    $region5: #{tpu_custom_call.1} parent=1 // pred_fallthru
      _
    // Predicated region
    $region6: #{tpu_custom_call.1} parent=1 // pred_check
      _
    $region7: #{tpu_custom_call.1} parent=1 // pred_check_branch
      %30 = sbr.rel (0) target = $region9
    $region8: #{tpu_custom_call.1} parent=1 // pred_region
      %s32 = ssub.s32 4096, 4096
      %33 = vsyncadd [#allocation7], %s32
      %s34 = sshll.u32 [#allocation6], 4
      %s35 = int_to_ptr.vmem [resolvable:$true] %s34
      %40 = dma.hbm_to_vmem [thread:$0]  %s1, 4096, %s35, [#allocation7], 512, 512, 32
    $region9: #{tpu_custom_call.1} parent=1 // pred_fallthru
      _
    // Predicated region
    $region10: #{tpu_custom_call.1} parent=1 // pred_check
      _
    $region11: #{tpu_custom_call.1} parent=1 // pred_check_branch
      %42 = sbr.rel (0) target = $region13
    $region12: #{tpu_custom_call.1} parent=1 // pred_region
      %s44 = ssub.s32 64, 64
      %45 = vsyncadd [#allocation7], %s44
      %s47 = sshll.u32 [#allocation8], 4
      %s48 = int_to_ptr.vmem [resolvable:$true] %s47
      %50 = dma.hbm_to_vmem [thread:$0]  %s2, 64, %s48, [#allocation7]
    $region13: #{tpu_custom_call.1} parent=1 // pred_fallthru
      _
    // Predicated region
    $region14: #{tpu_custom_call.1} parent=1 // pred_check
      _
    $region15: #{tpu_custom_call.1} parent=1 // pred_check_branch
      %52 = sbr.rel (0) target = $region17
    $region16: #{tpu_custom_call.1} parent=1 // pred_region
      %s54 = ssub.s32 32768, 32768
      %55 = vsyncadd [#allocation10], %s54
      %s56 = sshll.u32 [#allocation9], 4
      %s57 = int_to_ptr.vmem [resolvable:$true] %s56
      %62 = dma.hbm_to_vmem [thread:$0]  %s3, 32768, %s57, [#allocation10], 512, 512, 32
    $region17: #{tpu_custom_call.1} parent=1 // pred_fallthru
      _
    // Predicated region
    $region18: #{tpu_custom_call.1} parent=1 // pred_check
      _
    $region19: #{tpu_custom_call.1} parent=1 // pred_check_branch
      %64 = sbr.rel (0) target = $region21
    $region20: #{tpu_custom_call.1} parent=1 // pred_region
      %s66 = ssub.s32 64, 64
      %67 = vsyncadd [#allocation10], %s66
      %s69 = sshll.u32 [#allocation11], 4
      %s70 = int_to_ptr.vmem [resolvable:$true] %s69
      %72 = dma.hbm_to_vmem [thread:$0]  %s4, 64, %s70, [#allocation10]
    $region21: #{tpu_custom_call.1} parent=1 // pred_fallthru
      _
    // Predicated region
    $region22: #{tpu_custom_call.1} parent=1 // pred_check
      _
    $region23: #{tpu_custom_call.1} parent=1 // pred_check_branch
      %74 = sbr.rel (0) target = $region25
    $region24: #{tpu_custom_call.1} parent=1 // pred_region
      %s76 = ssub.s32 65536, 65536
      %77 = vsyncadd [#allocation13], %s76
      %s78 = sshll.u32 [#allocation12], 4
      %s79 = int_to_ptr.vmem [resolvable:$true] %s78
      %84 = dma.hbm_to_vmem [thread:$0]  %s5, 65536, %s79, [#allocation13], 1024, 1024, 64
    $region25: #{tpu_custom_call.1} parent=1 // pred_fallthru
      _
    // Predicated region
    $region26: #{tpu_custom_call.1} parent=1 // pred_check
      _
    $region27: #{tpu_custom_call.1} parent=1 // pred_check_branch
      %86 = sbr.rel (0) target = $region29
    $region28: #{tpu_custom_call.1} parent=1 // pred_region
      %s88 = ssub.s32 128, 128
      %89 = vsyncadd [#allocation13], %s88
      %s91 = sshll.u32 [#allocation14], 4
      %s92 = int_to_ptr.vmem [resolvable:$true] %s91
      %94 = dma.hbm_to_vmem [thread:$0]  %s6, 128, %s92, [#allocation13]
    $region29: #{tpu_custom_call.1} parent=1 // pred_fallthru
      _
    // Predicated region
    $region30: #{tpu_custom_call.1} parent=1 // pred_check
      _
    $region31: #{tpu_custom_call.1} parent=1 // pred_check_branch
      %96 = sbr.rel (0) target = $region33
    $region32: #{tpu_custom_call.1} parent=1 // pred_region
      %97 = dma.done [#allocation4], 16384
    $region33: #{tpu_custom_call.1} parent=1 // pred_fallthru
      _
    // Predicated region
    $region34: #{tpu_custom_call.1} parent=1 // pred_check
      _
    $region35: #{tpu_custom_call.1} parent=1 // pred_check_branch
      %99 = sbr.rel (0) target = $region37
    $region36: #{tpu_custom_call.1} parent=1 // pred_region
      %100 = dma.done [#allocation7], 4096
    $region37: #{tpu_custom_call.1} parent=1 // pred_fallthru
      _
    // Predicated region
    $region38: #{tpu_custom_call.1} parent=1 // pred_check
      _
    $region39: #{tpu_custom_call.1} parent=1 // pred_check_branch
      %102 = sbr.rel (0) target = $region41
    $region40: #{tpu_custom_call.1} parent=1 // pred_region
      %103 = dma.done [#allocation7], 64
    $region41: #{tpu_custom_call.1} parent=1 // pred_fallthru
      _
    // Predicated region
    $region42: #{tpu_custom_call.1} parent=1 // pred_check
      _
    $region43: #{tpu_custom_call.1} parent=1 // pred_check_branch
      %105 = sbr.rel (0) target = $region45
    $region44: #{tpu_custom_call.1} parent=1 // pred_region
      %106 = dma.done [#allocation10], 32768
    $region45: #{tpu_custom_call.1} parent=1 // pred_fallthru
      _
    // Predicated region
    $region46: #{tpu_custom_call.1} parent=1 // pred_check
      _
    $region47: #{tpu_custom_call.1} parent=1 // pred_check_branch
      %108 = sbr.rel (0) target = $region49
    $region48: #{tpu_custom_call.1} parent=1 // pred_region
      %109 = dma.done [#allocation10], 64
    $region49: #{tpu_custom_call.1} parent=1 // pred_fallthru
      _
    // Predicated region
    $region50: #{tpu_custom_call.1} parent=1 // pred_check
      _
    $region51: #{tpu_custom_call.1} parent=1 // pred_check_branch
      %111 = sbr.rel (0) target = $region53
    $region52: #{tpu_custom_call.1} parent=1 // pred_region
      %112 = dma.done [#allocation13], 65536
    $region53: #{tpu_custom_call.1} parent=1 // pred_fallthru
      _
    // Predicated region
    $region54: #{tpu_custom_call.1} parent=1 // pred_check
      _
    $region55: #{tpu_custom_call.1} parent=1 // pred_check_branch
      %114 = sbr.rel (0) target = $region57
    $region56: #{tpu_custom_call.1} parent=1 // pred_region
      %115 = dma.done [#allocation13], 128
    $region57: #{tpu_custom_call.1} parent=1 // pred_fallthru
      _
    %p116 = scmp.eq.s32.totalorder 0, 0
    // Predicated region
    $region58: #{tpu_custom_call.1} parent=1 // pred_check
      %p117 = pneg %p116
    $region59: #{tpu_custom_call.1} parent=1 // pred_check_branch
      %119 = sbr.rel (%p117) target = $region61
    $region60: #{tpu_custom_call.1} parent=1 // pred_region
      %vm120 = vcmask 523264
      %121 = vst.msk [vmem:[#allocation2] sm:$0xff] %vm120, 0.0
    $region61: #{tpu_custom_call.1} parent=1 // pred_fallthru
      _
    %v122 = vld [vmem:[#allocation2] sm:$0xff]
    %v123 = vld [vmem:[#allocation3] sm:$0xff]
    %v124 = vld [vmem:[#allocation3 + $0x8] sm:$0xff]
    %v125 = vld [vmem:[#allocation3 + $0x10] sm:$0xff]
    %v126 = vld [vmem:[#allocation3 + $0x18] sm:$0xff]
    %v127 = vld [vmem:[#allocation3 + $0x20] sm:$0xff]
    %v128 = vld [vmem:[#allocation3 + $0x28] sm:$0xff]
    %v129 = vld [vmem:[#allocation3 + $0x30] sm:$0xff]
    %v130 = vld [vmem:[#allocation3 + $0x38] sm:$0xff]
    %v131 = vld [vmem:[#allocation3 + $0x40] sm:$0xff]
    %v132 = vld [vmem:[#allocation3 + $0x48] sm:$0xff]
    %v133 = vld [vmem:[#allocation3 + $0x50] sm:$0xff]
    %v134 = vld [vmem:[#allocation3 + $0x58] sm:$0xff]
    %v135 = vld [vmem:[#allocation3 + $0x60] sm:$0xff]
    %v136 = vld [vmem:[#allocation3 + $0x68] sm:$0xff]
    %v137 = vld [vmem:[#allocation3 + $0x70] sm:$0xff]
    %v138 = vld [vmem:[#allocation3 + $0x78] sm:$0xff]
    %v139 = vld [vmem:[#allocation3 + $0x80] sm:$0xff]
    %v140 = vld [vmem:[#allocation3 + $0x88] sm:$0xff]
    %v141 = vld [vmem:[#allocation3 + $0x90] sm:$0xff]
    %v142 = vld [vmem:[#allocation3 + $0x98] sm:$0xff]
    %v143 = vld [vmem:[#allocation3 + $0xa0] sm:$0xff]
    %v144 = vld [vmem:[#allocation3 + $0xa8] sm:$0xff]
    %v145 = vld [vmem:[#allocation3 + $0xb0] sm:$0xff]
    %v146 = vld [vmem:[#allocation3 + $0xb8] sm:$0xff]
    %v147 = vld [vmem:[#allocation3 + $0xc0] sm:$0xff]
    %v148 = vld [vmem:[#allocation3 + $0xc8] sm:$0xff]
    %v149 = vld [vmem:[#allocation3 + $0xd0] sm:$0xff]
    %v150 = vld [vmem:[#allocation3 + $0xd8] sm:$0xff]
    %v151 = vld [vmem:[#allocation3 + $0xe0] sm:$0xff]
    %v152 = vld [vmem:[#allocation3 + $0xe8] sm:$0xff]
    %v153 = vld [vmem:[#allocation3 + $0xf0] sm:$0xff]
    %v154 = vld [vmem:[#allocation3 + $0xf8] sm:$0xff]
    %v155 = vld [vmem:[#allocation3 + $0x100] sm:$0xff]
    %v156 = vld [vmem:[#allocation3 + $0x108] sm:$0xff]
    %v157 = vld [vmem:[#allocation3 + $0x110] sm:$0xff]
    %v158 = vld [vmem:[#allocation3 + $0x118] sm:$0xff]
    %v159 = vld [vmem:[#allocation3 + $0x120] sm:$0xff]
    %v160 = vld [vmem:[#allocation3 + $0x128] sm:$0xff]
    %v161 = vld [vmem:[#allocation3 + $0x130] sm:$0xff]
    %v162 = vld [vmem:[#allocation3 + $0x138] sm:$0xff]
    %v163 = vld [vmem:[#allocation3 + $0x140] sm:$0xff]
    %v164 = vld [vmem:[#allocation3 + $0x148] sm:$0xff]
    %v165 = vld [vmem:[#allocation3 + $0x150] sm:$0xff]
    %v166 = vld [vmem:[#allocation3 + $0x158] sm:$0xff]
    %v167 = vld [vmem:[#allocation3 + $0x160] sm:$0xff]
    %v168 = vld [vmem:[#allocation3 + $0x168] sm:$0xff]
    %v169 = vld [vmem:[#allocation3 + $0x170] sm:$0xff]
    %v170 = vld [vmem:[#allocation3 + $0x178] sm:$0xff]
    %v171 = vld [vmem:[#allocation3 + $0x180] sm:$0xff]
    %v172 = vld [vmem:[#allocation3 + $0x188] sm:$0xff]
    %v173 = vld [vmem:[#allocation3 + $0x190] sm:$0xff]
    %v174 = vld [vmem:[#allocation3 + $0x198] sm:$0xff]
    %v175 = vld [vmem:[#allocation3 + $0x1a0] sm:$0xff]
    %v176 = vld [vmem:[#allocation3 + $0x1a8] sm:$0xff]
    %v177 = vld [vmem:[#allocation3 + $0x1b0] sm:$0xff]
    %v178 = vld [vmem:[#allocation3 + $0x1b8] sm:$0xff]
    %v179 = vld [vmem:[#allocation3 + $0x1c0] sm:$0xff]
    %v180 = vld [vmem:[#allocation3 + $0x1c8] sm:$0xff]
    %v181 = vld [vmem:[#allocation3 + $0x1d0] sm:$0xff]
    %v182 = vld [vmem:[#allocation3 + $0x1d8] sm:$0xff]
    %v183 = vld [vmem:[#allocation3 + $0x1e0] sm:$0xff]
    %v184 = vld [vmem:[#allocation3 + $0x1e8] sm:$0xff]
    %v185 = vld [vmem:[#allocation3 + $0x1f0] sm:$0xff]
    %v186 = vld [vmem:[#allocation3 + $0x1f8] sm:$0xff]
    %v187 = vld [vmem:[#allocation3 + $0x200] sm:$0xff]
    %v188 = vld [vmem:[#allocation3 + $0x208] sm:$0xff]
    %v189 = vld [vmem:[#allocation3 + $0x210] sm:$0xff]
    %v190 = vld [vmem:[#allocation3 + $0x218] sm:$0xff]
    %v191 = vld [vmem:[#allocation3 + $0x220] sm:$0xff]
    %v192 = vld [vmem:[#allocation3 + $0x228] sm:$0xff]
    %v193 = vld [vmem:[#allocation3 + $0x230] sm:$0xff]
    %v194 = vld [vmem:[#allocation3 + $0x238] sm:$0xff]
    %v195 = vld [vmem:[#allocation3 + $0x240] sm:$0xff]
    %v196 = vld [vmem:[#allocation3 + $0x248] sm:$0xff]
    %v197 = vld [vmem:[#allocation3 + $0x250] sm:$0xff]
    %v198 = vld [vmem:[#allocation3 + $0x258] sm:$0xff]
    %v199 = vld [vmem:[#allocation3 + $0x260] sm:$0xff]
    %v200 = vld [vmem:[#allocation3 + $0x268] sm:$0xff]
    %v201 = vld [vmem:[#allocation3 + $0x270] sm:$0xff]
    %v202 = vld [vmem:[#allocation3 + $0x278] sm:$0xff]
    %v203 = vld [vmem:[#allocation3 + $0x280] sm:$0xff]
    %v204 = vld [vmem:[#allocation3 + $0x288] sm:$0xff]
    %v205 = vld [vmem:[#allocation3 + $0x290] sm:$0xff]
    %v206 = vld [vmem:[#allocation3 + $0x298] sm:$0xff]
    %v207 = vld [vmem:[#allocation3 + $0x2a0] sm:$0xff]
    %v208 = vld [vmem:[#allocation3 + $0x2a8] sm:$0xff]
    %v209 = vld [vmem:[#allocation3 + $0x2b0] sm:$0xff]
    %v210 = vld [vmem:[#allocation3 + $0x2b8] sm:$0xff]
    %v211 = vld [vmem:[#allocation3 + $0x2c0] sm:$0xff]
    %v212 = vld [vmem:[#allocation3 + $0x2c8] sm:$0xff]
    %v213 = vld [vmem:[#allocation3 + $0x2d0] sm:$0xff]
    %v214 = vld [vmem:[#allocation3 + $0x2d8] sm:$0xff]
    %v215 = vld [vmem:[#allocation3 + $0x2e0] sm:$0xff]
    %v216 = vld [vmem:[#allocation3 + $0x2e8] sm:$0xff]
    %v217 = vld [vmem:[#allocation3 + $0x2f0] sm:$0xff]
    %v218 = vld [vmem:[#allocation3 + $0x2f8] sm:$0xff]
    %v219 = vld [vmem:[#allocation3 + $0x300] sm:$0xff]
    %v220 = vld [vmem:[#allocation3 + $0x308] sm:$0xff]
    %v221 = vld [vmem:[#allocation3 + $0x310] sm:$0xff]
    %v222 = vld [vmem:[#allocation3 + $0x318] sm:$0xff]
    %v223 = vld [vmem:[#allocation3 + $0x320] sm:$0xff]
    %v224 = vld [vmem:[#allocation3 + $0x328] sm:$0xff]
    %v225 = vld [vmem:[#allocation3 + $0x330] sm:$0xff]
    %v226 = vld [vmem:[#allocation3 + $0x338] sm:$0xff]
    %v227 = vld [vmem:[#allocation3 + $0x340] sm:$0xff]
    %v228 = vld [vmem:[#allocation3 + $0x348] sm:$0xff]
    %v229 = vld [vmem:[#allocation3 + $0x350] sm:$0xff]
    %v230 = vld [vmem:[#allocation3 + $0x358] sm:$0xff]
    %v231 = vld [vmem:[#allocation3 + $0x360] sm:$0xff]
    %v232 = vld [vmem:[#allocation3 + $0x368] sm:$0xff]
    %v233 = vld [vmem:[#allocation3 + $0x370] sm:$0xff]
    %v234 = vld [vmem:[#allocation3 + $0x378] sm:$0xff]
    %v235 = vld [vmem:[#allocation3 + $0x380] sm:$0xff]
    %v236 = vld [vmem:[#allocation3 + $0x388] sm:$0xff]
    %v237 = vld [vmem:[#allocation3 + $0x390] sm:$0xff]
    %v238 = vld [vmem:[#allocation3 + $0x398] sm:$0xff]
    %v239 = vld [vmem:[#allocation3 + $0x3a0] sm:$0xff]
    %v240 = vld [vmem:[#allocation3 + $0x3a8] sm:$0xff]
    %v241 = vld [vmem:[#allocation3 + $0x3b0] sm:$0xff]
    %v242 = vld [vmem:[#allocation3 + $0x3b8] sm:$0xff]
    %v243 = vld [vmem:[#allocation3 + $0x3c0] sm:$0xff]
    %v244 = vld [vmem:[#allocation3 + $0x3c8] sm:$0xff]
    %v245 = vld [vmem:[#allocation3 + $0x3d0] sm:$0xff]
    %v246 = vld [vmem:[#allocation3 + $0x3d8] sm:$0xff]
    %v247 = vld [vmem:[#allocation3 + $0x3e0] sm:$0xff]
    %v248 = vld [vmem:[#allocation3 + $0x3e8] sm:$0xff]
    %v249 = vld [vmem:[#allocation3 + $0x3f0] sm:$0xff]
    %v250 = vld [vmem:[#allocation3 + $0x3f8] sm:$0xff]
    %v251 = vadd.f32 %v123, %v124
    %252 = vadd.xlane.f32.xlu0 %v251
    %v253 = vpop.xlane.xlu0 %252
    %v254 = vadd.f32 %v125, %v126
    %255 = vadd.xlane.f32.xlu0 %v254
    %v256 = vpop.xlane.xlu0 %255
    %v257 = vadd.f32 %v127, %v128
    %258 = vadd.xlane.f32.xlu0 %v257
    %v259 = vpop.xlane.xlu0 %258
    %v260 = vadd.f32 %v129, %v130
    %261 = vadd.xlane.f32.xlu0 %v260
    %v262 = vpop.xlane.xlu0 %261
    %v263 = vadd.f32 %v131, %v132
    %264 = vadd.xlane.f32.xlu0 %v263
    %v265 = vpop.xlane.xlu0 %264
    %v266 = vadd.f32 %v133, %v134
    %267 = vadd.xlane.f32.xlu0 %v266
    %v268 = vpop.xlane.xlu0 %267
    %v269 = vadd.f32 %v135, %v136
    %270 = vadd.xlane.f32.xlu0 %v269
    %v271 = vpop.xlane.xlu0 %270
    %v272 = vadd.f32 %v137, %v138
    %273 = vadd.xlane.f32.xlu0 %v272
    %v274 = vpop.xlane.xlu0 %273
    %v275 = vadd.f32 %v139, %v140
    %276 = vadd.xlane.f32.xlu0 %v275
    %v277 = vpop.xlane.xlu0 %276
    %v278 = vadd.f32 %v141, %v142
    %279 = vadd.xlane.f32.xlu0 %v278
    %v280 = vpop.xlane.xlu0 %279
    %v281 = vadd.f32 %v143, %v144
    %282 = vadd.xlane.f32.xlu0 %v281
    %v283 = vpop.xlane.xlu0 %282
    %v284 = vadd.f32 %v145, %v146
    %285 = vadd.xlane.f32.xlu0 %v284
    %v286 = vpop.xlane.xlu0 %285
    %v287 = vadd.f32 %v147, %v148
    %288 = vadd.xlane.f32.xlu0 %v287
    %v289 = vpop.xlane.xlu0 %288
    %v290 = vadd.f32 %v149, %v150
    %291 = vadd.xlane.f32.xlu0 %v290
    %v292 = vpop.xlane.xlu0 %291
    %v293 = vadd.f32 %v151, %v152
    %294 = vadd.xlane.f32.xlu0 %v293
    %v295 = vpop.xlane.xlu0 %294
    %v296 = vadd.f32 %v153, %v154
    %297 = vadd.xlane.f32.xlu0 %v296
    %v298 = vpop.xlane.xlu0 %297
    %v299 = vadd.f32 %v155, %v156
    %300 = vadd.xlane.f32.xlu0 %v299
    %v301 = vpop.xlane.xlu0 %300
    %v302 = vadd.f32 %v157, %v158
    %303 = vadd.xlane.f32.xlu0 %v302
    %v304 = vpop.xlane.xlu0 %303
    %v305 = vadd.f32 %v159, %v160
    %306 = vadd.xlane.f32.xlu0 %v305
    %v307 = vpop.xlane.xlu0 %306
    %v308 = vadd.f32 %v161, %v162
    %309 = vadd.xlane.f32.xlu0 %v308
    %v310 = vpop.xlane.xlu0 %309
    %v311 = vadd.f32 %v163, %v164
    %312 = vadd.xlane.f32.xlu0 %v311
    %v313 = vpop.xlane.xlu0 %312
    %v314 = vadd.f32 %v165, %v166
    %315 = vadd.xlane.f32.xlu0 %v314
    %v316 = vpop.xlane.xlu0 %315
    %v317 = vadd.f32 %v167, %v168
    %318 = vadd.xlane.f32.xlu0 %v317
    %v319 = vpop.xlane.xlu0 %318
    %v320 = vadd.f32 %v169, %v170
    %321 = vadd.xlane.f32.xlu0 %v320
    %v322 = vpop.xlane.xlu0 %321
    %v323 = vadd.f32 %v171, %v172
    %324 = vadd.xlane.f32.xlu0 %v323
    %v325 = vpop.xlane.xlu0 %324
    %v326 = vadd.f32 %v173, %v174
    %327 = vadd.xlane.f32.xlu0 %v326
    %v328 = vpop.xlane.xlu0 %327
    %v329 = vadd.f32 %v175, %v176
    %330 = vadd.xlane.f32.xlu0 %v329
    %v331 = vpop.xlane.xlu0 %330
    %v332 = vadd.f32 %v177, %v178
    %333 = vadd.xlane.f32.xlu0 %v332
    %v334 = vpop.xlane.xlu0 %333
    %v335 = vadd.f32 %v179, %v180
    %336 = vadd.xlane.f32.xlu0 %v335
    %v337 = vpop.xlane.xlu0 %336
    %v338 = vadd.f32 %v181, %v182
    %339 = vadd.xlane.f32.xlu0 %v338
    %v340 = vpop.xlane.xlu0 %339
    %v341 = vadd.f32 %v183, %v184
    %342 = vadd.xlane.f32.xlu0 %v341
    %v343 = vpop.xlane.xlu0 %342
    %v344 = vadd.f32 %v185, %v186
    %345 = vadd.xlane.f32.xlu0 %v344
    %v346 = vpop.xlane.xlu0 %345
    %v347 = vadd.f32 %v187, %v188
    %348 = vadd.xlane.f32.xlu0 %v347
    %v349 = vpop.xlane.xlu0 %348
    %v350 = vadd.f32 %v189, %v190
    %351 = vadd.xlane.f32.xlu0 %v350
    %v352 = vpop.xlane.xlu0 %351
    %v353 = vadd.f32 %v191, %v192
    %354 = vadd.xlane.f32.xlu0 %v353
    %v355 = vpop.xlane.xlu0 %354
    %v356 = vadd.f32 %v193, %v194
    %357 = vadd.xlane.f32.xlu0 %v356
    %v358 = vpop.xlane.xlu0 %357
    %v359 = vadd.f32 %v195, %v196
    %360 = vadd.xlane.f32.xlu0 %v359
    %v361 = vpop.xlane.xlu0 %360
    %v362 = vadd.f32 %v197, %v198
    %363 = vadd.xlane.f32.xlu0 %v362
    %v364 = vpop.xlane.xlu0 %363
    %v365 = vadd.f32 %v199, %v200
    %366 = vadd.xlane.f32.xlu0 %v365
    %v367 = vpop.xlane.xlu0 %366
    %v368 = vadd.f32 %v201, %v202
    %369 = vadd.xlane.f32.xlu0 %v368
    %v370 = vpop.xlane.xlu0 %369
    %v371 = vadd.f32 %v203, %v204
    %372 = vadd.xlane.f32.xlu0 %v371
    %v373 = vpop.xlane.xlu0 %372
    %v374 = vadd.f32 %v205, %v206
    %375 = vadd.xlane.f32.xlu0 %v374
    %v376 = vpop.xlane.xlu0 %375
    %v377 = vadd.f32 %v207, %v208
    %378 = vadd.xlane.f32.xlu0 %v377
    %v379 = vpop.xlane.xlu0 %378
    %v380 = vadd.f32 %v209, %v210
    %381 = vadd.xlane.f32.xlu0 %v380
    %v382 = vpop.xlane.xlu0 %381
    %v383 = vadd.f32 %v211, %v212
    %384 = vadd.xlane.f32.xlu0 %v383
    %v385 = vpop.xlane.xlu0 %384
    %v386 = vadd.f32 %v213, %v214
    %387 = vadd.xlane.f32.xlu0 %v386
    %v388 = vpop.xlane.xlu0 %387
    %v389 = vadd.f32 %v215, %v216
    %390 = vadd.xlane.f32.xlu0 %v389
    %v391 = vpop.xlane.xlu0 %390
    %v392 = vadd.f32 %v217, %v218
    %393 = vadd.xlane.f32.xlu0 %v392
    %v394 = vpop.xlane.xlu0 %393
    %v395 = vadd.f32 %v219, %v220
    %396 = vadd.xlane.f32.xlu0 %v395
    %v397 = vpop.xlane.xlu0 %396
    %v398 = vadd.f32 %v221, %v222
    %399 = vadd.xlane.f32.xlu0 %v398
    %v400 = vpop.xlane.xlu0 %399
    %v401 = vadd.f32 %v223, %v224
    %402 = vadd.xlane.f32.xlu0 %v401
    %v403 = vpop.xlane.xlu0 %402
    %v404 = vadd.f32 %v225, %v226
    %405 = vadd.xlane.f32.xlu0 %v404
    %v406 = vpop.xlane.xlu0 %405
    %v407 = vadd.f32 %v227, %v228
    %408 = vadd.xlane.f32.xlu0 %v407
    %v409 = vpop.xlane.xlu0 %408
    %v410 = vadd.f32 %v229, %v230
    %411 = vadd.xlane.f32.xlu0 %v410
    %v412 = vpop.xlane.xlu0 %411
    %v413 = vadd.f32 %v231, %v232
    %414 = vadd.xlane.f32.xlu0 %v413
    %v415 = vpop.xlane.xlu0 %414
    %v416 = vadd.f32 %v233, %v234
    %417 = vadd.xlane.f32.xlu0 %v416
    %v418 = vpop.xlane.xlu0 %417
    %v419 = vadd.f32 %v235, %v236
    %420 = vadd.xlane.f32.xlu0 %v419
    %v421 = vpop.xlane.xlu0 %420
    %v422 = vadd.f32 %v237, %v238
    %423 = vadd.xlane.f32.xlu0 %v422
    %v424 = vpop.xlane.xlu0 %423
    %v425 = vadd.f32 %v239, %v240
    %426 = vadd.xlane.f32.xlu0 %v425
    %v427 = vpop.xlane.xlu0 %426
    %v428 = vadd.f32 %v241, %v242
    %429 = vadd.xlane.f32.xlu0 %v428
    %v430 = vpop.xlane.xlu0 %429
    %v431 = vadd.f32 %v243, %v244
    %432 = vadd.xlane.f32.xlu0 %v431
    %v433 = vpop.xlane.xlu0 %432
    %v434 = vadd.f32 %v245, %v246
    %435 = vadd.xlane.f32.xlu0 %v434
    %v436 = vpop.xlane.xlu0 %435
    %v437 = vadd.f32 %v247, %v248
    %438 = vadd.xlane.f32.xlu0 %v437
    %v439 = vpop.xlane.xlu0 %438
    %v440 = vadd.f32 %v249, %v250
    %441 = vadd.xlane.f32.xlu0 %v440
    %v442 = vpop.xlane.xlu0 %441
    %v507 = vlaneseq
    %v508 = vand.u32 %v507, 127
    %v509 = vlaneseq
    %v510 = vshrl.u32 %v509, 7
    %v511 = vsub.s32 %v508, %v510
    %v512 = vrot.slane %v253, %v511
    %v513 = vadd.s32 %v508, 4294967288
    %v514 = vlaneseq
    %v515 = vshrl.u32 %v514, 7
    %v516 = vsub.s32 %v513, %v515
    %v517 = vrot.slane %v256, %v516
    %vm518 = vcmask 130112
    %v519 = vsel %vm518, %v517, %v512
    %v520 = vadd.s32 %v508, 4294967280
    %v521 = vlaneseq
    %v522 = vshrl.u32 %v521, 7
    %v523 = vsub.s32 %v520, %v522
    %v524 = vrot.slane %v259, %v523
    %vm525 = vcmask 195712
    %v526 = vsel %vm525, %v524, %v519
    %v527 = vadd.s32 %v508, 4294967272
    %v528 = vlaneseq
    %v529 = vshrl.u32 %v528, 7
    %v530 = vsub.s32 %v527, %v529
    %v531 = vrot.slane %v262, %v530
    %vm532 = vcmask 261312
    %v533 = vsel %vm532, %v531, %v526
    %v534 = vadd.s32 %v508, 4294967264
    %v535 = vlaneseq
    %v536 = vshrl.u32 %v535, 7
    %v537 = vsub.s32 %v534, %v536
    %v538 = vrot.slane %v265, %v537
    %vm539 = vcmask 326912
    %v540 = vsel %vm539, %v538, %v533
    %v541 = vadd.s32 %v508, 4294967256
    %v542 = vlaneseq
    %v543 = vshrl.u32 %v542, 7
    %v544 = vsub.s32 %v541, %v543
    %v545 = vrot.slane %v268, %v544
    %vm546 = vcmask 392512
    %v547 = vsel %vm546, %v545, %v540
    %v548 = vadd.s32 %v508, 4294967248
    %v549 = vlaneseq
    %v550 = vshrl.u32 %v549, 7
    %v551 = vsub.s32 %v548, %v550
    %v552 = vrot.slane %v271, %v551
    %vm553 = vcmask 458112
    %v554 = vsel %vm553, %v552, %v547
    %v555 = vadd.s32 %v508, 4294967240
    %v556 = vlaneseq
    %v557 = vshrl.u32 %v556, 7
    %v558 = vsub.s32 %v555, %v557
    %v559 = vrot.slane %v274, %v558
    %vm560 = vcmask 523712
    %v561 = vsel %vm560, %v559, %v554
    %v562 = vlaneseq
    %v563 = vshrl.u32 %v562, 7
    %v564 = vsub.s32 %v508, %v563
    %v565 = vrot.slane %v277, %v564
    %v566 = vlaneseq
    %v567 = vshrl.u32 %v566, 7
    %v568 = vsub.s32 %v513, %v567
    %v569 = vrot.slane %v280, %v568
    %v570 = vsel %vm518, %v569, %v565
    %v571 = vlaneseq
    %v572 = vshrl.u32 %v571, 7
    %v573 = vsub.s32 %v520, %v572
    %v574 = vrot.slane %v283, %v573
    %v575 = vsel %vm525, %v574, %v570
    %v576 = vlaneseq
    %v577 = vshrl.u32 %v576, 7
    %v578 = vsub.s32 %v527, %v577
    %v579 = vrot.slane %v286, %v578
    %v580 = vsel %vm532, %v579, %v575
    %v581 = vlaneseq
    %v582 = vshrl.u32 %v581, 7
    %v583 = vsub.s32 %v534, %v582
    %v584 = vrot.slane %v289, %v583
    %v585 = vsel %vm539, %v584, %v580
    %v586 = vlaneseq
    %v587 = vshrl.u32 %v586, 7
    %v588 = vsub.s32 %v541, %v587
    %v589 = vrot.slane %v292, %v588
    %v590 = vsel %vm546, %v589, %v585
    %v591 = vlaneseq
    %v592 = vshrl.u32 %v591, 7
    %v593 = vsub.s32 %v548, %v592
    %v594 = vrot.slane %v295, %v593
    %v595 = vsel %vm553, %v594, %v590
    %v596 = vlaneseq
    %v597 = vshrl.u32 %v596, 7
    %v598 = vsub.s32 %v555, %v597
    %v599 = vrot.slane %v298, %v598
    %v600 = vsel %vm560, %v599, %v595
    %v601 = vlaneseq
    %v602 = vshrl.u32 %v601, 7
    %v603 = vsub.s32 %v508, %v602
    %v604 = vrot.slane %v301, %v603
    %v605 = vlaneseq
    %v606 = vshrl.u32 %v605, 7
    %v607 = vsub.s32 %v513, %v606
    %v608 = vrot.slane %v304, %v607
    %v609 = vsel %vm518, %v608, %v604
    %v610 = vlaneseq
    %v611 = vshrl.u32 %v610, 7
    %v612 = vsub.s32 %v520, %v611
    %v613 = vrot.slane %v307, %v612
    %v614 = vsel %vm525, %v613, %v609
    %v615 = vlaneseq
    %v616 = vshrl.u32 %v615, 7
    %v617 = vsub.s32 %v527, %v616
    %v618 = vrot.slane %v310, %v617
    %v619 = vsel %vm532, %v618, %v614
    %v620 = vlaneseq
    %v621 = vshrl.u32 %v620, 7
    %v622 = vsub.s32 %v534, %v621
    %v623 = vrot.slane %v313, %v622
    %v624 = vsel %vm539, %v623, %v619
    %v625 = vlaneseq
    %v626 = vshrl.u32 %v625, 7
    %v627 = vsub.s32 %v541, %v626
    %v628 = vrot.slane %v316, %v627
    %v629 = vsel %vm546, %v628, %v624
    %v630 = vlaneseq
    %v631 = vshrl.u32 %v630, 7
    %v632 = vsub.s32 %v548, %v631
    %v633 = vrot.slane %v319, %v632
    %v634 = vsel %vm553, %v633, %v629
    %v635 = vlaneseq
    %v636 = vshrl.u32 %v635, 7
    %v637 = vsub.s32 %v555, %v636
    %v638 = vrot.slane %v322, %v637
    %v639 = vsel %vm560, %v638, %v634
    %v640 = vlaneseq
    %v641 = vshrl.u32 %v640, 7
    %v642 = vsub.s32 %v508, %v641
    %v643 = vrot.slane %v325, %v642
    %v644 = vlaneseq
    %v645 = vshrl.u32 %v644, 7
    %v646 = vsub.s32 %v513, %v645
    %v647 = vrot.slane %v328, %v646
    %v648 = vsel %vm518, %v647, %v643
    %v649 = vlaneseq
    %v650 = vshrl.u32 %v649, 7
    %v651 = vsub.s32 %v520, %v650
    %v652 = vrot.slane %v331, %v651
    %v653 = vsel %vm525, %v652, %v648
    %v654 = vlaneseq
    %v655 = vshrl.u32 %v654, 7
    %v656 = vsub.s32 %v527, %v655
    %v657 = vrot.slane %v334, %v656
    %v658 = vsel %vm532, %v657, %v653
    %v659 = vlaneseq
    %v660 = vshrl.u32 %v659, 7
    %v661 = vsub.s32 %v534, %v660
    %v662 = vrot.slane %v337, %v661
    %v663 = vsel %vm539, %v662, %v658
    %v664 = vlaneseq
    %v665 = vshrl.u32 %v664, 7
    %v666 = vsub.s32 %v541, %v665
    %v667 = vrot.slane %v340, %v666
    %v668 = vsel %vm546, %v667, %v663
    %v669 = vlaneseq
    %v670 = vshrl.u32 %v669, 7
    %v671 = vsub.s32 %v548, %v670
    %v672 = vrot.slane %v343, %v671
    %v673 = vsel %vm553, %v672, %v668
    %v674 = vlaneseq
    %v675 = vshrl.u32 %v674, 7
    %v676 = vsub.s32 %v555, %v675
    %v677 = vrot.slane %v346, %v676
    %v678 = vsel %vm560, %v677, %v673
    %v679 = vlaneseq
    %v680 = vshrl.u32 %v679, 7
    %v681 = vsub.s32 %v508, %v680
    %v682 = vrot.slane %v349, %v681
    %v683 = vlaneseq
    %v684 = vshrl.u32 %v683, 7
    %v685 = vsub.s32 %v513, %v684
    %v686 = vrot.slane %v352, %v685
    %v687 = vsel %vm518, %v686, %v682
    %v688 = vlaneseq
    %v689 = vshrl.u32 %v688, 7
    %v690 = vsub.s32 %v520, %v689
    %v691 = vrot.slane %v355, %v690
    %v692 = vsel %vm525, %v691, %v687
    %v693 = vlaneseq
    %v694 = vshrl.u32 %v693, 7
    %v695 = vsub.s32 %v527, %v694
    %v696 = vrot.slane %v358, %v695
    %v697 = vsel %vm532, %v696, %v692
    %v698 = vlaneseq
    %v699 = vshrl.u32 %v698, 7
    %v700 = vsub.s32 %v534, %v699
    %v701 = vrot.slane %v361, %v700
    %v702 = vsel %vm539, %v701, %v697
    %v703 = vlaneseq
    %v704 = vshrl.u32 %v703, 7
    %v705 = vsub.s32 %v541, %v704
    %v706 = vrot.slane %v364, %v705
    %v707 = vsel %vm546, %v706, %v702
    %v708 = vlaneseq
    %v709 = vshrl.u32 %v708, 7
    %v710 = vsub.s32 %v548, %v709
    %v711 = vrot.slane %v367, %v710
    %v712 = vsel %vm553, %v711, %v707
    %v713 = vlaneseq
    %v714 = vshrl.u32 %v713, 7
    %v715 = vsub.s32 %v555, %v714
    %v716 = vrot.slane %v370, %v715
    %v717 = vsel %vm560, %v716, %v712
    %v718 = vlaneseq
    %v719 = vshrl.u32 %v718, 7
    %v720 = vsub.s32 %v508, %v719
    %v721 = vrot.slane %v373, %v720
    %v722 = vlaneseq
    %v723 = vshrl.u32 %v722, 7
    %v724 = vsub.s32 %v513, %v723
    %v725 = vrot.slane %v376, %v724
    %v726 = vsel %vm518, %v725, %v721
    %v727 = vlaneseq
    %v728 = vshrl.u32 %v727, 7
    %v729 = vsub.s32 %v520, %v728
    %v730 = vrot.slane %v379, %v729
    %v731 = vsel %vm525, %v730, %v726
    %v732 = vlaneseq
    %v733 = vshrl.u32 %v732, 7
    %v734 = vsub.s32 %v527, %v733
    %v735 = vrot.slane %v382, %v734
    %v736 = vsel %vm532, %v735, %v731
    %v737 = vlaneseq
    %v738 = vshrl.u32 %v737, 7
    %v739 = vsub.s32 %v534, %v738
    %v740 = vrot.slane %v385, %v739
    %v741 = vsel %vm539, %v740, %v736
    %v742 = vlaneseq
    %v743 = vshrl.u32 %v742, 7
    %v744 = vsub.s32 %v541, %v743
    %v745 = vrot.slane %v388, %v744
    %v746 = vsel %vm546, %v745, %v741
    %v747 = vlaneseq
    %v748 = vshrl.u32 %v747, 7
    %v749 = vsub.s32 %v548, %v748
    %v750 = vrot.slane %v391, %v749
    %v751 = vsel %vm553, %v750, %v746
    %v752 = vlaneseq
    %v753 = vshrl.u32 %v752, 7
    %v754 = vsub.s32 %v555, %v753
    %v755 = vrot.slane %v394, %v754
    %v756 = vsel %vm560, %v755, %v751
    %v757 = vlaneseq
    %v758 = vshrl.u32 %v757, 7
    %v759 = vsub.s32 %v508, %v758
    %v760 = vrot.slane %v397, %v759
    %v761 = vlaneseq
    %v762 = vshrl.u32 %v761, 7
    %v763 = vsub.s32 %v513, %v762
    %v764 = vrot.slane %v400, %v763
    %v765 = vsel %vm518, %v764, %v760
    %v766 = vlaneseq
    %v767 = vshrl.u32 %v766, 7
    %v768 = vsub.s32 %v520, %v767
    %v769 = vrot.slane %v403, %v768
    %v770 = vsel %vm525, %v769, %v765
    %v771 = vlaneseq
    %v772 = vshrl.u32 %v771, 7
    %v773 = vsub.s32 %v527, %v772
    %v774 = vrot.slane %v406, %v773
    %v775 = vsel %vm532, %v774, %v770
    %v776 = vlaneseq
    %v777 = vshrl.u32 %v776, 7
    %v778 = vsub.s32 %v534, %v777
    %v779 = vrot.slane %v409, %v778
    %v780 = vsel %vm539, %v779, %v775
    %v781 = vlaneseq
    %v782 = vshrl.u32 %v781, 7
    %v783 = vsub.s32 %v541, %v782
    %v784 = vrot.slane %v412, %v783
    %v785 = vsel %vm546, %v784, %v780
    %v786 = vlaneseq
    %v787 = vshrl.u32 %v786, 7
    %v788 = vsub.s32 %v548, %v787
    %v789 = vrot.slane %v415, %v788
    %v790 = vsel %vm553, %v789, %v785
    %v791 = vlaneseq
    %v792 = vshrl.u32 %v791, 7
    %v793 = vsub.s32 %v555, %v792
    %v794 = vrot.slane %v418, %v793
    %v795 = vsel %vm560, %v794, %v790
    %v796 = vlaneseq
    %v797 = vshrl.u32 %v796, 7
    %v798 = vsub.s32 %v508, %v797
    %v799 = vrot.slane %v421, %v798
    %v800 = vlaneseq
    %v801 = vshrl.u32 %v800, 7
    %v802 = vsub.s32 %v513, %v801
    %v803 = vrot.slane %v424, %v802
    %v804 = vsel %vm518, %v803, %v799
    %v805 = vlaneseq
    %v806 = vshrl.u32 %v805, 7
    %v807 = vsub.s32 %v520, %v806
    %v808 = vrot.slane %v427, %v807
    %v809 = vsel %vm525, %v808, %v804
    %v810 = vlaneseq
    %v811 = vshrl.u32 %v810, 7
    %v812 = vsub.s32 %v527, %v811
    %v813 = vrot.slane %v430, %v812
    %v814 = vsel %vm532, %v813, %v809
    %v815 = vlaneseq
    %v816 = vshrl.u32 %v815, 7
    %v817 = vsub.s32 %v534, %v816
    %v818 = vrot.slane %v433, %v817
    %v819 = vsel %vm539, %v818, %v814
    %v820 = vlaneseq
    %v821 = vshrl.u32 %v820, 7
    %v822 = vsub.s32 %v541, %v821
    %v823 = vrot.slane %v436, %v822
    %v824 = vsel %vm546, %v823, %v819
    %v825 = vlaneseq
    %v826 = vshrl.u32 %v825, 7
    %v827 = vsub.s32 %v548, %v826
    %v828 = vrot.slane %v439, %v827
    %v829 = vsel %vm553, %v828, %v824
    %v830 = vlaneseq
    %v831 = vshrl.u32 %v830, 7
    %v832 = vsub.s32 %v555, %v831
    %v833 = vrot.slane %v442, %v832
    %v834 = vsel %vm560, %v833, %v829
    %vm835 = vcmask 1041409
    %v836 = vsel %vm835, %v600, %v561
    %vm837 = vcmask 1042434
    %v838 = vsel %vm837, %v639, %v836
    %vm839 = vcmask 1043459
    %v840 = vsel %vm839, %v678, %v838
    %vm841 = vcmask 1044484
    %v842 = vsel %vm841, %v717, %v840
    %vm843 = vcmask 1045509
    %v844 = vsel %vm843, %v756, %v842
    %vm845 = vcmask 1046534
    %v846 = vsel %vm845, %v795, %v844
    %vm847 = vcmask 1047559
    %v848 = vsel %vm847, %v834, %v846
    %v850 = vadd.f32 %v122, %v848
    %vm851 = vcmask 523264
    %852 = vst.msk [vmem:[#allocation2] sm:$0xff] %vm851, %v850
    // Predicated region
    $region62: #{tpu_custom_call.1} parent=1 // pred_check
      %p853 = pneg %p116
    $region63: #{tpu_custom_call.1} parent=1 // pred_check_branch
      %855 = sbr.rel (%p853) target = $region65
    $region64: #{tpu_custom_call.1} parent=1 // pred_region
      %v856 = vld [vmem:[#allocation2] sm:$0xff]
      %v857 = vmul.f32 %v856, 0.00390625
      %v858 = vld [vmem:[#allocation6] sm:$0xff]
      %v859 = vld [vmem:[#allocation6 + $0x8] sm:$0xff]
      %v860 = vld [vmem:[#allocation6 + $0x10] sm:$0xff]
      %v861 = vld [vmem:[#allocation6 + $0x18] sm:$0xff]
      %v862 = vld [vmem:[#allocation6 + $0x20] sm:$0xff]
      %v863 = vld [vmem:[#allocation6 + $0x28] sm:$0xff]
      %v864 = vld [vmem:[#allocation6 + $0x30] sm:$0xff]
      %v865 = vld [vmem:[#allocation6 + $0x38] sm:$0xff]
      %v866 = vld [vmem:[#allocation6 + $0x40] sm:$0xff]
      %v867 = vld [vmem:[#allocation6 + $0x48] sm:$0xff]
      %v868 = vld [vmem:[#allocation6 + $0x50] sm:$0xff]
      %v869 = vld [vmem:[#allocation6 + $0x58] sm:$0xff]
      %v870 = vld [vmem:[#allocation6 + $0x60] sm:$0xff]
      %v871 = vld [vmem:[#allocation6 + $0x68] sm:$0xff]
      %v872 = vld [vmem:[#allocation6 + $0x70] sm:$0xff]
      %v873 = vld [vmem:[#allocation6 + $0x78] sm:$0xff]
      %v874 = vld [vmem:[#allocation6 + $0x80] sm:$0xff]
      %v875 = vld [vmem:[#allocation6 + $0x88] sm:$0xff]
      %v876 = vld [vmem:[#allocation6 + $0x90] sm:$0xff]
      %v877 = vld [vmem:[#allocation6 + $0x98] sm:$0xff]
      %v878 = vld [vmem:[#allocation6 + $0xa0] sm:$0xff]
      %v879 = vld [vmem:[#allocation6 + $0xa8] sm:$0xff]
      %v880 = vld [vmem:[#allocation6 + $0xb0] sm:$0xff]
      %v881 = vld [vmem:[#allocation6 + $0xb8] sm:$0xff]
      %v882 = vld [vmem:[#allocation6 + $0xc0] sm:$0xff]
      %v883 = vld [vmem:[#allocation6 + $0xc8] sm:$0xff]
      %v884 = vld [vmem:[#allocation6 + $0xd0] sm:$0xff]
      %v885 = vld [vmem:[#allocation6 + $0xd8] sm:$0xff]
      %v886 = vld [vmem:[#allocation6 + $0xe0] sm:$0xff]
      %v887 = vld [vmem:[#allocation6 + $0xe8] sm:$0xff]
      %v888 = vld [vmem:[#allocation6 + $0xf0] sm:$0xff]
      %v889 = vld [vmem:[#allocation6 + $0xf8] sm:$0xff]
      %v890 = vld [vmem:[#allocation8] sm:$0xf]
      %v892 = vlaneseq
      %v893 = vshrl.u32 %v892, 7
      %v894 = vsub.s32 0, %v893
      %v895 = vrot.slane %v890, %v894
      %v896 = vlaneseq
      %v897 = vshrl.u32 %v896, 7
      %v898 = vsub.s32 1, %v897
      %v899 = vrot.slane %v890, %v898
      %v900 = vlaneseq
      %v901 = vshrl.u32 %v900, 7
      %v902 = vsub.s32 2, %v901
      %v903 = vrot.slane %v890, %v902
      %v904 = vlaneseq
      %v905 = vshrl.u32 %v904, 7
      %v906 = vsub.s32 3, %v905
      %v907 = vrot.slane %v890, %v906
      %v913 = vsel %vm851, %v857, 0
      %915 = vmatprep.subr.mxu0 %v859
      %916 = vmatpush1.msra.mxu0 %v858
      %917 = vmatprep.subr.mxu0 %v863
      %918 = vmatpush1.msra.mxu0 %v862
      %919 = vmatprep.subr.mxu0 %v867
      %920 = vmatpush1.msra.mxu0 %v866
      %921 = vmatprep.subr.mxu0 %v871
      %922 = vmatpush1.msra.mxu0 %v870
      %923 = vmatprep.subr.mxu0 %v875
      %924 = vmatpush1.msra.mxu0 %v874
      %925 = vmatprep.subr.mxu0 %v879
      %926 = vmatpush1.msra.mxu0 %v878
      %927 = vmatprep.subr.mxu0 %v883
      %928 = vmatpush1.msra.mxu0 %v882
      %929 = vmatprep.subr.mxu0 %v887
      %930 = vmatpush1.msra.mxu0 %v886
      %931 = vmatprep.subr.mxu0 0.0
      %932 = vmatpush1.msra.mxu0 0.0
      %933 = vmatprep.subr.mxu0 0.0
      %934 = vmatpush1.msra.mxu0 0.0
      %935 = vmatprep.subr.mxu0 0.0
      %936 = vmatpush1.msra.mxu0 0.0
      %937 = vmatprep.subr.mxu0 0.0
      %938 = vmatpush1.msra.mxu0 0.0
      %939 = vmatprep.subr.mxu0 0.0
      %940 = vmatpush1.msra.mxu0 0.0
      %941 = vmatprep.subr.mxu0 0.0
      %942 = vmatpush1.msra.mxu0 0.0
      %943 = vmatprep.subr.mxu0 0.0
      %944 = vmatpush1.msra.mxu0 0.0
      %945 = vmatprep.subr.mxu0 0.0
      %946 = vmatpush1.msra.mxu0 0.0
      %947 = vmatprep.subr.mxu0 0.0
      %948 = vmatpush1.msra.mxu0 0.0
      %949 = vmatprep.subr.mxu0 0.0
      %950 = vmatpush1.msra.mxu0 0.0
      %951 = vmatprep.subr.mxu0 0.0
      %952 = vmatpush1.msra.mxu0 0.0
      %953 = vmatprep.subr.mxu0 0.0
      %954 = vmatpush1.msra.mxu0 0.0
      %955 = vmatprep.subr.mxu0 0.0
      %956 = vmatpush1.msra.mxu0 0.0
      %957 = vmatprep.subr.mxu0 0.0
      %958 = vmatpush1.msra.mxu0 0.0
      %959 = vmatprep.subr.mxu0 0.0
      %960 = vmatpush1.msra.mxu0 0.0
      %961 = vmatprep.subr.mxu0 0.0
      %962 = vmatpush1.msra.mxu0 0.0
      %963 = vmatprep.subr.mxu0 0.0
      %964 = vmatpush1.msra.mxu0 0.0
      %965 = vmatprep.subr.mxu0 0.0
      %966 = vmatpush1.msra.mxu0 0.0
      %967 = vmatprep.subr.mxu0 0.0
      %968 = vmatpush1.msra.mxu0 0.0
      %969 = vmatprep.subr.mxu0 0.0
      %970 = vmatpush1.msra.mxu0 0.0
      %971 = vmatprep.subr.mxu0 0.0
      %972 = vmatpush1.msra.mxu0 0.0
      %973 = vmatprep.subr.mxu0 0.0
      %974 = vmatpush1.msra.mxu0 0.0
      %975 = vmatprep.subr.mxu0 0.0
      %976 = vmatpush1.msra.mxu0 0.0
      %977 = vmatprep.subr.mxu0 0.0
      %978 = vmatpush1.msra.mxu0 0.0
      %979 = vmatprep.mubr.f32.mxu0 0.0
      %980 = vmatmul.mubr.f32.gmra.mrb[0].mxu0 %v913
      %v981 = vpop.f32.mrb[0].mxu0
      %v982 = vadd.f32 %v895, %v981
      %v983 = vpop.f32.mrb[0].mxu0
      %v984 = vadd.f32 %v899, %v983
      %985 = vdwg.mxu0
      %986 = vmatprep.subr.mxu0 %v861
      %987 = vmatpush1.msra.mxu0 %v860
      %988 = vmatprep.subr.mxu0 %v865
      %989 = vmatpush1.msra.mxu0 %v864
      %990 = vmatprep.subr.mxu0 %v869
      %991 = vmatpush1.msra.mxu0 %v868
      %992 = vmatprep.subr.mxu0 %v873
      %993 = vmatpush1.msra.mxu0 %v872
      %994 = vmatprep.subr.mxu0 %v877
      %995 = vmatpush1.msra.mxu0 %v876
      %996 = vmatprep.subr.mxu0 %v881
      %997 = vmatpush1.msra.mxu0 %v880
      %998 = vmatprep.subr.mxu0 %v885
      %999 = vmatpush1.msra.mxu0 %v884
      %1000 = vmatprep.subr.mxu0 %v889
      %1001 = vmatpush1.msra.mxu0 %v888
      %1002 = vmatprep.subr.mxu0 0.0
      %1003 = vmatpush1.msra.mxu0 0.0
      %1004 = vmatprep.subr.mxu0 0.0
      %1005 = vmatpush1.msra.mxu0 0.0
      %1006 = vmatprep.subr.mxu0 0.0
      %1007 = vmatpush1.msra.mxu0 0.0
      %1008 = vmatprep.subr.mxu0 0.0
      %1009 = vmatpush1.msra.mxu0 0.0
      %1010 = vmatprep.subr.mxu0 0.0
      %1011 = vmatpush1.msra.mxu0 0.0
      %1012 = vmatprep.subr.mxu0 0.0
      %1013 = vmatpush1.msra.mxu0 0.0
      %1014 = vmatprep.subr.mxu0 0.0
      %1015 = vmatpush1.msra.mxu0 0.0
      %1016 = vmatprep.subr.mxu0 0.0
      %1017 = vmatpush1.msra.mxu0 0.0
      %1018 = vmatprep.subr.mxu0 0.0
      %1019 = vmatpush1.msra.mxu0 0.0
      %1020 = vmatprep.subr.mxu0 0.0
      %1021 = vmatpush1.msra.mxu0 0.0
      %1022 = vmatprep.subr.mxu0 0.0
      %1023 = vmatpush1.msra.mxu0 0.0
      %1024 = vmatprep.subr.mxu0 0.0
      %1025 = vmatpush1.msra.mxu0 0.0
      %1026 = vmatprep.subr.mxu0 0.0
      %1027 = vmatpush1.msra.mxu0 0.0
      %1028 = vmatprep.subr.mxu0 0.0
      %1029 = vmatpush1.msra.mxu0 0.0
      %1030 = vmatprep.subr.mxu0 0.0
      %1031 = vmatpush1.msra.mxu0 0.0
      %1032 = vmatprep.subr.mxu0 0.0
      %1033 = vmatpush1.msra.mxu0 0.0
      %1034 = vmatprep.subr.mxu0 0.0
      %1035 = vmatpush1.msra.mxu0 0.0
      %1036 = vmatprep.subr.mxu0 0.0
      %1037 = vmatpush1.msra.mxu0 0.0
      %1038 = vmatprep.subr.mxu0 0.0
      %1039 = vmatpush1.msra.mxu0 0.0
      %1040 = vmatprep.subr.mxu0 0.0
      %1041 = vmatpush1.msra.mxu0 0.0
      %1042 = vmatprep.subr.mxu0 0.0
      %1043 = vmatpush1.msra.mxu0 0.0
      %1044 = vmatprep.subr.mxu0 0.0
      %1045 = vmatpush1.msra.mxu0 0.0
      %1046 = vmatprep.subr.mxu0 0.0
      %1047 = vmatpush1.msra.mxu0 0.0
      %1048 = vmatprep.subr.mxu0 0.0
      %1049 = vmatpush1.msra.mxu0 0.0
      %1050 = vmatprep.mubr.f32.mxu0 0.0
      %1051 = vmatmul.mubr.f32.gmra.mrb[0].mxu0 %v913
      %v1052 = vpop.f32.mrb[0].mxu0
      %v1053 = vadd.f32 %v903, %v1052
      %v1054 = vpop.f32.mrb[0].mxu0
      %v1055 = vadd.f32 %v907, %v1054
      %1056 = vdwg.mxu0
      %v1057 = vmax.f32 %v982, 0.0
      %v1058 = vmax.f32 %v984, 0.0
      %v1059 = vmax.f32 %v1053, 0.0
      %v1060 = vmax.f32 %v1055, 0.0
      %v1061 = vld [vmem:[#allocation9] sm:$0xff]
      %v1062 = vld [vmem:[#allocation9 + $0x8] sm:$0xff]
      %v1063 = vld [vmem:[#allocation9 + $0x10] sm:$0xff]
      %v1064 = vld [vmem:[#allocation9 + $0x18] sm:$0xff]
      %v1065 = vld [vmem:[#allocation9 + $0x20] sm:$0xff]
      %v1066 = vld [vmem:[#allocation9 + $0x28] sm:$0xff]
      %v1067 = vld [vmem:[#allocation9 + $0x30] sm:$0xff]
      %v1068 = vld [vmem:[#allocation9 + $0x38] sm:$0xff]
      %v1069 = vld [vmem:[#allocation9 + $0x40] sm:$0xff]
      %v1070 = vld [vmem:[#allocation9 + $0x48] sm:$0xff]
      %v1071 = vld [vmem:[#allocation9 + $0x50] sm:$0xff]
      %v1072 = vld [vmem:[#allocation9 + $0x58] sm:$0xff]
      %v1073 = vld [vmem:[#allocation9 + $0x60] sm:$0xff]
      %v1074 = vld [vmem:[#allocation9 + $0x68] sm:$0xff]
      %v1075 = vld [vmem:[#allocation9 + $0x70] sm:$0xff]
      %v1076 = vld [vmem:[#allocation9 + $0x78] sm:$0xff]
      %v1077 = vld [vmem:[#allocation9 + $0x80] sm:$0xff]
      %v1078 = vld [vmem:[#allocation9 + $0x88] sm:$0xff]
      %v1079 = vld [vmem:[#allocation9 + $0x90] sm:$0xff]
      %v1080 = vld [vmem:[#allocation9 + $0x98] sm:$0xff]
      %v1081 = vld [vmem:[#allocation9 + $0xa0] sm:$0xff]
      %v1082 = vld [vmem:[#allocation9 + $0xa8] sm:$0xff]
      %v1083 = vld [vmem:[#allocation9 + $0xb0] sm:$0xff]
      %v1084 = vld [vmem:[#allocation9 + $0xb8] sm:$0xff]
      %v1085 = vld [vmem:[#allocation9 + $0xc0] sm:$0xff]
      %v1086 = vld [vmem:[#allocation9 + $0xc8] sm:$0xff]
      %v1087 = vld [vmem:[#allocation9 + $0xd0] sm:$0xff]
      %v1088 = vld [vmem:[#allocation9 + $0xd8] sm:$0xff]
      %v1089 = vld [vmem:[#allocation9 + $0xe0] sm:$0xff]
      %v1090 = vld [vmem:[#allocation9 + $0xe8] sm:$0xff]
      %v1091 = vld [vmem:[#allocation9 + $0xf0] sm:$0xff]
      %v1092 = vld [vmem:[#allocation9 + $0xf8] sm:$0xff]
      %v1093 = vld [vmem:[#allocation9 + $0x100] sm:$0xff]
      %v1094 = vld [vmem:[#allocation9 + $0x108] sm:$0xff]
      %v1095 = vld [vmem:[#allocation9 + $0x110] sm:$0xff]
      %v1096 = vld [vmem:[#allocation9 + $0x118] sm:$0xff]
      %v1097 = vld [vmem:[#allocation9 + $0x120] sm:$0xff]
      %v1098 = vld [vmem:[#allocation9 + $0x128] sm:$0xff]
      %v1099 = vld [vmem:[#allocation9 + $0x130] sm:$0xff]
      %v1100 = vld [vmem:[#allocation9 + $0x138] sm:$0xff]
      %v1101 = vld [vmem:[#allocation9 + $0x140] sm:$0xff]
      %v1102 = vld [vmem:[#allocation9 + $0x148] sm:$0xff]
      %v1103 = vld [vmem:[#allocation9 + $0x150] sm:$0xff]
      %v1104 = vld [vmem:[#allocation9 + $0x158] sm:$0xff]
      %v1105 = vld [vmem:[#allocation9 + $0x160] sm:$0xff]
      %v1106 = vld [vmem:[#allocation9 + $0x168] sm:$0xff]
      %v1107 = vld [vmem:[#allocation9 + $0x170] sm:$0xff]
      %v1108 = vld [vmem:[#allocation9 + $0x178] sm:$0xff]
      %v1109 = vld [vmem:[#allocation9 + $0x180] sm:$0xff]
      %v1110 = vld [vmem:[#allocation9 + $0x188] sm:$0xff]
      %v1111 = vld [vmem:[#allocation9 + $0x190] sm:$0xff]
      %v1112 = vld [vmem:[#allocation9 + $0x198] sm:$0xff]
      %v1113 = vld [vmem:[#allocation9 + $0x1a0] sm:$0xff]
      %v1114 = vld [vmem:[#allocation9 + $0x1a8] sm:$0xff]
      %v1115 = vld [vmem:[#allocation9 + $0x1b0] sm:$0xff]
      %v1116 = vld [vmem:[#allocation9 + $0x1b8] sm:$0xff]
      %v1117 = vld [vmem:[#allocation9 + $0x1c0] sm:$0xff]
      %v1118 = vld [vmem:[#allocation9 + $0x1c8] sm:$0xff]
      %v1119 = vld [vmem:[#allocation9 + $0x1d0] sm:$0xff]
      %v1120 = vld [vmem:[#allocation9 + $0x1d8] sm:$0xff]
      %v1121 = vld [vmem:[#allocation9 + $0x1e0] sm:$0xff]
      %v1122 = vld [vmem:[#allocation9 + $0x1e8] sm:$0xff]
      %v1123 = vld [vmem:[#allocation9 + $0x1f0] sm:$0xff]
      %v1124 = vld [vmem:[#allocation9 + $0x1f8] sm:$0xff]
      %v1125 = vld [vmem:[#allocation9 + $0x200] sm:$0xff]
      %v1126 = vld [vmem:[#allocation9 + $0x208] sm:$0xff]
      %v1127 = vld [vmem:[#allocation9 + $0x210] sm:$0xff]
      %v1128 = vld [vmem:[#allocation9 + $0x218] sm:$0xff]
      %v1129 = vld [vmem:[#allocation9 + $0x220] sm:$0xff]
      %v1130 = vld [vmem:[#allocation9 + $0x228] sm:$0xff]
      %v1131 = vld [vmem:[#allocation9 + $0x230] sm:$0xff]
      %v1132 = vld [vmem:[#allocation9 + $0x238] sm:$0xff]
      %v1133 = vld [vmem:[#allocation9 + $0x240] sm:$0xff]
      %v1134 = vld [vmem:[#allocation9 + $0x248] sm:$0xff]
      %v1135 = vld [vmem:[#allocation9 + $0x250] sm:$0xff]
      %v1136 = vld [vmem:[#allocation9 + $0x258] sm:$0xff]
      %v1137 = vld [vmem:[#allocation9 + $0x260] sm:$0xff]
      %v1138 = vld [vmem:[#allocation9 + $0x268] sm:$0xff]
      %v1139 = vld [vmem:[#allocation9 + $0x270] sm:$0xff]
      %v1140 = vld [vmem:[#allocation9 + $0x278] sm:$0xff]
      %v1141 = vld [vmem:[#allocation9 + $0x280] sm:$0xff]
      %v1142 = vld [vmem:[#allocation9 + $0x288] sm:$0xff]
      %v1143 = vld [vmem:[#allocation9 + $0x290] sm:$0xff]
      %v1144 = vld [vmem:[#allocation9 + $0x298] sm:$0xff]
      %v1145 = vld [vmem:[#allocation9 + $0x2a0] sm:$0xff]
      %v1146 = vld [vmem:[#allocation9 + $0x2a8] sm:$0xff]
      %v1147 = vld [vmem:[#allocation9 + $0x2b0] sm:$0xff]
      %v1148 = vld [vmem:[#allocation9 + $0x2b8] sm:$0xff]
      %v1149 = vld [vmem:[#allocation9 + $0x2c0] sm:$0xff]
      %v1150 = vld [vmem:[#allocation9 + $0x2c8] sm:$0xff]
      %v1151 = vld [vmem:[#allocation9 + $0x2d0] sm:$0xff]
      %v1152 = vld [vmem:[#allocation9 + $0x2d8] sm:$0xff]
      %v1153 = vld [vmem:[#allocation9 + $0x2e0] sm:$0xff]
      %v1154 = vld [vmem:[#allocation9 + $0x2e8] sm:$0xff]
      %v1155 = vld [vmem:[#allocation9 + $0x2f0] sm:$0xff]
      %v1156 = vld [vmem:[#allocation9 + $0x2f8] sm:$0xff]
      %v1157 = vld [vmem:[#allocation9 + $0x300] sm:$0xff]
      %v1158 = vld [vmem:[#allocation9 + $0x308] sm:$0xff]
      %v1159 = vld [vmem:[#allocation9 + $0x310] sm:$0xff]
      %v1160 = vld [vmem:[#allocation9 + $0x318] sm:$0xff]
      %v1161 = vld [vmem:[#allocation9 + $0x320] sm:$0xff]
      %v1162 = vld [vmem:[#allocation9 + $0x328] sm:$0xff]
      %v1163 = vld [vmem:[#allocation9 + $0x330] sm:$0xff]
      %v1164 = vld [vmem:[#allocation9 + $0x338] sm:$0xff]
      %v1165 = vld [vmem:[#allocation9 + $0x340] sm:$0xff]
      %v1166 = vld [vmem:[#allocation9 + $0x348] sm:$0xff]
      %v1167 = vld [vmem:[#allocation9 + $0x350] sm:$0xff]
      %v1168 = vld [vmem:[#allocation9 + $0x358] sm:$0xff]
      %v1169 = vld [vmem:[#allocation9 + $0x360] sm:$0xff]
      %v1170 = vld [vmem:[#allocation9 + $0x368] sm:$0xff]
      %v1171 = vld [vmem:[#allocation9 + $0x370] sm:$0xff]
      %v1172 = vld [vmem:[#allocation9 + $0x378] sm:$0xff]
      %v1173 = vld [vmem:[#allocation9 + $0x380] sm:$0xff]
      %v1174 = vld [vmem:[#allocation9 + $0x388] sm:$0xff]
      %v1175 = vld [vmem:[#allocation9 + $0x390] sm:$0xff]
      %v1176 = vld [vmem:[#allocation9 + $0x398] sm:$0xff]
      %v1177 = vld [vmem:[#allocation9 + $0x3a0] sm:$0xff]
      %v1178 = vld [vmem:[#allocation9 + $0x3a8] sm:$0xff]
      %v1179 = vld [vmem:[#allocation9 + $0x3b0] sm:$0xff]
      %v1180 = vld [vmem:[#allocation9 + $0x3b8] sm:$0xff]
      %v1181 = vld [vmem:[#allocation9 + $0x3c0] sm:$0xff]
      %v1182 = vld [vmem:[#allocation9 + $0x3c8] sm:$0xff]
      %v1183 = vld [vmem:[#allocation9 + $0x3d0] sm:$0xff]
      %v1184 = vld [vmem:[#allocation9 + $0x3d8] sm:$0xff]
      %v1185 = vld [vmem:[#allocation9 + $0x3e0] sm:$0xff]
      %v1186 = vld [vmem:[#allocation9 + $0x3e8] sm:$0xff]
      %v1187 = vld [vmem:[#allocation9 + $0x3f0] sm:$0xff]
      %v1188 = vld [vmem:[#allocation9 + $0x3f8] sm:$0xff]
      %v1189 = vld [vmem:[#allocation9 + $0x400] sm:$0xff]
      %v1190 = vld [vmem:[#allocation9 + $0x408] sm:$0xff]
      %v1191 = vld [vmem:[#allocation9 + $0x410] sm:$0xff]
      %v1192 = vld [vmem:[#allocation9 + $0x418] sm:$0xff]
      %v1193 = vld [vmem:[#allocation9 + $0x420] sm:$0xff]
      %v1194 = vld [vmem:[#allocation9 + $0x428] sm:$0xff]
      %v1195 = vld [vmem:[#allocation9 + $0x430] sm:$0xff]
      %v1196 = vld [vmem:[#allocation9 + $0x438] sm:$0xff]
      %v1197 = vld [vmem:[#allocation9 + $0x440] sm:$0xff]
      %v1198 = vld [vmem:[#allocation9 + $0x448] sm:$0xff]
      %v1199 = vld [vmem:[#allocation9 + $0x450] sm:$0xff]
      %v1200 = vld [vmem:[#allocation9 + $0x458] sm:$0xff]
      %v1201 = vld [vmem:[#allocation9 + $0x460] sm:$0xff]
      %v1202 = vld [vmem:[#allocation9 + $0x468] sm:$0xff]
      %v1203 = vld [vmem:[#allocation9 + $0x470] sm:$0xff]
      %v1204 = vld [vmem:[#allocation9 + $0x478] sm:$0xff]
      %v1205 = vld [vmem:[#allocation9 + $0x480] sm:$0xff]
      %v1206 = vld [vmem:[#allocation9 + $0x488] sm:$0xff]
      %v1207 = vld [vmem:[#allocation9 + $0x490] sm:$0xff]
      %v1208 = vld [vmem:[#allocation9 + $0x498] sm:$0xff]
      %v1209 = vld [vmem:[#allocation9 + $0x4a0] sm:$0xff]
      %v1210 = vld [vmem:[#allocation9 + $0x4a8] sm:$0xff]
      %v1211 = vld [vmem:[#allocation9 + $0x4b0] sm:$0xff]
      %v1212 = vld [vmem:[#allocation9 + $0x4b8] sm:$0xff]
      %v1213 = vld [vmem:[#allocation9 + $0x4c0] sm:$0xff]
      %v1214 = vld [vmem:[#allocation9 + $0x4c8] sm:$0xff]
      %v1215 = vld [vmem:[#allocation9 + $0x4d0] sm:$0xff]
      %v1216 = vld [vmem:[#allocation9 + $0x4d8] sm:$0xff]
      %v1217 = vld [vmem:[#allocation9 + $0x4e0] sm:$0xff]
      %v1218 = vld [vmem:[#allocation9 + $0x4e8] sm:$0xff]
      %v1219 = vld [vmem:[#allocation9 + $0x4f0] sm:$0xff]
      %v1220 = vld [vmem:[#allocation9 + $0x4f8] sm:$0xff]
      %v1221 = vld [vmem:[#allocation9 + $0x500] sm:$0xff]
      %v1222 = vld [vmem:[#allocation9 + $0x508] sm:$0xff]
      %v1223 = vld [vmem:[#allocation9 + $0x510] sm:$0xff]
      %v1224 = vld [vmem:[#allocation9 + $0x518] sm:$0xff]
      %v1225 = vld [vmem:[#allocation9 + $0x520] sm:$0xff]
      %v1226 = vld [vmem:[#allocation9 + $0x528] sm:$0xff]
      %v1227 = vld [vmem:[#allocation9 + $0x530] sm:$0xff]
      %v1228 = vld [vmem:[#allocation9 + $0x538] sm:$0xff]
      %v1229 = vld [vmem:[#allocation9 + $0x540] sm:$0xff]
      %v1230 = vld [vmem:[#allocation9 + $0x548] sm:$0xff]
      %v1231 = vld [vmem:[#allocation9 + $0x550] sm:$0xff]
      %v1232 = vld [vmem:[#allocation9 + $0x558] sm:$0xff]
      %v1233 = vld [vmem:[#allocation9 + $0x560] sm:$0xff]
      %v1234 = vld [vmem:[#allocation9 + $0x568] sm:$0xff]
      %v1235 = vld [vmem:[#allocation9 + $0x570] sm:$0xff]
      %v1236 = vld [vmem:[#allocation9 + $0x578] sm:$0xff]
      %v1237 = vld [vmem:[#allocation9 + $0x580] sm:$0xff]
      %v1238 = vld [vmem:[#allocation9 + $0x588] sm:$0xff]
      %v1239 = vld [vmem:[#allocation9 + $0x590] sm:$0xff]
      %v1240 = vld [vmem:[#allocation9 + $0x598] sm:$0xff]
      %v1241 = vld [vmem:[#allocation9 + $0x5a0] sm:$0xff]
      %v1242 = vld [vmem:[#allocation9 + $0x5a8] sm:$0xff]
      %v1243 = vld [vmem:[#allocation9 + $0x5b0] sm:$0xff]
      %v1244 = vld [vmem:[#allocation9 + $0x5b8] sm:$0xff]
      %v1245 = vld [vmem:[#allocation9 + $0x5c0] sm:$0xff]
      %v1246 = vld [vmem:[#allocation9 + $0x5c8] sm:$0xff]
      %v1247 = vld [vmem:[#allocation9 + $0x5d0] sm:$0xff]
      %v1248 = vld [vmem:[#allocation9 + $0x5d8] sm:$0xff]
      %v1249 = vld [vmem:[#allocation9 + $0x5e0] sm:$0xff]
      %v1250 = vld [vmem:[#allocation9 + $0x5e8] sm:$0xff]
      %v1251 = vld [vmem:[#allocation9 + $0x5f0] sm:$0xff]
      %v1252 = vld [vmem:[#allocation9 + $0x5f8] sm:$0xff]
      %v1253 = vld [vmem:[#allocation9 + $0x600] sm:$0xff]
      %v1254 = vld [vmem:[#allocation9 + $0x608] sm:$0xff]
      %v1255 = vld [vmem:[#allocation9 + $0x610] sm:$0xff]
      %v1256 = vld [vmem:[#allocation9 + $0x618] sm:$0xff]
      %v1257 = vld [vmem:[#allocation9 + $0x620] sm:$0xff]
      %v1258 = vld [vmem:[#allocation9 + $0x628] sm:$0xff]
      %v1259 = vld [vmem:[#allocation9 + $0x630] sm:$0xff]
      %v1260 = vld [vmem:[#allocation9 + $0x638] sm:$0xff]
      %v1261 = vld [vmem:[#allocation9 + $0x640] sm:$0xff]
      %v1262 = vld [vmem:[#allocation9 + $0x648] sm:$0xff]
      %v1263 = vld [vmem:[#allocation9 + $0x650] sm:$0xff]
      %v1264 = vld [vmem:[#allocation9 + $0x658] sm:$0xff]
      %v1265 = vld [vmem:[#allocation9 + $0x660] sm:$0xff]
      %v1266 = vld [vmem:[#allocation9 + $0x668] sm:$0xff]
      %v1267 = vld [vmem:[#allocation9 + $0x670] sm:$0xff]
      %v1268 = vld [vmem:[#allocation9 + $0x678] sm:$0xff]
      %v1269 = vld [vmem:[#allocation9 + $0x680] sm:$0xff]
      %v1270 = vld [vmem:[#allocation9 + $0x688] sm:$0xff]
      %v1271 = vld [vmem:[#allocation9 + $0x690] sm:$0xff]
      %v1272 = vld [vmem:[#allocation9 + $0x698] sm:$0xff]
      %v1273 = vld [vmem:[#allocation9 + $0x6a0] sm:$0xff]
      %v1274 = vld [vmem:[#allocation9 + $0x6a8] sm:$0xff]
      %v1275 = vld [vmem:[#allocation9 + $0x6b0] sm:$0xff]
      %v1276 = vld [vmem:[#allocation9 + $0x6b8] sm:$0xff]
      %v1277 = vld [vmem:[#allocation9 + $0x6c0] sm:$0xff]
      %v1278 = vld [vmem:[#allocation9 + $0x6c8] sm:$0xff]
      %v1279 = vld [vmem:[#allocation9 + $0x6d0] sm:$0xff]
      %v1280 = vld [vmem:[#allocation9 + $0x6d8] sm:$0xff]
      %v1281 = vld [vmem:[#allocation9 + $0x6e0] sm:$0xff]
      %v1282 = vld [vmem:[#allocation9 + $0x6e8] sm:$0xff]
      %v1283 = vld [vmem:[#allocation9 + $0x6f0] sm:$0xff]
      %v1284 = vld [vmem:[#allocation9 + $0x6f8] sm:$0xff]
      %v1285 = vld [vmem:[#allocation9 + $0x700] sm:$0xff]
      %v1286 = vld [vmem:[#allocation9 + $0x708] sm:$0xff]
      %v1287 = vld [vmem:[#allocation9 + $0x710] sm:$0xff]
      %v1288 = vld [vmem:[#allocation9 + $0x718] sm:$0xff]
      %v1289 = vld [vmem:[#allocation9 + $0x720] sm:$0xff]
      %v1290 = vld [vmem:[#allocation9 + $0x728] sm:$0xff]
      %v1291 = vld [vmem:[#allocation9 + $0x730] sm:$0xff]
      %v1292 = vld [vmem:[#allocation9 + $0x738] sm:$0xff]
      %v1293 = vld [vmem:[#allocation9 + $0x740] sm:$0xff]
      %v1294 = vld [vmem:[#allocation9 + $0x748] sm:$0xff]
      %v1295 = vld [vmem:[#allocation9 + $0x750] sm:$0xff]
      %v1296 = vld [vmem:[#allocation9 + $0x758] sm:$0xff]
      %v1297 = vld [vmem:[#allocation9 + $0x760] sm:$0xff]
      %v1298 = vld [vmem:[#allocation9 + $0x768] sm:$0xff]
      %v1299 = vld [vmem:[#allocation9 + $0x770] sm:$0xff]
      %v1300 = vld [vmem:[#allocation9 + $0x778] sm:$0xff]
      %v1301 = vld [vmem:[#allocation9 + $0x780] sm:$0xff]
      %v1302 = vld [vmem:[#allocation9 + $0x788] sm:$0xff]
      %v1303 = vld [vmem:[#allocation9 + $0x790] sm:$0xff]
      %v1304 = vld [vmem:[#allocation9 + $0x798] sm:$0xff]
      %v1305 = vld [vmem:[#allocation9 + $0x7a0] sm:$0xff]
      %v1306 = vld [vmem:[#allocation9 + $0x7a8] sm:$0xff]
      %v1307 = vld [vmem:[#allocation9 + $0x7b0] sm:$0xff]
      %v1308 = vld [vmem:[#allocation9 + $0x7b8] sm:$0xff]
      %v1309 = vld [vmem:[#allocation9 + $0x7c0] sm:$0xff]
      %v1310 = vld [vmem:[#allocation9 + $0x7c8] sm:$0xff]
      %v1311 = vld [vmem:[#allocation9 + $0x7d0] sm:$0xff]
      %v1312 = vld [vmem:[#allocation9 + $0x7d8] sm:$0xff]
      %v1313 = vld [vmem:[#allocation9 + $0x7e0] sm:$0xff]
      %v1314 = vld [vmem:[#allocation9 + $0x7e8] sm:$0xff]
      %v1315 = vld [vmem:[#allocation9 + $0x7f0] sm:$0xff]
      %v1316 = vld [vmem:[#allocation9 + $0x7f8] sm:$0xff]
      %v1317 = vld [vmem:[#allocation11] sm:$0xf]
      %v1319 = vlaneseq
      %v1320 = vshrl.u32 %v1319, 7
      %v1321 = vsub.s32 0, %v1320
      %v1322 = vrot.slane %v1317, %v1321
      %v1323 = vlaneseq
      %v1324 = vshrl.u32 %v1323, 7
      %v1325 = vsub.s32 1, %v1324
      %v1326 = vrot.slane %v1317, %v1325
      %v1327 = vlaneseq
      %v1328 = vshrl.u32 %v1327, 7
      %v1329 = vsub.s32 2, %v1328
      %v1330 = vrot.slane %v1317, %v1329
      %v1331 = vlaneseq
      %v1332 = vshrl.u32 %v1331, 7
      %v1333 = vsub.s32 3, %v1332
      %v1334 = vrot.slane %v1317, %v1333
      %1339 = vmatprep.subr.mxu0 %v1062
      %1340 = vmatpush1.msra.mxu0 %v1061
      %1341 = vmatprep.subr.mxu0 %v1066
      %1342 = vmatpush1.msra.mxu0 %v1065
      %1343 = vmatprep.subr.mxu0 %v1070
      %1344 = vmatpush1.msra.mxu0 %v1069
      %1345 = vmatprep.subr.mxu0 %v1074
      %1346 = vmatpush1.msra.mxu0 %v1073
      %1347 = vmatprep.subr.mxu0 %v1078
      %1348 = vmatpush1.msra.mxu0 %v1077
      %1349 = vmatprep.subr.mxu0 %v1082
      %1350 = vmatpush1.msra.mxu0 %v1081
      %1351 = vmatprep.subr.mxu0 %v1086
      %1352 = vmatpush1.msra.mxu0 %v1085
      %1353 = vmatprep.subr.mxu0 %v1090
      %1354 = vmatpush1.msra.mxu0 %v1089
      %1355 = vmatprep.subr.mxu0 %v1094
      %1356 = vmatpush1.msra.mxu0 %v1093
      %1357 = vmatprep.subr.mxu0 %v1098
      %1358 = vmatpush1.msra.mxu0 %v1097
      %1359 = vmatprep.subr.mxu0 %v1102
      %1360 = vmatpush1.msra.mxu0 %v1101
      %1361 = vmatprep.subr.mxu0 %v1106
      %1362 = vmatpush1.msra.mxu0 %v1105
      %1363 = vmatprep.subr.mxu0 %v1110
      %1364 = vmatpush1.msra.mxu0 %v1109
      %1365 = vmatprep.subr.mxu0 %v1114
      %1366 = vmatpush1.msra.mxu0 %v1113
      %1367 = vmatprep.subr.mxu0 %v1118
      %1368 = vmatpush1.msra.mxu0 %v1117
      %1369 = vmatprep.subr.mxu0 %v1122
      %1370 = vmatpush1.msra.mxu0 %v1121
      %1371 = vmatprep.subr.mxu0 %v1126
      %1372 = vmatpush1.msra.mxu0 %v1125
      %1373 = vmatprep.subr.mxu0 %v1130
      %1374 = vmatpush1.msra.mxu0 %v1129
      %1375 = vmatprep.subr.mxu0 %v1134
      %1376 = vmatpush1.msra.mxu0 %v1133
      %1377 = vmatprep.subr.mxu0 %v1138
      %1378 = vmatpush1.msra.mxu0 %v1137
      %1379 = vmatprep.subr.mxu0 %v1142
      %1380 = vmatpush1.msra.mxu0 %v1141
      %1381 = vmatprep.subr.mxu0 %v1146
      %1382 = vmatpush1.msra.mxu0 %v1145
      %1383 = vmatprep.subr.mxu0 %v1150
      %1384 = vmatpush1.msra.mxu0 %v1149
      %1385 = vmatprep.subr.mxu0 %v1154
      %1386 = vmatpush1.msra.mxu0 %v1153
      %1387 = vmatprep.subr.mxu0 %v1158
      %1388 = vmatpush1.msra.mxu0 %v1157
      %1389 = vmatprep.subr.mxu0 %v1162
      %1390 = vmatpush1.msra.mxu0 %v1161
      %1391 = vmatprep.subr.mxu0 %v1166
      %1392 = vmatpush1.msra.mxu0 %v1165
      %1393 = vmatprep.subr.mxu0 %v1170
      %1394 = vmatpush1.msra.mxu0 %v1169
      %1395 = vmatprep.subr.mxu0 %v1174
      %1396 = vmatpush1.msra.mxu0 %v1173
      %1397 = vmatprep.subr.mxu0 %v1178
      %1398 = vmatpush1.msra.mxu0 %v1177
      %1399 = vmatprep.subr.mxu0 %v1182
      %1400 = vmatpush1.msra.mxu0 %v1181
      %1401 = vmatprep.subr.mxu0 %v1186
      %1402 = vmatpush1.msra.mxu0 %v1185
      %1403 = vmatprep.mubr.f32.mxu0 %v1058
      %1404 = vmatmul.mubr.f32.gmra.mrb[0].mxu0 %v1057
      %v1405 = vpop.f32.mrb[0].mxu0
      %v1406 = vadd.f32 %v1322, %v1405
      %v1407 = vpop.f32.mrb[0].mxu0
      %v1408 = vadd.f32 %v1326, %v1407
      %1409 = vdwg.mxu0
      %1410 = vmatprep.subr.mxu0 %v1190
      %1411 = vmatpush1.msra.mxu0 %v1189
      %1412 = vmatprep.subr.mxu0 %v1194
      %1413 = vmatpush1.msra.mxu0 %v1193
      %1414 = vmatprep.subr.mxu0 %v1198
      %1415 = vmatpush1.msra.mxu0 %v1197
      %1416 = vmatprep.subr.mxu0 %v1202
      %1417 = vmatpush1.msra.mxu0 %v1201
      %1418 = vmatprep.subr.mxu0 %v1206
      %1419 = vmatpush1.msra.mxu0 %v1205
      %1420 = vmatprep.subr.mxu0 %v1210
      %1421 = vmatpush1.msra.mxu0 %v1209
      %1422 = vmatprep.subr.mxu0 %v1214
      %1423 = vmatpush1.msra.mxu0 %v1213
      %1424 = vmatprep.subr.mxu0 %v1218
      %1425 = vmatpush1.msra.mxu0 %v1217
      %1426 = vmatprep.subr.mxu0 %v1222
      %1427 = vmatpush1.msra.mxu0 %v1221
      %1428 = vmatprep.subr.mxu0 %v1226
      %1429 = vmatpush1.msra.mxu0 %v1225
      %1430 = vmatprep.subr.mxu0 %v1230
      %1431 = vmatpush1.msra.mxu0 %v1229
      %1432 = vmatprep.subr.mxu0 %v1234
      %1433 = vmatpush1.msra.mxu0 %v1233
      %1434 = vmatprep.subr.mxu0 %v1238
      %1435 = vmatpush1.msra.mxu0 %v1237
      %1436 = vmatprep.subr.mxu0 %v1242
      %1437 = vmatpush1.msra.mxu0 %v1241
      %1438 = vmatprep.subr.mxu0 %v1246
      %1439 = vmatpush1.msra.mxu0 %v1245
      %1440 = vmatprep.subr.mxu0 %v1250
      %1441 = vmatpush1.msra.mxu0 %v1249
      %1442 = vmatprep.subr.mxu0 %v1254
      %1443 = vmatpush1.msra.mxu0 %v1253
      %1444 = vmatprep.subr.mxu0 %v1258
      %1445 = vmatpush1.msra.mxu0 %v1257
      %1446 = vmatprep.subr.mxu0 %v1262
      %1447 = vmatpush1.msra.mxu0 %v1261
      %1448 = vmatprep.subr.mxu0 %v1266
      %1449 = vmatpush1.msra.mxu0 %v1265
      %1450 = vmatprep.subr.mxu0 %v1270
      %1451 = vmatpush1.msra.mxu0 %v1269
      %1452 = vmatprep.subr.mxu0 %v1274
      %1453 = vmatpush1.msra.mxu0 %v1273
      %1454 = vmatprep.subr.mxu0 %v1278
      %1455 = vmatpush1.msra.mxu0 %v1277
      %1456 = vmatprep.subr.mxu0 %v1282
      %1457 = vmatpush1.msra.mxu0 %v1281
      %1458 = vmatprep.subr.mxu0 %v1286
      %1459 = vmatpush1.msra.mxu0 %v1285
      %1460 = vmatprep.subr.mxu0 %v1290
      %1461 = vmatpush1.msra.mxu0 %v1289
      %1462 = vmatprep.subr.mxu0 %v1294
      %1463 = vmatpush1.msra.mxu0 %v1293
      %1464 = vmatprep.subr.mxu0 %v1298
      %1465 = vmatpush1.msra.mxu0 %v1297
      %1466 = vmatprep.subr.mxu0 %v1302
      %1467 = vmatpush1.msra.mxu0 %v1301
      %1468 = vmatprep.subr.mxu0 %v1306
      %1469 = vmatpush1.msra.mxu0 %v1305
      %1470 = vmatprep.subr.mxu0 %v1310
      %1471 = vmatpush1.msra.mxu0 %v1309
      %1472 = vmatprep.subr.mxu0 %v1314
      %1473 = vmatpush1.msra.mxu0 %v1313
      %1474 = vmatprep.mubr.f32.mxu0 %v1060
      %1475 = vmatmul.mubr.f32.gmra.mrb[0].mxu0 %v1059
      %v1476 = vpop.f32.mrb[0].mxu0
      %v1477 = vadd.f32 %v1406, %v1476
      %v1478 = vpop.f32.mrb[0].mxu0
      %v1479 = vadd.f32 %v1408, %v1478
      %1480 = vdwg.mxu0
      %1481 = vmatprep.subr.mxu0 %v1064
      %1482 = vmatpush1.msra.mxu0 %v1063
      %1483 = vmatprep.subr.mxu0 %v1068
      %1484 = vmatpush1.msra.mxu0 %v1067
      %1485 = vmatprep.subr.mxu0 %v1072
      %1486 = vmatpush1.msra.mxu0 %v1071
      %1487 = vmatprep.subr.mxu0 %v1076
      %1488 = vmatpush1.msra.mxu0 %v1075
      %1489 = vmatprep.subr.mxu0 %v1080
      %1490 = vmatpush1.msra.mxu0 %v1079
      %1491 = vmatprep.subr.mxu0 %v1084
      %1492 = vmatpush1.msra.mxu0 %v1083
      %1493 = vmatprep.subr.mxu0 %v1088
      %1494 = vmatpush1.msra.mxu0 %v1087
      %1495 = vmatprep.subr.mxu0 %v1092
      %1496 = vmatpush1.msra.mxu0 %v1091
      %1497 = vmatprep.subr.mxu0 %v1096
      %1498 = vmatpush1.msra.mxu0 %v1095
      %1499 = vmatprep.subr.mxu0 %v1100
      %1500 = vmatpush1.msra.mxu0 %v1099
      %1501 = vmatprep.subr.mxu0 %v1104
      %1502 = vmatpush1.msra.mxu0 %v1103
      %1503 = vmatprep.subr.mxu0 %v1108
      %1504 = vmatpush1.msra.mxu0 %v1107
      %1505 = vmatprep.subr.mxu0 %v1112
      %1506 = vmatpush1.msra.mxu0 %v1111
      %1507 = vmatprep.subr.mxu0 %v1116
      %1508 = vmatpush1.msra.mxu0 %v1115
      %1509 = vmatprep.subr.mxu0 %v1120
      %1510 = vmatpush1.msra.mxu0 %v1119
      %1511 = vmatprep.subr.mxu0 %v1124
      %1512 = vmatpush1.msra.mxu0 %v1123
      %1513 = vmatprep.subr.mxu0 %v1128
      %1514 = vmatpush1.msra.mxu0 %v1127
      %1515 = vmatprep.subr.mxu0 %v1132
      %1516 = vmatpush1.msra.mxu0 %v1131
      %1517 = vmatprep.subr.mxu0 %v1136
      %1518 = vmatpush1.msra.mxu0 %v1135
      %1519 = vmatprep.subr.mxu0 %v1140
      %1520 = vmatpush1.msra.mxu0 %v1139
      %1521 = vmatprep.subr.mxu0 %v1144
      %1522 = vmatpush1.msra.mxu0 %v1143
      %1523 = vmatprep.subr.mxu0 %v1148
      %1524 = vmatpush1.msra.mxu0 %v1147
      %1525 = vmatprep.subr.mxu0 %v1152
      %1526 = vmatpush1.msra.mxu0 %v1151
      %1527 = vmatprep.subr.mxu0 %v1156
      %1528 = vmatpush1.msra.mxu0 %v1155
      %1529 = vmatprep.subr.mxu0 %v1160
      %1530 = vmatpush1.msra.mxu0 %v1159
      %1531 = vmatprep.subr.mxu0 %v1164
      %1532 = vmatpush1.msra.mxu0 %v1163
      %1533 = vmatprep.subr.mxu0 %v1168
      %1534 = vmatpush1.msra.mxu0 %v1167
      %1535 = vmatprep.subr.mxu0 %v1172
      %1536 = vmatpush1.msra.mxu0 %v1171
      %1537 = vmatprep.subr.mxu0 %v1176
      %1538 = vmatpush1.msra.mxu0 %v1175
      %1539 = vmatprep.subr.mxu0 %v1180
      %1540 = vmatpush1.msra.mxu0 %v1179
      %1541 = vmatprep.subr.mxu0 %v1184
      %1542 = vmatpush1.msra.mxu0 %v1183
      %1543 = vmatprep.subr.mxu0 %v1188
      %1544 = vmatpush1.msra.mxu0 %v1187
      %1545 = vmatprep.mubr.f32.mxu0 %v1058
      %1546 = vmatmul.mubr.f32.gmra.mrb[0].mxu0 %v1057
      %v1547 = vpop.f32.mrb[0].mxu0
      %v1548 = vadd.f32 %v1330, %v1547
      %v1549 = vpop.f32.mrb[0].mxu0
      %v1550 = vadd.f32 %v1334, %v1549
      %1551 = vdwg.mxu0
      %1552 = vmatprep.subr.mxu0 %v1192
      %1553 = vmatpush1.msra.mxu0 %v1191
      %1554 = vmatprep.subr.mxu0 %v1196
      %1555 = vmatpush1.msra.mxu0 %v1195
      %1556 = vmatprep.subr.mxu0 %v1200
      %1557 = vmatpush1.msra.mxu0 %v1199
      %1558 = vmatprep.subr.mxu0 %v1204
      %1559 = vmatpush1.msra.mxu0 %v1203
      %1560 = vmatprep.subr.mxu0 %v1208
      %1561 = vmatpush1.msra.mxu0 %v1207
      %1562 = vmatprep.subr.mxu0 %v1212
      %1563 = vmatpush1.msra.mxu0 %v1211
      %1564 = vmatprep.subr.mxu0 %v1216
      %1565 = vmatpush1.msra.mxu0 %v1215
      %1566 = vmatprep.subr.mxu0 %v1220
      %1567 = vmatpush1.msra.mxu0 %v1219
      %1568 = vmatprep.subr.mxu0 %v1224
      %1569 = vmatpush1.msra.mxu0 %v1223
      %1570 = vmatprep.subr.mxu0 %v1228
      %1571 = vmatpush1.msra.mxu0 %v1227
      %1572 = vmatprep.subr.mxu0 %v1232
      %1573 = vmatpush1.msra.mxu0 %v1231
      %1574 = vmatprep.subr.mxu0 %v1236
      %1575 = vmatpush1.msra.mxu0 %v1235
      %1576 = vmatprep.subr.mxu0 %v1240
      %1577 = vmatpush1.msra.mxu0 %v1239
      %1578 = vmatprep.subr.mxu0 %v1244
      %1579 = vmatpush1.msra.mxu0 %v1243
      %1580 = vmatprep.subr.mxu0 %v1248
      %1581 = vmatpush1.msra.mxu0 %v1247
      %1582 = vmatprep.subr.mxu0 %v1252
      %1583 = vmatpush1.msra.mxu0 %v1251
      %1584 = vmatprep.subr.mxu0 %v1256
      %1585 = vmatpush1.msra.mxu0 %v1255
      %1586 = vmatprep.subr.mxu0 %v1260
      %1587 = vmatpush1.msra.mxu0 %v1259
      %1588 = vmatprep.subr.mxu0 %v1264
      %1589 = vmatpush1.msra.mxu0 %v1263
      %1590 = vmatprep.subr.mxu0 %v1268
      %1591 = vmatpush1.msra.mxu0 %v1267
      %1592 = vmatprep.subr.mxu0 %v1272
      %1593 = vmatpush1.msra.mxu0 %v1271
      %1594 = vmatprep.subr.mxu0 %v1276
      %1595 = vmatpush1.msra.mxu0 %v1275
      %1596 = vmatprep.subr.mxu0 %v1280
      %1597 = vmatpush1.msra.mxu0 %v1279
      %1598 = vmatprep.subr.mxu0 %v1284
      %1599 = vmatpush1.msra.mxu0 %v1283
      %1600 = vmatprep.subr.mxu0 %v1288
      %1601 = vmatpush1.msra.mxu0 %v1287
      %1602 = vmatprep.subr.mxu0 %v1292
      %1603 = vmatpush1.msra.mxu0 %v1291
      %1604 = vmatprep.subr.mxu0 %v1296
      %1605 = vmatpush1.msra.mxu0 %v1295
      %1606 = vmatprep.subr.mxu0 %v1300
      %1607 = vmatpush1.msra.mxu0 %v1299
      %1608 = vmatprep.subr.mxu0 %v1304
      %1609 = vmatpush1.msra.mxu0 %v1303
      %1610 = vmatprep.subr.mxu0 %v1308
      %1611 = vmatpush1.msra.mxu0 %v1307
      %1612 = vmatprep.subr.mxu0 %v1312
      %1613 = vmatpush1.msra.mxu0 %v1311
      %1614 = vmatprep.subr.mxu0 %v1316
      %1615 = vmatpush1.msra.mxu0 %v1315
      %1616 = vmatprep.mubr.f32.mxu0 %v1060
      %1617 = vmatmul.mubr.f32.gmra.mrb[0].mxu0 %v1059
      %v1618 = vpop.f32.mrb[0].mxu0
      %v1619 = vadd.f32 %v1548, %v1618
      %v1620 = vpop.f32.mrb[0].mxu0
      %v1621 = vadd.f32 %v1550, %v1620
      %1622 = vdwg.mxu0
      %v1623 = vmax.f32 %v1477, 0.0
      %v1624 = vmax.f32 %v1479, 0.0
      %v1625 = vmax.f32 %v1619, 0.0
      %v1626 = vmax.f32 %v1621, 0.0
      %v1627 = vld [vmem:[#allocation12] sm:$0xff]
      %v1628 = vld [vmem:[#allocation12 + $0x8] sm:$0xff]
      %v1629 = vld [vmem:[#allocation12 + $0x10] sm:$0xff]
      %v1630 = vld [vmem:[#allocation12 + $0x18] sm:$0xff]
      %v1631 = vld [vmem:[#allocation12 + $0x20] sm:$0xff]
      %v1632 = vld [vmem:[#allocation12 + $0x28] sm:$0xff]
      %v1633 = vld [vmem:[#allocation12 + $0x30] sm:$0xff]
      %v1634 = vld [vmem:[#allocation12 + $0x38] sm:$0xff]
      %v1635 = vld [vmem:[#allocation12 + $0x40] sm:$0xff]
      %v1636 = vld [vmem:[#allocation12 + $0x48] sm:$0xff]
      %v1637 = vld [vmem:[#allocation12 + $0x50] sm:$0xff]
      %v1638 = vld [vmem:[#allocation12 + $0x58] sm:$0xff]
      %v1639 = vld [vmem:[#allocation12 + $0x60] sm:$0xff]
      %v1640 = vld [vmem:[#allocation12 + $0x68] sm:$0xff]
      %v1641 = vld [vmem:[#allocation12 + $0x70] sm:$0xff]
      %v1642 = vld [vmem:[#allocation12 + $0x78] sm:$0xff]
      %v1643 = vld [vmem:[#allocation12 + $0x80] sm:$0xff]
      %v1644 = vld [vmem:[#allocation12 + $0x88] sm:$0xff]
      %v1645 = vld [vmem:[#allocation12 + $0x90] sm:$0xff]
      %v1646 = vld [vmem:[#allocation12 + $0x98] sm:$0xff]
      %v1647 = vld [vmem:[#allocation12 + $0xa0] sm:$0xff]
      %v1648 = vld [vmem:[#allocation12 + $0xa8] sm:$0xff]
      %v1649 = vld [vmem:[#allocation12 + $0xb0] sm:$0xff]
      %v1650 = vld [vmem:[#allocation12 + $0xb8] sm:$0xff]
      %v1651 = vld [vmem:[#allocation12 + $0xc0] sm:$0xff]
      %v1652 = vld [vmem:[#allocation12 + $0xc8] sm:$0xff]
      %v1653 = vld [vmem:[#allocation12 + $0xd0] sm:$0xff]
      %v1654 = vld [vmem:[#allocation12 + $0xd8] sm:$0xff]
      %v1655 = vld [vmem:[#allocation12 + $0xe0] sm:$0xff]
      %v1656 = vld [vmem:[#allocation12 + $0xe8] sm:$0xff]
      %v1657 = vld [vmem:[#allocation12 + $0xf0] sm:$0xff]
      %v1658 = vld [vmem:[#allocation12 + $0xf8] sm:$0xff]
      %v1659 = vld [vmem:[#allocation12 + $0x100] sm:$0xff]
      %v1660 = vld [vmem:[#allocation12 + $0x108] sm:$0xff]
      %v1661 = vld [vmem:[#allocation12 + $0x110] sm:$0xff]
      %v1662 = vld [vmem:[#allocation12 + $0x118] sm:$0xff]
      %v1663 = vld [vmem:[#allocation12 + $0x120] sm:$0xff]
      %v1664 = vld [vmem:[#allocation12 + $0x128] sm:$0xff]
      %v1665 = vld [vmem:[#allocation12 + $0x130] sm:$0xff]
      %v1666 = vld [vmem:[#allocation12 + $0x138] sm:$0xff]
      %v1667 = vld [vmem:[#allocation12 + $0x140] sm:$0xff]
      %v1668 = vld [vmem:[#allocation12 + $0x148] sm:$0xff]
      %v1669 = vld [vmem:[#allocation12 + $0x150] sm:$0xff]
      %v1670 = vld [vmem:[#allocation12 + $0x158] sm:$0xff]
      %v1671 = vld [vmem:[#allocation12 + $0x160] sm:$0xff]
      %v1672 = vld [vmem:[#allocation12 + $0x168] sm:$0xff]
      %v1673 = vld [vmem:[#allocation12 + $0x170] sm:$0xff]
      %v1674 = vld [vmem:[#allocation12 + $0x178] sm:$0xff]
      %v1675 = vld [vmem:[#allocation12 + $0x180] sm:$0xff]
      %v1676 = vld [vmem:[#allocation12 + $0x188] sm:$0xff]
      %v1677 = vld [vmem:[#allocation12 + $0x190] sm:$0xff]
      %v1678 = vld [vmem:[#allocation12 + $0x198] sm:$0xff]
      %v1679 = vld [vmem:[#allocation12 + $0x1a0] sm:$0xff]
      %v1680 = vld [vmem:[#allocation12 + $0x1a8] sm:$0xff]
      %v1681 = vld [vmem:[#allocation12 + $0x1b0] sm:$0xff]
      %v1682 = vld [vmem:[#allocation12 + $0x1b8] sm:$0xff]
      %v1683 = vld [vmem:[#allocation12 + $0x1c0] sm:$0xff]
      %v1684 = vld [vmem:[#allocation12 + $0x1c8] sm:$0xff]
      %v1685 = vld [vmem:[#allocation12 + $0x1d0] sm:$0xff]
      %v1686 = vld [vmem:[#allocation12 + $0x1d8] sm:$0xff]
      %v1687 = vld [vmem:[#allocation12 + $0x1e0] sm:$0xff]
      %v1688 = vld [vmem:[#allocation12 + $0x1e8] sm:$0xff]
      %v1689 = vld [vmem:[#allocation12 + $0x1f0] sm:$0xff]
      %v1690 = vld [vmem:[#allocation12 + $0x1f8] sm:$0xff]
      %v1691 = vld [vmem:[#allocation12 + $0x200] sm:$0xff]
      %v1692 = vld [vmem:[#allocation12 + $0x208] sm:$0xff]
      %v1693 = vld [vmem:[#allocation12 + $0x210] sm:$0xff]
      %v1694 = vld [vmem:[#allocation12 + $0x218] sm:$0xff]
      %v1695 = vld [vmem:[#allocation12 + $0x220] sm:$0xff]
      %v1696 = vld [vmem:[#allocation12 + $0x228] sm:$0xff]
      %v1697 = vld [vmem:[#allocation12 + $0x230] sm:$0xff]
      %v1698 = vld [vmem:[#allocation12 + $0x238] sm:$0xff]
      %v1699 = vld [vmem:[#allocation12 + $0x240] sm:$0xff]
      %v1700 = vld [vmem:[#allocation12 + $0x248] sm:$0xff]
      %v1701 = vld [vmem:[#allocation12 + $0x250] sm:$0xff]
      %v1702 = vld [vmem:[#allocation12 + $0x258] sm:$0xff]
      %v1703 = vld [vmem:[#allocation12 + $0x260] sm:$0xff]
      %v1704 = vld [vmem:[#allocation12 + $0x268] sm:$0xff]
      %v1705 = vld [vmem:[#allocation12 + $0x270] sm:$0xff]
      %v1706 = vld [vmem:[#allocation12 + $0x278] sm:$0xff]
      %v1707 = vld [vmem:[#allocation12 + $0x280] sm:$0xff]
      %v1708 = vld [vmem:[#allocation12 + $0x288] sm:$0xff]
      %v1709 = vld [vmem:[#allocation12 + $0x290] sm:$0xff]
      %v1710 = vld [vmem:[#allocation12 + $0x298] sm:$0xff]
      %v1711 = vld [vmem:[#allocation12 + $0x2a0] sm:$0xff]
      %v1712 = vld [vmem:[#allocation12 + $0x2a8] sm:$0xff]
      %v1713 = vld [vmem:[#allocation12 + $0x2b0] sm:$0xff]
      %v1714 = vld [vmem:[#allocation12 + $0x2b8] sm:$0xff]
      %v1715 = vld [vmem:[#allocation12 + $0x2c0] sm:$0xff]
      %v1716 = vld [vmem:[#allocation12 + $0x2c8] sm:$0xff]
      %v1717 = vld [vmem:[#allocation12 + $0x2d0] sm:$0xff]
      %v1718 = vld [vmem:[#allocation12 + $0x2d8] sm:$0xff]
      %v1719 = vld [vmem:[#allocation12 + $0x2e0] sm:$0xff]
      %v1720 = vld [vmem:[#allocation12 + $0x2e8] sm:$0xff]
      %v1721 = vld [vmem:[#allocation12 + $0x2f0] sm:$0xff]
      %v1722 = vld [vmem:[#allocation12 + $0x2f8] sm:$0xff]
      %v1723 = vld [vmem:[#allocation12 + $0x300] sm:$0xff]
      %v1724 = vld [vmem:[#allocation12 + $0x308] sm:$0xff]
      %v1725 = vld [vmem:[#allocation12 + $0x310] sm:$0xff]
      %v1726 = vld [vmem:[#allocation12 + $0x318] sm:$0xff]
      %v1727 = vld [vmem:[#allocation12 + $0x320] sm:$0xff]
      %v1728 = vld [vmem:[#allocation12 + $0x328] sm:$0xff]
      %v1729 = vld [vmem:[#allocation12 + $0x330] sm:$0xff]
      %v1730 = vld [vmem:[#allocation12 + $0x338] sm:$0xff]
      %v1731 = vld [vmem:[#allocation12 + $0x340] sm:$0xff]
      %v1732 = vld [vmem:[#allocation12 + $0x348] sm:$0xff]
      %v1733 = vld [vmem:[#allocation12 + $0x350] sm:$0xff]
      %v1734 = vld [vmem:[#allocation12 + $0x358] sm:$0xff]
      %v1735 = vld [vmem:[#allocation12 + $0x360] sm:$0xff]
      %v1736 = vld [vmem:[#allocation12 + $0x368] sm:$0xff]
      %v1737 = vld [vmem:[#allocation12 + $0x370] sm:$0xff]
      %v1738 = vld [vmem:[#allocation12 + $0x378] sm:$0xff]
      %v1739 = vld [vmem:[#allocation12 + $0x380] sm:$0xff]
      %v1740 = vld [vmem:[#allocation12 + $0x388] sm:$0xff]
      %v1741 = vld [vmem:[#allocation12 + $0x390] sm:$0xff]
      %v1742 = vld [vmem:[#allocation12 + $0x398] sm:$0xff]
      %v1743 = vld [vmem:[#allocation12 + $0x3a0] sm:$0xff]
      %v1744 = vld [vmem:[#allocation12 + $0x3a8] sm:$0xff]
      %v1745 = vld [vmem:[#allocation12 + $0x3b0] sm:$0xff]
      %v1746 = vld [vmem:[#allocation12 + $0x3b8] sm:$0xff]
      %v1747 = vld [vmem:[#allocation12 + $0x3c0] sm:$0xff]
      %v1748 = vld [vmem:[#allocation12 + $0x3c8] sm:$0xff]
      %v1749 = vld [vmem:[#allocation12 + $0x3d0] sm:$0xff]
      %v1750 = vld [vmem:[#allocation12 + $0x3d8] sm:$0xff]
      %v1751 = vld [vmem:[#allocation12 + $0x3e0] sm:$0xff]
      %v1752 = vld [vmem:[#allocation12 + $0x3e8] sm:$0xff]
      %v1753 = vld [vmem:[#allocation12 + $0x3f0] sm:$0xff]
      %v1754 = vld [vmem:[#allocation12 + $0x3f8] sm:$0xff]
      %v1755 = vld [vmem:[#allocation12 + $0x400] sm:$0xff]
      %v1756 = vld [vmem:[#allocation12 + $0x408] sm:$0xff]
      %v1757 = vld [vmem:[#allocation12 + $0x410] sm:$0xff]
      %v1758 = vld [vmem:[#allocation12 + $0x418] sm:$0xff]
      %v1759 = vld [vmem:[#allocation12 + $0x420] sm:$0xff]
      %v1760 = vld [vmem:[#allocation12 + $0x428] sm:$0xff]
      %v1761 = vld [vmem:[#allocation12 + $0x430] sm:$0xff]
      %v1762 = vld [vmem:[#allocation12 + $0x438] sm:$0xff]
      %v1763 = vld [vmem:[#allocation12 + $0x440] sm:$0xff]
      %v1764 = vld [vmem:[#allocation12 + $0x448] sm:$0xff]
      %v1765 = vld [vmem:[#allocation12 + $0x450] sm:$0xff]
      %v1766 = vld [vmem:[#allocation12 + $0x458] sm:$0xff]
      %v1767 = vld [vmem:[#allocation12 + $0x460] sm:$0xff]
      %v1768 = vld [vmem:[#allocation12 + $0x468] sm:$0xff]
      %v1769 = vld [vmem:[#allocation12 + $0x470] sm:$0xff]
      %v1770 = vld [vmem:[#allocation12 + $0x478] sm:$0xff]
      %v1771 = vld [vmem:[#allocation12 + $0x480] sm:$0xff]
      %v1772 = vld [vmem:[#allocation12 + $0x488] sm:$0xff]
      %v1773 = vld [vmem:[#allocation12 + $0x490] sm:$0xff]
      %v1774 = vld [vmem:[#allocation12 + $0x498] sm:$0xff]
      %v1775 = vld [vmem:[#allocation12 + $0x4a0] sm:$0xff]
      %v1776 = vld [vmem:[#allocation12 + $0x4a8] sm:$0xff]
      %v1777 = vld [vmem:[#allocation12 + $0x4b0] sm:$0xff]
      %v1778 = vld [vmem:[#allocation12 + $0x4b8] sm:$0xff]
      %v1779 = vld [vmem:[#allocation12 + $0x4c0] sm:$0xff]
      %v1780 = vld [vmem:[#allocation12 + $0x4c8] sm:$0xff]
      %v1781 = vld [vmem:[#allocation12 + $0x4d0] sm:$0xff]
      %v1782 = vld [vmem:[#allocation12 + $0x4d8] sm:$0xff]
      %v1783 = vld [vmem:[#allocation12 + $0x4e0] sm:$0xff]
      %v1784 = vld [vmem:[#allocation12 + $0x4e8] sm:$0xff]
      %v1785 = vld [vmem:[#allocation12 + $0x4f0] sm:$0xff]
      %v1786 = vld [vmem:[#allocation12 + $0x4f8] sm:$0xff]
      %v1787 = vld [vmem:[#allocation12 + $0x500] sm:$0xff]
      %v1788 = vld [vmem:[#allocation12 + $0x508] sm:$0xff]
      %v1789 = vld [vmem:[#allocation12 + $0x510] sm:$0xff]
      %v1790 = vld [vmem:[#allocation12 + $0x518] sm:$0xff]
      %v1791 = vld [vmem:[#allocation12 + $0x520] sm:$0xff]
      %v1792 = vld [vmem:[#allocation12 + $0x528] sm:$0xff]
      %v1793 = vld [vmem:[#allocation12 + $0x530] sm:$0xff]
      %v1794 = vld [vmem:[#allocation12 + $0x538] sm:$0xff]
      %v1795 = vld [vmem:[#allocation12 + $0x540] sm:$0xff]
      %v1796 = vld [vmem:[#allocation12 + $0x548] sm:$0xff]
      %v1797 = vld [vmem:[#allocation12 + $0x550] sm:$0xff]
      %v1798 = vld [vmem:[#allocation12 + $0x558] sm:$0xff]
      %v1799 = vld [vmem:[#allocation12 + $0x560] sm:$0xff]
      %v1800 = vld [vmem:[#allocation12 + $0x568] sm:$0xff]
      %v1801 = vld [vmem:[#allocation12 + $0x570] sm:$0xff]
      %v1802 = vld [vmem:[#allocation12 + $0x578] sm:$0xff]
      %v1803 = vld [vmem:[#allocation12 + $0x580] sm:$0xff]
      %v1804 = vld [vmem:[#allocation12 + $0x588] sm:$0xff]
      %v1805 = vld [vmem:[#allocation12 + $0x590] sm:$0xff]
      %v1806 = vld [vmem:[#allocation12 + $0x598] sm:$0xff]
      %v1807 = vld [vmem:[#allocation12 + $0x5a0] sm:$0xff]
      %v1808 = vld [vmem:[#allocation12 + $0x5a8] sm:$0xff]
      %v1809 = vld [vmem:[#allocation12 + $0x5b0] sm:$0xff]
      %v1810 = vld [vmem:[#allocation12 + $0x5b8] sm:$0xff]
      %v1811 = vld [vmem:[#allocation12 + $0x5c0] sm:$0xff]
      %v1812 = vld [vmem:[#allocation12 + $0x5c8] sm:$0xff]
      %v1813 = vld [vmem:[#allocation12 + $0x5d0] sm:$0xff]
      %v1814 = vld [vmem:[#allocation12 + $0x5d8] sm:$0xff]
      %v1815 = vld [vmem:[#allocation12 + $0x5e0] sm:$0xff]
      %v1816 = vld [vmem:[#allocation12 + $0x5e8] sm:$0xff]
      %v1817 = vld [vmem:[#allocation12 + $0x5f0] sm:$0xff]
      %v1818 = vld [vmem:[#allocation12 + $0x5f8] sm:$0xff]
      %v1819 = vld [vmem:[#allocation12 + $0x600] sm:$0xff]
      %v1820 = vld [vmem:[#allocation12 + $0x608] sm:$0xff]
      %v1821 = vld [vmem:[#allocation12 + $0x610] sm:$0xff]
      %v1822 = vld [vmem:[#allocation12 + $0x618] sm:$0xff]
      %v1823 = vld [vmem:[#allocation12 + $0x620] sm:$0xff]
      %v1824 = vld [vmem:[#allocation12 + $0x628] sm:$0xff]
      %v1825 = vld [vmem:[#allocation12 + $0x630] sm:$0xff]
      %v1826 = vld [vmem:[#allocation12 + $0x638] sm:$0xff]
      %v1827 = vld [vmem:[#allocation12 + $0x640] sm:$0xff]
      %v1828 = vld [vmem:[#allocation12 + $0x648] sm:$0xff]
      %v1829 = vld [vmem:[#allocation12 + $0x650] sm:$0xff]
      %v1830 = vld [vmem:[#allocation12 + $0x658] sm:$0xff]
      %v1831 = vld [vmem:[#allocation12 + $0x660] sm:$0xff]
      %v1832 = vld [vmem:[#allocation12 + $0x668] sm:$0xff]
      %v1833 = vld [vmem:[#allocation12 + $0x670] sm:$0xff]
      %v1834 = vld [vmem:[#allocation12 + $0x678] sm:$0xff]
      %v1835 = vld [vmem:[#allocation12 + $0x680] sm:$0xff]
      %v1836 = vld [vmem:[#allocation12 + $0x688] sm:$0xff]
      %v1837 = vld [vmem:[#allocation12 + $0x690] sm:$0xff]
      %v1838 = vld [vmem:[#allocation12 + $0x698] sm:$0xff]
      %v1839 = vld [vmem:[#allocation12 + $0x6a0] sm:$0xff]
      %v1840 = vld [vmem:[#allocation12 + $0x6a8] sm:$0xff]
      %v1841 = vld [vmem:[#allocation12 + $0x6b0] sm:$0xff]
      %v1842 = vld [vmem:[#allocation12 + $0x6b8] sm:$0xff]
      %v1843 = vld [vmem:[#allocation12 + $0x6c0] sm:$0xff]
      %v1844 = vld [vmem:[#allocation12 + $0x6c8] sm:$0xff]
      %v1845 = vld [vmem:[#allocation12 + $0x6d0] sm:$0xff]
      %v1846 = vld [vmem:[#allocation12 + $0x6d8] sm:$0xff]
      %v1847 = vld [vmem:[#allocation12 + $0x6e0] sm:$0xff]
      %v1848 = vld [vmem:[#allocation12 + $0x6e8] sm:$0xff]
      %v1849 = vld [vmem:[#allocation12 + $0x6f0] sm:$0xff]
      %v1850 = vld [vmem:[#allocation12 + $0x6f8] sm:$0xff]
      %v1851 = vld [vmem:[#allocation12 + $0x700] sm:$0xff]
      %v1852 = vld [vmem:[#allocation12 + $0x708] sm:$0xff]
      %v1853 = vld [vmem:[#allocation12 + $0x710] sm:$0xff]
      %v1854 = vld [vmem:[#allocation12 + $0x718] sm:$0xff]
      %v1855 = vld [vmem:[#allocation12 + $0x720] sm:$0xff]
      %v1856 = vld [vmem:[#allocation12 + $0x728] sm:$0xff]
      %v1857 = vld [vmem:[#allocation12 + $0x730] sm:$0xff]
      %v1858 = vld [vmem:[#allocation12 + $0x738] sm:$0xff]
      %v1859 = vld [vmem:[#allocation12 + $0x740] sm:$0xff]
      %v1860 = vld [vmem:[#allocation12 + $0x748] sm:$0xff]
      %v1861 = vld [vmem:[#allocation12 + $0x750] sm:$0xff]
      %v1862 = vld [vmem:[#allocation12 + $0x758] sm:$0xff]
      %v1863 = vld [vmem:[#allocation12 + $0x760] sm:$0xff]
      %v1864 = vld [vmem:[#allocation12 + $0x768] sm:$0xff]
      %v1865 = vld [vmem:[#allocation12 + $0x770] sm:$0xff]
      %v1866 = vld [vmem:[#allocation12 + $0x778] sm:$0xff]
      %v1867 = vld [vmem:[#allocation12 + $0x780] sm:$0xff]
      %v1868 = vld [vmem:[#allocation12 + $0x788] sm:$0xff]
      %v1869 = vld [vmem:[#allocation12 + $0x790] sm:$0xff]
      %v1870 = vld [vmem:[#allocation12 + $0x798] sm:$0xff]
      %v1871 = vld [vmem:[#allocation12 + $0x7a0] sm:$0xff]
      %v1872 = vld [vmem:[#allocation12 + $0x7a8] sm:$0xff]
      %v1873 = vld [vmem:[#allocation12 + $0x7b0] sm:$0xff]
      %v1874 = vld [vmem:[#allocation12 + $0x7b8] sm:$0xff]
      %v1875 = vld [vmem:[#allocation12 + $0x7c0] sm:$0xff]
      %v1876 = vld [vmem:[#allocation12 + $0x7c8] sm:$0xff]
      %v1877 = vld [vmem:[#allocation12 + $0x7d0] sm:$0xff]
      %v1878 = vld [vmem:[#allocation12 + $0x7d8] sm:$0xff]
      %v1879 = vld [vmem:[#allocation12 + $0x7e0] sm:$0xff]
      %v1880 = vld [vmem:[#allocation12 + $0x7e8] sm:$0xff]
      %v1881 = vld [vmem:[#allocation12 + $0x7f0] sm:$0xff]
      %v1882 = vld [vmem:[#allocation12 + $0x7f8] sm:$0xff]
      %v1883 = vld [vmem:[#allocation12 + $0x800] sm:$0xff]
      %v1884 = vld [vmem:[#allocation12 + $0x808] sm:$0xff]
      %v1885 = vld [vmem:[#allocation12 + $0x810] sm:$0xff]
      %v1886 = vld [vmem:[#allocation12 + $0x818] sm:$0xff]
      %v1887 = vld [vmem:[#allocation12 + $0x820] sm:$0xff]
      %v1888 = vld [vmem:[#allocation12 + $0x828] sm:$0xff]
      %v1889 = vld [vmem:[#allocation12 + $0x830] sm:$0xff]
      %v1890 = vld [vmem:[#allocation12 + $0x838] sm:$0xff]
      %v1891 = vld [vmem:[#allocation12 + $0x840] sm:$0xff]
      %v1892 = vld [vmem:[#allocation12 + $0x848] sm:$0xff]
      %v1893 = vld [vmem:[#allocation12 + $0x850] sm:$0xff]
      %v1894 = vld [vmem:[#allocation12 + $0x858] sm:$0xff]
      %v1895 = vld [vmem:[#allocation12 + $0x860] sm:$0xff]
      %v1896 = vld [vmem:[#allocation12 + $0x868] sm:$0xff]
      %v1897 = vld [vmem:[#allocation12 + $0x870] sm:$0xff]
      %v1898 = vld [vmem:[#allocation12 + $0x878] sm:$0xff]
      %v1899 = vld [vmem:[#allocation12 + $0x880] sm:$0xff]
      %v1900 = vld [vmem:[#allocation12 + $0x888] sm:$0xff]
      %v1901 = vld [vmem:[#allocation12 + $0x890] sm:$0xff]
      %v1902 = vld [vmem:[#allocation12 + $0x898] sm:$0xff]
      %v1903 = vld [vmem:[#allocation12 + $0x8a0] sm:$0xff]
      %v1904 = vld [vmem:[#allocation12 + $0x8a8] sm:$0xff]
      %v1905 = vld [vmem:[#allocation12 + $0x8b0] sm:$0xff]
      %v1906 = vld [vmem:[#allocation12 + $0x8b8] sm:$0xff]
      %v1907 = vld [vmem:[#allocation12 + $0x8c0] sm:$0xff]
      %v1908 = vld [vmem:[#allocation12 + $0x8c8] sm:$0xff]
      %v1909 = vld [vmem:[#allocation12 + $0x8d0] sm:$0xff]
      %v1910 = vld [vmem:[#allocation12 + $0x8d8] sm:$0xff]
      %v1911 = vld [vmem:[#allocation12 + $0x8e0] sm:$0xff]
      %v1912 = vld [vmem:[#allocation12 + $0x8e8] sm:$0xff]
      %v1913 = vld [vmem:[#allocation12 + $0x8f0] sm:$0xff]
      %v1914 = vld [vmem:[#allocation12 + $0x8f8] sm:$0xff]
      %v1915 = vld [vmem:[#allocation12 + $0x900] sm:$0xff]
      %v1916 = vld [vmem:[#allocation12 + $0x908] sm:$0xff]
      %v1917 = vld [vmem:[#allocation12 + $0x910] sm:$0xff]
      %v1918 = vld [vmem:[#allocation12 + $0x918] sm:$0xff]
      %v1919 = vld [vmem:[#allocation12 + $0x920] sm:$0xff]
      %v1920 = vld [vmem:[#allocation12 + $0x928] sm:$0xff]
      %v1921 = vld [vmem:[#allocation12 + $0x930] sm:$0xff]
      %v1922 = vld [vmem:[#allocation12 + $0x938] sm:$0xff]
      %v1923 = vld [vmem:[#allocation12 + $0x940] sm:$0xff]
      %v1924 = vld [vmem:[#allocation12 + $0x948] sm:$0xff]
      %v1925 = vld [vmem:[#allocation12 + $0x950] sm:$0xff]
      %v1926 = vld [vmem:[#allocation12 + $0x958] sm:$0xff]
      %v1927 = vld [vmem:[#allocation12 + $0x960] sm:$0xff]
      %v1928 = vld [vmem:[#allocation12 + $0x968] sm:$0xff]
      %v1929 = vld [vmem:[#allocation12 + $0x970] sm:$0xff]
      %v1930 = vld [vmem:[#allocation12 + $0x978] sm:$0xff]
      %v1931 = vld [vmem:[#allocation12 + $0x980] sm:$0xff]
      %v1932 = vld [vmem:[#allocation12 + $0x988] sm:$0xff]
      %v1933 = vld [vmem:[#allocation12 + $0x990] sm:$0xff]
      %v1934 = vld [vmem:[#allocation12 + $0x998] sm:$0xff]
      %v1935 = vld [vmem:[#allocation12 + $0x9a0] sm:$0xff]
      %v1936 = vld [vmem:[#allocation12 + $0x9a8] sm:$0xff]
      %v1937 = vld [vmem:[#allocation12 + $0x9b0] sm:$0xff]
      %v1938 = vld [vmem:[#allocation12 + $0x9b8] sm:$0xff]
      %v1939 = vld [vmem:[#allocation12 + $0x9c0] sm:$0xff]
      %v1940 = vld [vmem:[#allocation12 + $0x9c8] sm:$0xff]
      %v1941 = vld [vmem:[#allocation12 + $0x9d0] sm:$0xff]
      %v1942 = vld [vmem:[#allocation12 + $0x9d8] sm:$0xff]
      %v1943 = vld [vmem:[#allocation12 + $0x9e0] sm:$0xff]
      %v1944 = vld [vmem:[#allocation12 + $0x9e8] sm:$0xff]
      %v1945 = vld [vmem:[#allocation12 + $0x9f0] sm:$0xff]
      %v1946 = vld [vmem:[#allocation12 + $0x9f8] sm:$0xff]
      %v1947 = vld [vmem:[#allocation12 + $0xa00] sm:$0xff]
      %v1948 = vld [vmem:[#allocation12 + $0xa08] sm:$0xff]
      %v1949 = vld [vmem:[#allocation12 + $0xa10] sm:$0xff]
      %v1950 = vld [vmem:[#allocation12 + $0xa18] sm:$0xff]
      %v1951 = vld [vmem:[#allocation12 + $0xa20] sm:$0xff]
      %v1952 = vld [vmem:[#allocation12 + $0xa28] sm:$0xff]
      %v1953 = vld [vmem:[#allocation12 + $0xa30] sm:$0xff]
      %v1954 = vld [vmem:[#allocation12 + $0xa38] sm:$0xff]
      %v1955 = vld [vmem:[#allocation12 + $0xa40] sm:$0xff]
      %v1956 = vld [vmem:[#allocation12 + $0xa48] sm:$0xff]
      %v1957 = vld [vmem:[#allocation12 + $0xa50] sm:$0xff]
      %v1958 = vld [vmem:[#allocation12 + $0xa58] sm:$0xff]
      %v1959 = vld [vmem:[#allocation12 + $0xa60] sm:$0xff]
      %v1960 = vld [vmem:[#allocation12 + $0xa68] sm:$0xff]
      %v1961 = vld [vmem:[#allocation12 + $0xa70] sm:$0xff]
      %v1962 = vld [vmem:[#allocation12 + $0xa78] sm:$0xff]
      %v1963 = vld [vmem:[#allocation12 + $0xa80] sm:$0xff]
      %v1964 = vld [vmem:[#allocation12 + $0xa88] sm:$0xff]
      %v1965 = vld [vmem:[#allocation12 + $0xa90] sm:$0xff]
      %v1966 = vld [vmem:[#allocation12 + $0xa98] sm:$0xff]
      %v1967 = vld [vmem:[#allocation12 + $0xaa0] sm:$0xff]
      %v1968 = vld [vmem:[#allocation12 + $0xaa8] sm:$0xff]
      %v1969 = vld [vmem:[#allocation12 + $0xab0] sm:$0xff]
      %v1970 = vld [vmem:[#allocation12 + $0xab8] sm:$0xff]
      %v1971 = vld [vmem:[#allocation12 + $0xac0] sm:$0xff]
      %v1972 = vld [vmem:[#allocation12 + $0xac8] sm:$0xff]
      %v1973 = vld [vmem:[#allocation12 + $0xad0] sm:$0xff]
      %v1974 = vld [vmem:[#allocation12 + $0xad8] sm:$0xff]
      %v1975 = vld [vmem:[#allocation12 + $0xae0] sm:$0xff]
      %v1976 = vld [vmem:[#allocation12 + $0xae8] sm:$0xff]
      %v1977 = vld [vmem:[#allocation12 + $0xaf0] sm:$0xff]
      %v1978 = vld [vmem:[#allocation12 + $0xaf8] sm:$0xff]
      %v1979 = vld [vmem:[#allocation12 + $0xb00] sm:$0xff]
      %v1980 = vld [vmem:[#allocation12 + $0xb08] sm:$0xff]
      %v1981 = vld [vmem:[#allocation12 + $0xb10] sm:$0xff]
      %v1982 = vld [vmem:[#allocation12 + $0xb18] sm:$0xff]
      %v1983 = vld [vmem:[#allocation12 + $0xb20] sm:$0xff]
      %v1984 = vld [vmem:[#allocation12 + $0xb28] sm:$0xff]
      %v1985 = vld [vmem:[#allocation12 + $0xb30] sm:$0xff]
      %v1986 = vld [vmem:[#allocation12 + $0xb38] sm:$0xff]
      %v1987 = vld [vmem:[#allocation12 + $0xb40] sm:$0xff]
      %v1988 = vld [vmem:[#allocation12 + $0xb48] sm:$0xff]
      %v1989 = vld [vmem:[#allocation12 + $0xb50] sm:$0xff]
      %v1990 = vld [vmem:[#allocation12 + $0xb58] sm:$0xff]
      %v1991 = vld [vmem:[#allocation12 + $0xb60] sm:$0xff]
      %v1992 = vld [vmem:[#allocation12 + $0xb68] sm:$0xff]
      %v1993 = vld [vmem:[#allocation12 + $0xb70] sm:$0xff]
      %v1994 = vld [vmem:[#allocation12 + $0xb78] sm:$0xff]
      %v1995 = vld [vmem:[#allocation12 + $0xb80] sm:$0xff]
      %v1996 = vld [vmem:[#allocation12 + $0xb88] sm:$0xff]
      %v1997 = vld [vmem:[#allocation12 + $0xb90] sm:$0xff]
      %v1998 = vld [vmem:[#allocation12 + $0xb98] sm:$0xff]
      %v1999 = vld [vmem:[#allocation12 + $0xba0] sm:$0xff]
      %v2000 = vld [vmem:[#allocation12 + $0xba8] sm:$0xff]
      %v2001 = vld [vmem:[#allocation12 + $0xbb0] sm:$0xff]
      %v2002 = vld [vmem:[#allocation12 + $0xbb8] sm:$0xff]
      %v2003 = vld [vmem:[#allocation12 + $0xbc0] sm:$0xff]
      %v2004 = vld [vmem:[#allocation12 + $0xbc8] sm:$0xff]
      %v2005 = vld [vmem:[#allocation12 + $0xbd0] sm:$0xff]
      %v2006 = vld [vmem:[#allocation12 + $0xbd8] sm:$0xff]
      %v2007 = vld [vmem:[#allocation12 + $0xbe0] sm:$0xff]
      %v2008 = vld [vmem:[#allocation12 + $0xbe8] sm:$0xff]
      %v2009 = vld [vmem:[#allocation12 + $0xbf0] sm:$0xff]
      %v2010 = vld [vmem:[#allocation12 + $0xbf8] sm:$0xff]
      %v2011 = vld [vmem:[#allocation12 + $0xc00] sm:$0xff]
      %v2012 = vld [vmem:[#allocation12 + $0xc08] sm:$0xff]
      %v2013 = vld [vmem:[#allocation12 + $0xc10] sm:$0xff]
      %v2014 = vld [vmem:[#allocation12 + $0xc18] sm:$0xff]
      %v2015 = vld [vmem:[#allocation12 + $0xc20] sm:$0xff]
      %v2016 = vld [vmem:[#allocation12 + $0xc28] sm:$0xff]
      %v2017 = vld [vmem:[#allocation12 + $0xc30] sm:$0xff]
      %v2018 = vld [vmem:[#allocation12 + $0xc38] sm:$0xff]
      %v2019 = vld [vmem:[#allocation12 + $0xc40] sm:$0xff]
      %v2020 = vld [vmem:[#allocation12 + $0xc48] sm:$0xff]
      %v2021 = vld [vmem:[#allocation12 + $0xc50] sm:$0xff]
      %v2022 = vld [vmem:[#allocation12 + $0xc58] sm:$0xff]
      %v2023 = vld [vmem:[#allocation12 + $0xc60] sm:$0xff]
      %v2024 = vld [vmem:[#allocation12 + $0xc68] sm:$0xff]
      %v2025 = vld [vmem:[#allocation12 + $0xc70] sm:$0xff]
      %v2026 = vld [vmem:[#allocation12 + $0xc78] sm:$0xff]
      %v2027 = vld [vmem:[#allocation12 + $0xc80] sm:$0xff]
      %v2028 = vld [vmem:[#allocation12 + $0xc88] sm:$0xff]
      %v2029 = vld [vmem:[#allocation12 + $0xc90] sm:$0xff]
      %v2030 = vld [vmem:[#allocation12 + $0xc98] sm:$0xff]
      %v2031 = vld [vmem:[#allocation12 + $0xca0] sm:$0xff]
      %v2032 = vld [vmem:[#allocation12 + $0xca8] sm:$0xff]
      %v2033 = vld [vmem:[#allocation12 + $0xcb0] sm:$0xff]
      %v2034 = vld [vmem:[#allocation12 + $0xcb8] sm:$0xff]
      %v2035 = vld [vmem:[#allocation12 + $0xcc0] sm:$0xff]
      %v2036 = vld [vmem:[#allocation12 + $0xcc8] sm:$0xff]
      %v2037 = vld [vmem:[#allocation12 + $0xcd0] sm:$0xff]
      %v2038 = vld [vmem:[#allocation12 + $0xcd8] sm:$0xff]
      %v2039 = vld [vmem:[#allocation12 + $0xce0] sm:$0xff]
      %v2040 = vld [vmem:[#allocation12 + $0xce8] sm:$0xff]
      %v2041 = vld [vmem:[#allocation12 + $0xcf0] sm:$0xff]
      %v2042 = vld [vmem:[#allocation12 + $0xcf8] sm:$0xff]
      %v2043 = vld [vmem:[#allocation12 + $0xd00] sm:$0xff]
      %v2044 = vld [vmem:[#allocation12 + $0xd08] sm:$0xff]
      %v2045 = vld [vmem:[#allocation12 + $0xd10] sm:$0xff]
      %v2046 = vld [vmem:[#allocation12 + $0xd18] sm:$0xff]
      %v2047 = vld [vmem:[#allocation12 + $0xd20] sm:$0xff]
      %v2048 = vld [vmem:[#allocation12 + $0xd28] sm:$0xff]
      %v2049 = vld [vmem:[#allocation12 + $0xd30] sm:$0xff]
      %v2050 = vld [vmem:[#allocation12 + $0xd38] sm:$0xff]
      %v2051 = vld [vmem:[#allocation12 + $0xd40] sm:$0xff]
      %v2052 = vld [vmem:[#allocation12 + $0xd48] sm:$0xff]
      %v2053 = vld [vmem:[#allocation12 + $0xd50] sm:$0xff]
      %v2054 = vld [vmem:[#allocation12 + $0xd58] sm:$0xff]
      %v2055 = vld [vmem:[#allocation12 + $0xd60] sm:$0xff]
      %v2056 = vld [vmem:[#allocation12 + $0xd68] sm:$0xff]
      %v2057 = vld [vmem:[#allocation12 + $0xd70] sm:$0xff]
      %v2058 = vld [vmem:[#allocation12 + $0xd78] sm:$0xff]
      %v2059 = vld [vmem:[#allocation12 + $0xd80] sm:$0xff]
      %v2060 = vld [vmem:[#allocation12 + $0xd88] sm:$0xff]
      %v2061 = vld [vmem:[#allocation12 + $0xd90] sm:$0xff]
      %v2062 = vld [vmem:[#allocation12 + $0xd98] sm:$0xff]
      %v2063 = vld [vmem:[#allocation12 + $0xda0] sm:$0xff]
      %v2064 = vld [vmem:[#allocation12 + $0xda8] sm:$0xff]
      %v2065 = vld [vmem:[#allocation12 + $0xdb0] sm:$0xff]
      %v2066 = vld [vmem:[#allocation12 + $0xdb8] sm:$0xff]
      %v2067 = vld [vmem:[#allocation12 + $0xdc0] sm:$0xff]
      %v2068 = vld [vmem:[#allocation12 + $0xdc8] sm:$0xff]
      %v2069 = vld [vmem:[#allocation12 + $0xdd0] sm:$0xff]
      %v2070 = vld [vmem:[#allocation12 + $0xdd8] sm:$0xff]
      %v2071 = vld [vmem:[#allocation12 + $0xde0] sm:$0xff]
      %v2072 = vld [vmem:[#allocation12 + $0xde8] sm:$0xff]
      %v2073 = vld [vmem:[#allocation12 + $0xdf0] sm:$0xff]
      %v2074 = vld [vmem:[#allocation12 + $0xdf8] sm:$0xff]
      %v2075 = vld [vmem:[#allocation12 + $0xe00] sm:$0xff]
      %v2076 = vld [vmem:[#allocation12 + $0xe08] sm:$0xff]
      %v2077 = vld [vmem:[#allocation12 + $0xe10] sm:$0xff]
      %v2078 = vld [vmem:[#allocation12 + $0xe18] sm:$0xff]
      %v2079 = vld [vmem:[#allocation12 + $0xe20] sm:$0xff]
      %v2080 = vld [vmem:[#allocation12 + $0xe28] sm:$0xff]
      %v2081 = vld [vmem:[#allocation12 + $0xe30] sm:$0xff]
      %v2082 = vld [vmem:[#allocation12 + $0xe38] sm:$0xff]
      %v2083 = vld [vmem:[#allocation12 + $0xe40] sm:$0xff]
      %v2084 = vld [vmem:[#allocation12 + $0xe48] sm:$0xff]
      %v2085 = vld [vmem:[#allocation12 + $0xe50] sm:$0xff]
      %v2086 = vld [vmem:[#allocation12 + $0xe58] sm:$0xff]
      %v2087 = vld [vmem:[#allocation12 + $0xe60] sm:$0xff]
      %v2088 = vld [vmem:[#allocation12 + $0xe68] sm:$0xff]
      %v2089 = vld [vmem:[#allocation12 + $0xe70] sm:$0xff]
      %v2090 = vld [vmem:[#allocation12 + $0xe78] sm:$0xff]
      %v2091 = vld [vmem:[#allocation12 + $0xe80] sm:$0xff]
      %v2092 = vld [vmem:[#allocation12 + $0xe88] sm:$0xff]
      %v2093 = vld [vmem:[#allocation12 + $0xe90] sm:$0xff]
      %v2094 = vld [vmem:[#allocation12 + $0xe98] sm:$0xff]
      %v2095 = vld [vmem:[#allocation12 + $0xea0] sm:$0xff]
      %v2096 = vld [vmem:[#allocation12 + $0xea8] sm:$0xff]
      %v2097 = vld [vmem:[#allocation12 + $0xeb0] sm:$0xff]
      %v2098 = vld [vmem:[#allocation12 + $0xeb8] sm:$0xff]
      %v2099 = vld [vmem:[#allocation12 + $0xec0] sm:$0xff]
      %v2100 = vld [vmem:[#allocation12 + $0xec8] sm:$0xff]
      %v2101 = vld [vmem:[#allocation12 + $0xed0] sm:$0xff]
      %v2102 = vld [vmem:[#allocation12 + $0xed8] sm:$0xff]
      %v2103 = vld [vmem:[#allocation12 + $0xee0] sm:$0xff]
      %v2104 = vld [vmem:[#allocation12 + $0xee8] sm:$0xff]
      %v2105 = vld [vmem:[#allocation12 + $0xef0] sm:$0xff]
      %v2106 = vld [vmem:[#allocation12 + $0xef8] sm:$0xff]
      %v2107 = vld [vmem:[#allocation12 + $0xf00] sm:$0xff]
      %v2108 = vld [vmem:[#allocation12 + $0xf08] sm:$0xff]
      %v2109 = vld [vmem:[#allocation12 + $0xf10] sm:$0xff]
      %v2110 = vld [vmem:[#allocation12 + $0xf18] sm:$0xff]
      %v2111 = vld [vmem:[#allocation12 + $0xf20] sm:$0xff]
      %v2112 = vld [vmem:[#allocation12 + $0xf28] sm:$0xff]
      %v2113 = vld [vmem:[#allocation12 + $0xf30] sm:$0xff]
      %v2114 = vld [vmem:[#allocation12 + $0xf38] sm:$0xff]
      %v2115 = vld [vmem:[#allocation12 + $0xf40] sm:$0xff]
      %v2116 = vld [vmem:[#allocation12 + $0xf48] sm:$0xff]
      %v2117 = vld [vmem:[#allocation12 + $0xf50] sm:$0xff]
      %v2118 = vld [vmem:[#allocation12 + $0xf58] sm:$0xff]
      %v2119 = vld [vmem:[#allocation12 + $0xf60] sm:$0xff]
      %v2120 = vld [vmem:[#allocation12 + $0xf68] sm:$0xff]
      %v2121 = vld [vmem:[#allocation12 + $0xf70] sm:$0xff]
      %v2122 = vld [vmem:[#allocation12 + $0xf78] sm:$0xff]
      %v2123 = vld [vmem:[#allocation12 + $0xf80] sm:$0xff]
      %v2124 = vld [vmem:[#allocation12 + $0xf88] sm:$0xff]
      %v2125 = vld [vmem:[#allocation12 + $0xf90] sm:$0xff]
      %v2126 = vld [vmem:[#allocation12 + $0xf98] sm:$0xff]
      %v2127 = vld [vmem:[#allocation12 + $0xfa0] sm:$0xff]
      %v2128 = vld [vmem:[#allocation12 + $0xfa8] sm:$0xff]
      %v2129 = vld [vmem:[#allocation12 + $0xfb0] sm:$0xff]
      %v2130 = vld [vmem:[#allocation12 + $0xfb8] sm:$0xff]
      %v2131 = vld [vmem:[#allocation12 + $0xfc0] sm:$0xff]
      %v2132 = vld [vmem:[#allocation12 + $0xfc8] sm:$0xff]
      %v2133 = vld [vmem:[#allocation12 + $0xfd0] sm:$0xff]
      %v2134 = vld [vmem:[#allocation12 + $0xfd8] sm:$0xff]
      %v2135 = vld [vmem:[#allocation12 + $0xfe0] sm:$0xff]
      %v2136 = vld [vmem:[#allocation12 + $0xfe8] sm:$0xff]
      %v2137 = vld [vmem:[#allocation12 + $0xff0] sm:$0xff]
      %v2138 = vld [vmem:[#allocation12 + $0xff8] sm:$0xff]
      %v2139 = vld [vmem:[#allocation14] sm:$0xff]
      %v2141 = vlaneseq
      %v2142 = vshrl.u32 %v2141, 7
      %v2143 = vsub.s32 0, %v2142
      %v2144 = vrot.slane %v2139, %v2143
      %v2145 = vlaneseq
      %v2146 = vshrl.u32 %v2145, 7
      %v2147 = vsub.s32 1, %v2146
      %v2148 = vrot.slane %v2139, %v2147
      %v2149 = vlaneseq
      %v2150 = vshrl.u32 %v2149, 7
      %v2151 = vsub.s32 2, %v2150
      %v2152 = vrot.slane %v2139, %v2151
      %v2153 = vlaneseq
      %v2154 = vshrl.u32 %v2153, 7
      %v2155 = vsub.s32 3, %v2154
      %v2156 = vrot.slane %v2139, %v2155
      %v2157 = vlaneseq
      %v2158 = vshrl.u32 %v2157, 7
      %v2159 = vsub.s32 4, %v2158
      %v2160 = vrot.slane %v2139, %v2159
      %v2161 = vlaneseq
      %v2162 = vshrl.u32 %v2161, 7
      %v2163 = vsub.s32 5, %v2162
      %v2164 = vrot.slane %v2139, %v2163
      %v2165 = vlaneseq
      %v2166 = vshrl.u32 %v2165, 7
      %v2167 = vsub.s32 6, %v2166
      %v2168 = vrot.slane %v2139, %v2167
      %v2169 = vlaneseq
      %v2170 = vshrl.u32 %v2169, 7
      %v2171 = vsub.s32 7, %v2170
      %v2172 = vrot.slane %v2139, %v2171
      %2181 = vmatprep.subr.mxu0 %v1628
      %2182 = vmatpush1.msra.mxu0 %v1627
      %2183 = vmatprep.subr.mxu0 %v1636
      %2184 = vmatpush1.msra.mxu0 %v1635
      %2185 = vmatprep.subr.mxu0 %v1644
      %2186 = vmatpush1.msra.mxu0 %v1643
      %2187 = vmatprep.subr.mxu0 %v1652
      %2188 = vmatpush1.msra.mxu0 %v1651
      %2189 = vmatprep.subr.mxu0 %v1660
      %2190 = vmatpush1.msra.mxu0 %v1659
      %2191 = vmatprep.subr.mxu0 %v1668
      %2192 = vmatpush1.msra.mxu0 %v1667
      %2193 = vmatprep.subr.mxu0 %v1676
      %2194 = vmatpush1.msra.mxu0 %v1675
      %2195 = vmatprep.subr.mxu0 %v1684
      %2196 = vmatpush1.msra.mxu0 %v1683
      %2197 = vmatprep.subr.mxu0 %v1692
      %2198 = vmatpush1.msra.mxu0 %v1691
      %2199 = vmatprep.subr.mxu0 %v1700
      %2200 = vmatpush1.msra.mxu0 %v1699
      %2201 = vmatprep.subr.mxu0 %v1708
      %2202 = vmatpush1.msra.mxu0 %v1707
      %2203 = vmatprep.subr.mxu0 %v1716
      %2204 = vmatpush1.msra.mxu0 %v1715
      %2205 = vmatprep.subr.mxu0 %v1724
      %2206 = vmatpush1.msra.mxu0 %v1723
      %2207 = vmatprep.subr.mxu0 %v1732
      %2208 = vmatpush1.msra.mxu0 %v1731
      %2209 = vmatprep.subr.mxu0 %v1740
      %2210 = vmatpush1.msra.mxu0 %v1739
      %2211 = vmatprep.subr.mxu0 %v1748
      %2212 = vmatpush1.msra.mxu0 %v1747
      %2213 = vmatprep.subr.mxu0 %v1756
      %2214 = vmatpush1.msra.mxu0 %v1755
      %2215 = vmatprep.subr.mxu0 %v1764
      %2216 = vmatpush1.msra.mxu0 %v1763
      %2217 = vmatprep.subr.mxu0 %v1772
      %2218 = vmatpush1.msra.mxu0 %v1771
      %2219 = vmatprep.subr.mxu0 %v1780
      %2220 = vmatpush1.msra.mxu0 %v1779
      %2221 = vmatprep.subr.mxu0 %v1788
      %2222 = vmatpush1.msra.mxu0 %v1787
      %2223 = vmatprep.subr.mxu0 %v1796
      %2224 = vmatpush1.msra.mxu0 %v1795
      %2225 = vmatprep.subr.mxu0 %v1804
      %2226 = vmatpush1.msra.mxu0 %v1803
      %2227 = vmatprep.subr.mxu0 %v1812
      %2228 = vmatpush1.msra.mxu0 %v1811
      %2229 = vmatprep.subr.mxu0 %v1820
      %2230 = vmatpush1.msra.mxu0 %v1819
      %2231 = vmatprep.subr.mxu0 %v1828
      %2232 = vmatpush1.msra.mxu0 %v1827
      %2233 = vmatprep.subr.mxu0 %v1836
      %2234 = vmatpush1.msra.mxu0 %v1835
      %2235 = vmatprep.subr.mxu0 %v1844
      %2236 = vmatpush1.msra.mxu0 %v1843
      %2237 = vmatprep.subr.mxu0 %v1852
      %2238 = vmatpush1.msra.mxu0 %v1851
      %2239 = vmatprep.subr.mxu0 %v1860
      %2240 = vmatpush1.msra.mxu0 %v1859
      %2241 = vmatprep.subr.mxu0 %v1868
      %2242 = vmatpush1.msra.mxu0 %v1867
      %2243 = vmatprep.subr.mxu0 %v1876
      %2244 = vmatpush1.msra.mxu0 %v1875
      %2245 = vmatprep.mubr.f32.mxu0 %v1624
      %2246 = vmatmul.mubr.f32.gmra.mrb[0].mxu0 %v1623
      %v2247 = vpop.f32.mrb[0].mxu0
      %v2248 = vadd.f32 %v2144, %v2247
      %v2249 = vpop.f32.mrb[0].mxu0
      %v2250 = vadd.f32 %v2148, %v2249
      %2251 = vdwg.mxu0
      %2252 = vmatprep.subr.mxu0 %v1884
      %2253 = vmatpush1.msra.mxu0 %v1883
      %2254 = vmatprep.subr.mxu0 %v1892
      %2255 = vmatpush1.msra.mxu0 %v1891
      %2256 = vmatprep.subr.mxu0 %v1900
      %2257 = vmatpush1.msra.mxu0 %v1899
      %2258 = vmatprep.subr.mxu0 %v1908
      %2259 = vmatpush1.msra.mxu0 %v1907
      %2260 = vmatprep.subr.mxu0 %v1916
      %2261 = vmatpush1.msra.mxu0 %v1915
      %2262 = vmatprep.subr.mxu0 %v1924
      %2263 = vmatpush1.msra.mxu0 %v1923
      %2264 = vmatprep.subr.mxu0 %v1932
      %2265 = vmatpush1.msra.mxu0 %v1931
      %2266 = vmatprep.subr.mxu0 %v1940
      %2267 = vmatpush1.msra.mxu0 %v1939
      %2268 = vmatprep.subr.mxu0 %v1948
      %2269 = vmatpush1.msra.mxu0 %v1947
      %2270 = vmatprep.subr.mxu0 %v1956
      %2271 = vmatpush1.msra.mxu0 %v1955
      %2272 = vmatprep.subr.mxu0 %v1964
      %2273 = vmatpush1.msra.mxu0 %v1963
      %2274 = vmatprep.subr.mxu0 %v1972
      %2275 = vmatpush1.msra.mxu0 %v1971
      %2276 = vmatprep.subr.mxu0 %v1980
      %2277 = vmatpush1.msra.mxu0 %v1979
      %2278 = vmatprep.subr.mxu0 %v1988
      %2279 = vmatpush1.msra.mxu0 %v1987
      %2280 = vmatprep.subr.mxu0 %v1996
      %2281 = vmatpush1.msra.mxu0 %v1995
      %2282 = vmatprep.subr.mxu0 %v2004
      %2283 = vmatpush1.msra.mxu0 %v2003
      %2284 = vmatprep.subr.mxu0 %v2012
      %2285 = vmatpush1.msra.mxu0 %v2011
      %2286 = vmatprep.subr.mxu0 %v2020
      %2287 = vmatpush1.msra.mxu0 %v2019
      %2288 = vmatprep.subr.mxu0 %v2028
      %2289 = vmatpush1.msra.mxu0 %v2027
      %2290 = vmatprep.subr.mxu0 %v2036
      %2291 = vmatpush1.msra.mxu0 %v2035
      %2292 = vmatprep.subr.mxu0 %v2044
      %2293 = vmatpush1.msra.mxu0 %v2043
      %2294 = vmatprep.subr.mxu0 %v2052
      %2295 = vmatpush1.msra.mxu0 %v2051
      %2296 = vmatprep.subr.mxu0 %v2060
      %2297 = vmatpush1.msra.mxu0 %v2059
      %2298 = vmatprep.subr.mxu0 %v2068
      %2299 = vmatpush1.msra.mxu0 %v2067
      %2300 = vmatprep.subr.mxu0 %v2076
      %2301 = vmatpush1.msra.mxu0 %v2075
      %2302 = vmatprep.subr.mxu0 %v2084
      %2303 = vmatpush1.msra.mxu0 %v2083
      %2304 = vmatprep.subr.mxu0 %v2092
      %2305 = vmatpush1.msra.mxu0 %v2091
      %2306 = vmatprep.subr.mxu0 %v2100
      %2307 = vmatpush1.msra.mxu0 %v2099
      %2308 = vmatprep.subr.mxu0 %v2108
      %2309 = vmatpush1.msra.mxu0 %v2107
      %2310 = vmatprep.subr.mxu0 %v2116
      %2311 = vmatpush1.msra.mxu0 %v2115
      %2312 = vmatprep.subr.mxu0 %v2124
      %2313 = vmatpush1.msra.mxu0 %v2123
      %2314 = vmatprep.subr.mxu0 %v2132
      %2315 = vmatpush1.msra.mxu0 %v2131
      %2316 = vmatprep.mubr.f32.mxu0 %v1626
      %2317 = vmatmul.mubr.f32.gmra.mrb[0].mxu0 %v1625
      %v2318 = vpop.f32.mrb[0].mxu0
      %v2319 = vadd.f32 %v2248, %v2318
      %v2320 = vpop.f32.mrb[0].mxu0
      %v2321 = vadd.f32 %v2250, %v2320
      %2322 = vdwg.mxu0
      %2323 = vmatprep.subr.mxu0 %v1630
      %2324 = vmatpush1.msra.mxu0 %v1629
      %2325 = vmatprep.subr.mxu0 %v1638
      %2326 = vmatpush1.msra.mxu0 %v1637
      %2327 = vmatprep.subr.mxu0 %v1646
      %2328 = vmatpush1.msra.mxu0 %v1645
      %2329 = vmatprep.subr.mxu0 %v1654
      %2330 = vmatpush1.msra.mxu0 %v1653
      %2331 = vmatprep.subr.mxu0 %v1662
      %2332 = vmatpush1.msra.mxu0 %v1661
      %2333 = vmatprep.subr.mxu0 %v1670
      %2334 = vmatpush1.msra.mxu0 %v1669
      %2335 = vmatprep.subr.mxu0 %v1678
      %2336 = vmatpush1.msra.mxu0 %v1677
      %2337 = vmatprep.subr.mxu0 %v1686
      %2338 = vmatpush1.msra.mxu0 %v1685
      %2339 = vmatprep.subr.mxu0 %v1694
      %2340 = vmatpush1.msra.mxu0 %v1693
      %2341 = vmatprep.subr.mxu0 %v1702
      %2342 = vmatpush1.msra.mxu0 %v1701
      %2343 = vmatprep.subr.mxu0 %v1710
      %2344 = vmatpush1.msra.mxu0 %v1709
      %2345 = vmatprep.subr.mxu0 %v1718
      %2346 = vmatpush1.msra.mxu0 %v1717
      %2347 = vmatprep.subr.mxu0 %v1726
      %2348 = vmatpush1.msra.mxu0 %v1725
      %2349 = vmatprep.subr.mxu0 %v1734
      %2350 = vmatpush1.msra.mxu0 %v1733
      %2351 = vmatprep.subr.mxu0 %v1742
      %2352 = vmatpush1.msra.mxu0 %v1741
      %2353 = vmatprep.subr.mxu0 %v1750
      %2354 = vmatpush1.msra.mxu0 %v1749
      %2355 = vmatprep.subr.mxu0 %v1758
      %2356 = vmatpush1.msra.mxu0 %v1757
      %2357 = vmatprep.subr.mxu0 %v1766
      %2358 = vmatpush1.msra.mxu0 %v1765
      %2359 = vmatprep.subr.mxu0 %v1774
      %2360 = vmatpush1.msra.mxu0 %v1773
      %2361 = vmatprep.subr.mxu0 %v1782
      %2362 = vmatpush1.msra.mxu0 %v1781
      %2363 = vmatprep.subr.mxu0 %v1790
      %2364 = vmatpush1.msra.mxu0 %v1789
      %2365 = vmatprep.subr.mxu0 %v1798
      %2366 = vmatpush1.msra.mxu0 %v1797
      %2367 = vmatprep.subr.mxu0 %v1806
      %2368 = vmatpush1.msra.mxu0 %v1805
      %2369 = vmatprep.subr.mxu0 %v1814
      %2370 = vmatpush1.msra.mxu0 %v1813
      %2371 = vmatprep.subr.mxu0 %v1822
      %2372 = vmatpush1.msra.mxu0 %v1821
      %2373 = vmatprep.subr.mxu0 %v1830
      %2374 = vmatpush1.msra.mxu0 %v1829
      %2375 = vmatprep.subr.mxu0 %v1838
      %2376 = vmatpush1.msra.mxu0 %v1837
      %2377 = vmatprep.subr.mxu0 %v1846
      %2378 = vmatpush1.msra.mxu0 %v1845
      %2379 = vmatprep.subr.mxu0 %v1854
      %2380 = vmatpush1.msra.mxu0 %v1853
      %2381 = vmatprep.subr.mxu0 %v1862
      %2382 = vmatpush1.msra.mxu0 %v1861
      %2383 = vmatprep.subr.mxu0 %v1870
      %2384 = vmatpush1.msra.mxu0 %v1869
      %2385 = vmatprep.subr.mxu0 %v1878
      %2386 = vmatpush1.msra.mxu0 %v1877
      %2387 = vmatprep.mubr.f32.mxu0 %v1624
      %2388 = vmatmul.mubr.f32.gmra.mrb[0].mxu0 %v1623
      %v2389 = vpop.f32.mrb[0].mxu0
      %v2390 = vadd.f32 %v2152, %v2389
      %v2391 = vpop.f32.mrb[0].mxu0
      %v2392 = vadd.f32 %v2156, %v2391
      %2393 = vdwg.mxu0
      %2394 = vmatprep.subr.mxu0 %v1886
      %2395 = vmatpush1.msra.mxu0 %v1885
      %2396 = vmatprep.subr.mxu0 %v1894
      %2397 = vmatpush1.msra.mxu0 %v1893
      %2398 = vmatprep.subr.mxu0 %v1902
      %2399 = vmatpush1.msra.mxu0 %v1901
      %2400 = vmatprep.subr.mxu0 %v1910
      %2401 = vmatpush1.msra.mxu0 %v1909
      %2402 = vmatprep.subr.mxu0 %v1918
      %2403 = vmatpush1.msra.mxu0 %v1917
      %2404 = vmatprep.subr.mxu0 %v1926
      %2405 = vmatpush1.msra.mxu0 %v1925
      %2406 = vmatprep.subr.mxu0 %v1934
      %2407 = vmatpush1.msra.mxu0 %v1933
      %2408 = vmatprep.subr.mxu0 %v1942
      %2409 = vmatpush1.msra.mxu0 %v1941
      %2410 = vmatprep.subr.mxu0 %v1950
      %2411 = vmatpush1.msra.mxu0 %v1949
      %2412 = vmatprep.subr.mxu0 %v1958
      %2413 = vmatpush1.msra.mxu0 %v1957
      %2414 = vmatprep.subr.mxu0 %v1966
      %2415 = vmatpush1.msra.mxu0 %v1965
      %2416 = vmatprep.subr.mxu0 %v1974
      %2417 = vmatpush1.msra.mxu0 %v1973
      %2418 = vmatprep.subr.mxu0 %v1982
      %2419 = vmatpush1.msra.mxu0 %v1981
      %2420 = vmatprep.subr.mxu0 %v1990
      %2421 = vmatpush1.msra.mxu0 %v1989
      %2422 = vmatprep.subr.mxu0 %v1998
      %2423 = vmatpush1.msra.mxu0 %v1997
      %2424 = vmatprep.subr.mxu0 %v2006
      %2425 = vmatpush1.msra.mxu0 %v2005
      %2426 = vmatprep.subr.mxu0 %v2014
      %2427 = vmatpush1.msra.mxu0 %v2013
      %2428 = vmatprep.subr.mxu0 %v2022
      %2429 = vmatpush1.msra.mxu0 %v2021
      %2430 = vmatprep.subr.mxu0 %v2030
      %2431 = vmatpush1.msra.mxu0 %v2029
      %2432 = vmatprep.subr.mxu0 %v2038
      %2433 = vmatpush1.msra.mxu0 %v2037
      %2434 = vmatprep.subr.mxu0 %v2046
      %2435 = vmatpush1.msra.mxu0 %v2045
      %2436 = vmatprep.subr.mxu0 %v2054
      %2437 = vmatpush1.msra.mxu0 %v2053
      %2438 = vmatprep.subr.mxu0 %v2062
      %2439 = vmatpush1.msra.mxu0 %v2061
      %2440 = vmatprep.subr.mxu0 %v2070
      %2441 = vmatpush1.msra.mxu0 %v2069
      %2442 = vmatprep.subr.mxu0 %v2078
      %2443 = vmatpush1.msra.mxu0 %v2077
      %2444 = vmatprep.subr.mxu0 %v2086
      %2445 = vmatpush1.msra.mxu0 %v2085
      %2446 = vmatprep.subr.mxu0 %v2094
      %2447 = vmatpush1.msra.mxu0 %v2093
      %2448 = vmatprep.subr.mxu0 %v2102
      %2449 = vmatpush1.msra.mxu0 %v2101
      %2450 = vmatprep.subr.mxu0 %v2110
      %2451 = vmatpush1.msra.mxu0 %v2109
      %2452 = vmatprep.subr.mxu0 %v2118
      %2453 = vmatpush1.msra.mxu0 %v2117
      %2454 = vmatprep.subr.mxu0 %v2126
      %2455 = vmatpush1.msra.mxu0 %v2125
      %2456 = vmatprep.subr.mxu0 %v2134
      %2457 = vmatpush1.msra.mxu0 %v2133
      %2458 = vmatprep.mubr.f32.mxu0 %v1626
      %2459 = vmatmul.mubr.f32.gmra.mrb[0].mxu0 %v1625
      %v2460 = vpop.f32.mrb[0].mxu0
      %v2461 = vadd.f32 %v2390, %v2460
      %v2462 = vpop.f32.mrb[0].mxu0
      %v2463 = vadd.f32 %v2392, %v2462
      %2464 = vdwg.mxu0
      %2465 = vmatprep.subr.mxu0 %v1632
      %2466 = vmatpush1.msra.mxu0 %v1631
      %2467 = vmatprep.subr.mxu0 %v1640
      %2468 = vmatpush1.msra.mxu0 %v1639
      %2469 = vmatprep.subr.mxu0 %v1648
      %2470 = vmatpush1.msra.mxu0 %v1647
      %2471 = vmatprep.subr.mxu0 %v1656
      %2472 = vmatpush1.msra.mxu0 %v1655
      %2473 = vmatprep.subr.mxu0 %v1664
      %2474 = vmatpush1.msra.mxu0 %v1663
      %2475 = vmatprep.subr.mxu0 %v1672
      %2476 = vmatpush1.msra.mxu0 %v1671
      %2477 = vmatprep.subr.mxu0 %v1680
      %2478 = vmatpush1.msra.mxu0 %v1679
      %2479 = vmatprep.subr.mxu0 %v1688
      %2480 = vmatpush1.msra.mxu0 %v1687
      %2481 = vmatprep.subr.mxu0 %v1696
      %2482 = vmatpush1.msra.mxu0 %v1695
      %2483 = vmatprep.subr.mxu0 %v1704
      %2484 = vmatpush1.msra.mxu0 %v1703
      %2485 = vmatprep.subr.mxu0 %v1712
      %2486 = vmatpush1.msra.mxu0 %v1711
      %2487 = vmatprep.subr.mxu0 %v1720
      %2488 = vmatpush1.msra.mxu0 %v1719
      %2489 = vmatprep.subr.mxu0 %v1728
      %2490 = vmatpush1.msra.mxu0 %v1727
      %2491 = vmatprep.subr.mxu0 %v1736
      %2492 = vmatpush1.msra.mxu0 %v1735
      %2493 = vmatprep.subr.mxu0 %v1744
      %2494 = vmatpush1.msra.mxu0 %v1743
      %2495 = vmatprep.subr.mxu0 %v1752
      %2496 = vmatpush1.msra.mxu0 %v1751
      %2497 = vmatprep.subr.mxu0 %v1760
      %2498 = vmatpush1.msra.mxu0 %v1759
      %2499 = vmatprep.subr.mxu0 %v1768
      %2500 = vmatpush1.msra.mxu0 %v1767
      %2501 = vmatprep.subr.mxu0 %v1776
      %2502 = vmatpush1.msra.mxu0 %v1775
      %2503 = vmatprep.subr.mxu0 %v1784
      %2504 = vmatpush1.msra.mxu0 %v1783
      %2505 = vmatprep.subr.mxu0 %v1792
      %2506 = vmatpush1.msra.mxu0 %v1791
      %2507 = vmatprep.subr.mxu0 %v1800
      %2508 = vmatpush1.msra.mxu0 %v1799
      %2509 = vmatprep.subr.mxu0 %v1808
      %2510 = vmatpush1.msra.mxu0 %v1807
      %2511 = vmatprep.subr.mxu0 %v1816
      %2512 = vmatpush1.msra.mxu0 %v1815
      %2513 = vmatprep.subr.mxu0 %v1824
      %2514 = vmatpush1.msra.mxu0 %v1823
      %2515 = vmatprep.subr.mxu0 %v1832
      %2516 = vmatpush1.msra.mxu0 %v1831
      %2517 = vmatprep.subr.mxu0 %v1840
      %2518 = vmatpush1.msra.mxu0 %v1839
      %2519 = vmatprep.subr.mxu0 %v1848
      %2520 = vmatpush1.msra.mxu0 %v1847
      %2521 = vmatprep.subr.mxu0 %v1856
      %2522 = vmatpush1.msra.mxu0 %v1855
      %2523 = vmatprep.subr.mxu0 %v1864
      %2524 = vmatpush1.msra.mxu0 %v1863
      %2525 = vmatprep.subr.mxu0 %v1872
      %2526 = vmatpush1.msra.mxu0 %v1871
      %2527 = vmatprep.subr.mxu0 %v1880
      %2528 = vmatpush1.msra.mxu0 %v1879
      %2529 = vmatprep.mubr.f32.mxu0 %v1624
      %2530 = vmatmul.mubr.f32.gmra.mrb[0].mxu0 %v1623
      %v2531 = vpop.f32.mrb[0].mxu0
      %v2532 = vadd.f32 %v2160, %v2531
      %v2533 = vpop.f32.mrb[0].mxu0
      %v2534 = vadd.f32 %v2164, %v2533
      %2535 = vdwg.mxu0
      %2536 = vmatprep.subr.mxu0 %v1888
      %2537 = vmatpush1.msra.mxu0 %v1887
      %2538 = vmatprep.subr.mxu0 %v1896
      %2539 = vmatpush1.msra.mxu0 %v1895
      %2540 = vmatprep.subr.mxu0 %v1904
      %2541 = vmatpush1.msra.mxu0 %v1903
      %2542 = vmatprep.subr.mxu0 %v1912
      %2543 = vmatpush1.msra.mxu0 %v1911
      %2544 = vmatprep.subr.mxu0 %v1920
      %2545 = vmatpush1.msra.mxu0 %v1919
      %2546 = vmatprep.subr.mxu0 %v1928
      %2547 = vmatpush1.msra.mxu0 %v1927
      %2548 = vmatprep.subr.mxu0 %v1936
      %2549 = vmatpush1.msra.mxu0 %v1935
      %2550 = vmatprep.subr.mxu0 %v1944
      %2551 = vmatpush1.msra.mxu0 %v1943
      %2552 = vmatprep.subr.mxu0 %v1952
      %2553 = vmatpush1.msra.mxu0 %v1951
      %2554 = vmatprep.subr.mxu0 %v1960
      %2555 = vmatpush1.msra.mxu0 %v1959
      %2556 = vmatprep.subr.mxu0 %v1968
      %2557 = vmatpush1.msra.mxu0 %v1967
      %2558 = vmatprep.subr.mxu0 %v1976
      %2559 = vmatpush1.msra.mxu0 %v1975
      %2560 = vmatprep.subr.mxu0 %v1984
      %2561 = vmatpush1.msra.mxu0 %v1983
      %2562 = vmatprep.subr.mxu0 %v1992
      %2563 = vmatpush1.msra.mxu0 %v1991
      %2564 = vmatprep.subr.mxu0 %v2000
      %2565 = vmatpush1.msra.mxu0 %v1999
      %2566 = vmatprep.subr.mxu0 %v2008
      %2567 = vmatpush1.msra.mxu0 %v2007
      %2568 = vmatprep.subr.mxu0 %v2016
      %2569 = vmatpush1.msra.mxu0 %v2015
      %2570 = vmatprep.subr.mxu0 %v2024
      %2571 = vmatpush1.msra.mxu0 %v2023
      %2572 = vmatprep.subr.mxu0 %v2032
      %2573 = vmatpush1.msra.mxu0 %v2031
      %2574 = vmatprep.subr.mxu0 %v2040
      %2575 = vmatpush1.msra.mxu0 %v2039
      %2576 = vmatprep.subr.mxu0 %v2048
      %2577 = vmatpush1.msra.mxu0 %v2047
      %2578 = vmatprep.subr.mxu0 %v2056
      %2579 = vmatpush1.msra.mxu0 %v2055
      %2580 = vmatprep.subr.mxu0 %v2064
      %2581 = vmatpush1.msra.mxu0 %v2063
      %2582 = vmatprep.subr.mxu0 %v2072
      %2583 = vmatpush1.msra.mxu0 %v2071
      %2584 = vmatprep.subr.mxu0 %v2080
      %2585 = vmatpush1.msra.mxu0 %v2079
      %2586 = vmatprep.subr.mxu0 %v2088
      %2587 = vmatpush1.msra.mxu0 %v2087
      %2588 = vmatprep.subr.mxu0 %v2096
      %2589 = vmatpush1.msra.mxu0 %v2095
      %2590 = vmatprep.subr.mxu0 %v2104
      %2591 = vmatpush1.msra.mxu0 %v2103
      %2592 = vmatprep.subr.mxu0 %v2112
      %2593 = vmatpush1.msra.mxu0 %v2111
      %2594 = vmatprep.subr.mxu0 %v2120
      %2595 = vmatpush1.msra.mxu0 %v2119
      %2596 = vmatprep.subr.mxu0 %v2128
      %2597 = vmatpush1.msra.mxu0 %v2127
      %2598 = vmatprep.subr.mxu0 %v2136
      %2599 = vmatpush1.msra.mxu0 %v2135
      %2600 = vmatprep.mubr.f32.mxu0 %v1626
      %2601 = vmatmul.mubr.f32.gmra.mrb[0].mxu0 %v1625
      %v2602 = vpop.f32.mrb[0].mxu0
      %v2603 = vadd.f32 %v2532, %v2602
      %v2604 = vpop.f32.mrb[0].mxu0
      %v2605 = vadd.f32 %v2534, %v2604
      %2606 = vdwg.mxu0
      %2607 = vmatprep.subr.mxu0 %v1634
      %2608 = vmatpush1.msra.mxu0 %v1633
      %2609 = vmatprep.subr.mxu0 %v1642
      %2610 = vmatpush1.msra.mxu0 %v1641
      %2611 = vmatprep.subr.mxu0 %v1650
      %2612 = vmatpush1.msra.mxu0 %v1649
      %2613 = vmatprep.subr.mxu0 %v1658
      %2614 = vmatpush1.msra.mxu0 %v1657
      %2615 = vmatprep.subr.mxu0 %v1666
      %2616 = vmatpush1.msra.mxu0 %v1665
      %2617 = vmatprep.subr.mxu0 %v1674
      %2618 = vmatpush1.msra.mxu0 %v1673
      %2619 = vmatprep.subr.mxu0 %v1682
      %2620 = vmatpush1.msra.mxu0 %v1681
      %2621 = vmatprep.subr.mxu0 %v1690
      %2622 = vmatpush1.msra.mxu0 %v1689
      %2623 = vmatprep.subr.mxu0 %v1698
      %2624 = vmatpush1.msra.mxu0 %v1697
      %2625 = vmatprep.subr.mxu0 %v1706
      %2626 = vmatpush1.msra.mxu0 %v1705
      %2627 = vmatprep.subr.mxu0 %v1714
      %2628 = vmatpush1.msra.mxu0 %v1713
      %2629 = vmatprep.subr.mxu0 %v1722
      %2630 = vmatpush1.msra.mxu0 %v1721
      %2631 = vmatprep.subr.mxu0 %v1730
      %2632 = vmatpush1.msra.mxu0 %v1729
      %2633 = vmatprep.subr.mxu0 %v1738
      %2634 = vmatpush1.msra.mxu0 %v1737
      %2635 = vmatprep.subr.mxu0 %v1746
      %2636 = vmatpush1.msra.mxu0 %v1745
      %2637 = vmatprep.subr.mxu0 %v1754
      %2638 = vmatpush1.msra.mxu0 %v1753
      %2639 = vmatprep.subr.mxu0 %v1762
      %2640 = vmatpush1.msra.mxu0 %v1761
      %2641 = vmatprep.subr.mxu0 %v1770
      %2642 = vmatpush1.msra.mxu0 %v1769
      %2643 = vmatprep.subr.mxu0 %v1778
      %2644 = vmatpush1.msra.mxu0 %v1777
      %2645 = vmatprep.subr.mxu0 %v1786
      %2646 = vmatpush1.msra.mxu0 %v1785
      %2647 = vmatprep.subr.mxu0 %v1794
      %2648 = vmatpush1.msra.mxu0 %v1793
      %2649 = vmatprep.subr.mxu0 %v1802
      %2650 = vmatpush1.msra.mxu0 %v1801
      %2651 = vmatprep.subr.mxu0 %v1810
      %2652 = vmatpush1.msra.mxu0 %v1809
      %2653 = vmatprep.subr.mxu0 %v1818
      %2654 = vmatpush1.msra.mxu0 %v1817
      %2655 = vmatprep.subr.mxu0 %v1826
      %2656 = vmatpush1.msra.mxu0 %v1825
      %2657 = vmatprep.subr.mxu0 %v1834
      %2658 = vmatpush1.msra.mxu0 %v1833
      %2659 = vmatprep.subr.mxu0 %v1842
      %2660 = vmatpush1.msra.mxu0 %v1841
      %2661 = vmatprep.subr.mxu0 %v1850
      %2662 = vmatpush1.msra.mxu0 %v1849
      %2663 = vmatprep.subr.mxu0 %v1858
      %2664 = vmatpush1.msra.mxu0 %v1857
      %2665 = vmatprep.subr.mxu0 %v1866
      %2666 = vmatpush1.msra.mxu0 %v1865
      %2667 = vmatprep.subr.mxu0 %v1874
      %2668 = vmatpush1.msra.mxu0 %v1873
      %2669 = vmatprep.subr.mxu0 %v1882
      %2670 = vmatpush1.msra.mxu0 %v1881
      %2671 = vmatprep.mubr.f32.mxu0 %v1624
      %2672 = vmatmul.mubr.f32.gmra.mrb[0].mxu0 %v1623
      %v2673 = vpop.f32.mrb[0].mxu0
      %v2674 = vadd.f32 %v2168, %v2673
      %v2675 = vpop.f32.mrb[0].mxu0
      %v2676 = vadd.f32 %v2172, %v2675
      %2677 = vdwg.mxu0
      %2678 = vmatprep.subr.mxu0 %v1890
      %2679 = vmatpush1.msra.mxu0 %v1889
      %2680 = vmatprep.subr.mxu0 %v1898
      %2681 = vmatpush1.msra.mxu0 %v1897
      %2682 = vmatprep.subr.mxu0 %v1906
      %2683 = vmatpush1.msra.mxu0 %v1905
      %2684 = vmatprep.subr.mxu0 %v1914
      %2685 = vmatpush1.msra.mxu0 %v1913
      %2686 = vmatprep.subr.mxu0 %v1922
      %2687 = vmatpush1.msra.mxu0 %v1921
      %2688 = vmatprep.subr.mxu0 %v1930
      %2689 = vmatpush1.msra.mxu0 %v1929
      %2690 = vmatprep.subr.mxu0 %v1938
      %2691 = vmatpush1.msra.mxu0 %v1937
      %2692 = vmatprep.subr.mxu0 %v1946
      %2693 = vmatpush1.msra.mxu0 %v1945
      %2694 = vmatprep.subr.mxu0 %v1954
      %2695 = vmatpush1.msra.mxu0 %v1953
      %2696 = vmatprep.subr.mxu0 %v1962
      %2697 = vmatpush1.msra.mxu0 %v1961
      %2698 = vmatprep.subr.mxu0 %v1970
      %2699 = vmatpush1.msra.mxu0 %v1969
      %2700 = vmatprep.subr.mxu0 %v1978
      %2701 = vmatpush1.msra.mxu0 %v1977
      %2702 = vmatprep.subr.mxu0 %v1986
      %2703 = vmatpush1.msra.mxu0 %v1985
      %2704 = vmatprep.subr.mxu0 %v1994
      %2705 = vmatpush1.msra.mxu0 %v1993
      %2706 = vmatprep.subr.mxu0 %v2002
      %2707 = vmatpush1.msra.mxu0 %v2001
      %2708 = vmatprep.subr.mxu0 %v2010
      %2709 = vmatpush1.msra.mxu0 %v2009
      %2710 = vmatprep.subr.mxu0 %v2018
      %2711 = vmatpush1.msra.mxu0 %v2017
      %2712 = vmatprep.subr.mxu0 %v2026
      %2713 = vmatpush1.msra.mxu0 %v2025
      %2714 = vmatprep.subr.mxu0 %v2034
      %2715 = vmatpush1.msra.mxu0 %v2033
      %2716 = vmatprep.subr.mxu0 %v2042
      %2717 = vmatpush1.msra.mxu0 %v2041
      %2718 = vmatprep.subr.mxu0 %v2050
      %2719 = vmatpush1.msra.mxu0 %v2049
      %2720 = vmatprep.subr.mxu0 %v2058
      %2721 = vmatpush1.msra.mxu0 %v2057
      %2722 = vmatprep.subr.mxu0 %v2066
      %2723 = vmatpush1.msra.mxu0 %v2065
      %2724 = vmatprep.subr.mxu0 %v2074
      %2725 = vmatpush1.msra.mxu0 %v2073
      %2726 = vmatprep.subr.mxu0 %v2082
      %2727 = vmatpush1.msra.mxu0 %v2081
      %2728 = vmatprep.subr.mxu0 %v2090
      %2729 = vmatpush1.msra.mxu0 %v2089
      %2730 = vmatprep.subr.mxu0 %v2098
      %2731 = vmatpush1.msra.mxu0 %v2097
      %2732 = vmatprep.subr.mxu0 %v2106
      %2733 = vmatpush1.msra.mxu0 %v2105
      %2734 = vmatprep.subr.mxu0 %v2114
      %2735 = vmatpush1.msra.mxu0 %v2113
      %2736 = vmatprep.subr.mxu0 %v2122
      %2737 = vmatpush1.msra.mxu0 %v2121
      %2738 = vmatprep.subr.mxu0 %v2130
      %2739 = vmatpush1.msra.mxu0 %v2129
      %2740 = vmatprep.subr.mxu0 %v2138
      %2741 = vmatpush1.msra.mxu0 %v2137
      %2742 = vmatprep.mubr.f32.mxu0 %v1626
      %2743 = vmatmul.mubr.f32.gmra.mrb[0].mxu0 %v1625
      %v2744 = vpop.f32.mrb[0].mxu0
      %v2745 = vadd.f32 %v2674, %v2744
      %v2746 = vpop.f32.mrb[0].mxu0
      %v2747 = vadd.f32 %v2676, %v2746
      %2748 = vdwg.mxu0
      %2749 = vst [vmem:[#allocation15] sm:$0xff] %v2319
      %2750 = vst [vmem:[#allocation15 + $0x8] sm:$0xff] %v2321
      %2751 = vst [vmem:[#allocation15 + $0x10] sm:$0xff] %v2461
      %2752 = vst [vmem:[#allocation15 + $0x18] sm:$0xff] %v2463
      %2753 = vst [vmem:[#allocation15 + $0x20] sm:$0xff] %v2603
      %2754 = vst [vmem:[#allocation15 + $0x28] sm:$0xff] %v2605
      %2755 = vst [vmem:[#allocation15 + $0x30] sm:$0xff] %v2745
      %2756 = vst [vmem:[#allocation15 + $0x38] sm:$0xff] %v2747
    $region65: #{tpu_custom_call.1} parent=1 // pred_fallthru
      _
    // Predicated region
    $region66: #{tpu_custom_call.1} parent=1 // pred_check
      _
    $region67: #{tpu_custom_call.1} parent=1 // pred_check_branch
      %2758 = sbr.rel (0) target = $region69
    $region68: #{tpu_custom_call.1} parent=1 // pred_region
      %s2760 = ssub.s32 1024, 1024
      %2761 = vsyncadd [#allocation5], %s2760
      %s2763 = sshll.u32 [#allocation15], 4
      %s2764 = int_to_ptr.vmem [resolvable:$true] %s2763
      %2766 = dma.vmem_to_hbm [thread:$0]  %s2764, 1024, %s7, [#allocation5]
    $region69: #{tpu_custom_call.1} parent=1 // pred_fallthru
      _
    // Predicated region
    $region70: #{tpu_custom_call.1} parent=1 // pred_check
      _
    $region71: #{tpu_custom_call.1} parent=1 // pred_check_branch
      %2768 = sbr.rel (0) target = $region73
    $region72: #{tpu_custom_call.1} parent=1 // pred_region
      %2769 = dma.done [#allocation5], 1024
    $region73: #{tpu_custom_call.1} parent=1 // pred_fallthru
      _
    %2770 = vsyncpa [#allocation4], 1
    %2771 = vsyncpa [#allocation7], 1
    %2772 = vsyncpa [#allocation10], 1
    %2773 = vsyncpa [#allocation13], 1
    %2774 = vsyncpa [#allocation5], 1

</llo_original>
